<compile_context>
chip_gen: v7x
topology: tpu7x:2x2x1
jax: 0.10.0
libtpu: 0.0.40
codegen_flags: <defaults>
</compile_context>

<pallas_src>
import functools

import jax
import jax.numpy as jnp
import numpy as np
from jax.experimental import pallas as pl
from jax.experimental.pallas import tpu as pltpu


# ----------------------------------------------------------------------------
# Host-side constant matrices (built from static shapes only).
# ----------------------------------------------------------------------------
def _maxpool_select(h_rows, w_keep, hp, wp, n_cols):
    """0/1 matrix compacting the shifted-max map to the 2x2/stride-2 pooled map.

    Source index q = y*w_keep + x over the conv output (row width w_keep);
    pooled (j, i) comes from q = 2j*w_keep + 2i.  Extra zero columns
    (n_cols > hp*wp) give zero padding so the next conv's shifted lane windows
    stay in range.
    """
    n_rows = h_rows * w_keep - 1 - w_keep
    assert 2 * (hp - 1) * w_keep + 2 * (wp - 1) < n_rows
    s = np.zeros((n_rows, n_cols), np.float32)
    for j in range(hp):
        for i in range(wp):
            s[2 * j * w_keep + 2 * i, j * wp + i] = 1.0
    return jnp.asarray(s)


def _adaptive_bins(n_in, n_out):
    k = np.zeros((n_out, n_in), np.float32)
    for o in range(n_out):
        lo = (o * n_in) // n_out
        hi = -((-(o + 1) * n_in) // n_out)
        k[o, lo:hi] = 1.0 / (hi - lo)
    return k


def _adaptive_flatten_matrix(hp, wp, n_out):
    """(hp*wp, n_out*n_out): flattened pool2 -> flattened AdaptiveAvgPool2d(n_out)."""
    kr = _adaptive_bins(hp, n_out)   # (n_out, hp)
    kc = _adaptive_bins(wp, n_out)   # (n_out, wp)
    s = np.einsum('ik,jl->klij', kr, kc).reshape(hp * wp, n_out * n_out)
    return np.asarray(s, np.float32)


# ----------------------------------------------------------------------------
# Kernel 1: localization conv-net + fc_loc -> theta (one batch per grid step).
# ----------------------------------------------------------------------------
def _stn_theta_kernel(cols_ref, w1_ref, b1_ref, s1_ref, w2_ref, b2_ref, s2_ref,
                      afc_ref, msk_ref, ssel_ref, f1b_ref, f2w_ref, f2b_ref,
                      theta_ref, col2_ref, *, W1, Wp1, K2, C1, L1, L2):
    # ---- Conv2d(C_in -> 8, k=7): host-side im2col -> one MXU matmul.
    a1 = (jnp.dot(w1_ref[...], cols_ref[0], preferred_element_type=jnp.float32)
          + b1_ref[...])                                          # (C1, L1)

    # ---- MaxPool2d(2,2) + ReLU: two shifted maxes + 0/1 selection matmul.
    m = jnp.maximum(a1[:, :L1 - 1], a1[:, 1:])
    m = jnp.maximum(m[:, :L1 - 1 - W1], m[:, W1:])
    r1 = jnp.maximum(jnp.dot(m, s1_ref[...], preferred_element_type=jnp.float32),
                     0.0)                                          # (C1, ncols1)

    # ---- Conv2d(8 -> 10, k=5): stack the 25 shifted windows once (sublane-
    #      aligned stores into a VMEM scratch), then one (C2,200)@(200,L2) matmul.
    for ky in range(K2):
        for kx in range(K2):
            idx = ky * K2 + kx
            off = ky * Wp1 + kx
            col2_ref[idx * C1:(idx + 1) * C1, :] = r1[:, off:off + L2]
    a2 = (jnp.dot(w2_ref[...], col2_ref[...], preferred_element_type=jnp.float32)
          + b2_ref[...])                                           # (C2, L2)

    # ---- MaxPool2d(2,2) + ReLU.
    m = jnp.maximum(a2[:, :L2 - 1], a2[:, 1:])
    m = jnp.maximum(m[:, :L2 - 1 - Wp1], m[:, Wp1:])
    r2 = jnp.maximum(jnp.dot(m, s2_ref[...], preferred_element_type=jnp.float32),
                     0.0)                                          # (C2, Hp2*Wp2)

    # ---- AdaptiveAvgPool2d(3) + flatten + Linear(90->32), fused:
    #      afc = pool_matrix @ fc1_w (channel-blocked on lanes); the mask keeps
    #      the channel-matching blocks, the block-stacked identity folds them.
    z = jnp.dot(r2, afc_ref[...], preferred_element_type=jnp.float32)  # (C2, C2*HID)
    hw = jnp.sum(z * msk_ref[...], axis=0, keepdims=True)              # (1, C2*HID)
    h = jnp.maximum(
        jnp.dot(hw, ssel_ref[...], preferred_element_type=jnp.float32)
        + f1b_ref[...], 0.0)                                           # (1, HID)

    # ---- Linear(32 -> 6).
    theta_ref[0] = (jnp.dot(h, f2w_ref[...], preferred_element_type=jnp.float32)
                    + f2b_ref[...])                                    # (1, 6)


def _localization_theta(x, p):
    B, C_in, H, W = x.shape
    K1, C1, K2, C2, NA = 7, 8, 5, 10, 3
    assert H >= 18 and W >= 18, "STN localization net needs spatial >= 18"
    H1, W1 = H - K1 + 1, W - K1 + 1
    L1 = H1 * W1
    Hp1, Wp1 = H1 // 2, W1 // 2
    H2, W2 = Hp1 - K2 + 1, Wp1 - K2 + 1
    L2 = H2 * Wp1                       # conv2 output keeps the full pooled width
    Hp2, Wp2 = H2 // 2, W2 // 2
    HID = p["fc1_w"].shape[1]

    # ---- im2col for conv1, built host-side with plain XLA: (B, K1*K1*C_in, L1).
    slabs = []
    for ky in range(K1):
        for kx in range(K1):
            slabs.append(x[:, :, ky:ky + H1, kx:kx + W1].reshape(B, C_in, L1))
    cols = jnp.concatenate(slabs, axis=1)

    # Conv weights stacked to match the im2col / scratch orderings.
    w1s = jnp.transpose(p["conv1_w"], (2, 3, 1, 0)).reshape(K1 * K1 * C_in, C1).T
    w2s = jnp.transpose(p["conv2_w"], (2, 3, 1, 0)).reshape(K2 * K2 * C1, C2).T
    b1c = p["conv1_b"].reshape(C1, 1)
    b2c = p["conv2_b"].reshape(C2, 1)

    # Constant pooling / selection matrices.
    ncols1 = (K2 - 1) * (Wp1 + 1) + L2      # room for conv2's shifted windows
    s1 = _maxpool_select(H1, W1, Hp1, Wp1, ncols1)
    s2 = _maxpool_select(H2, Wp1, Hp2, Wp2, Hp2 * Wp2)
    s3 = _adaptive_flatten_matrix(Hp2, Wp2, NA)             # (Hp2*Wp2, 9)

    # AdaptiveAvgPool + flatten + fc1 fused into one (Hp2*Wp2, C2*HID) map.
    w1wide = jnp.transpose(p["fc1_w"].reshape(C2, NA * NA, HID),
                           (1, 0, 2)).reshape(NA * NA, C2 * HID)
    afc = jnp.asarray(s3) @ w1wide                           # (Hp2*Wp2, C2*HID)
    msk = jnp.asarray(np.kron(np.eye(C2, dtype=np.float32),
                              np.ones((1, HID), np.float32)))     # (C2, C2*HID)
    ssel = jnp.asarray(np.tile(np.eye(HID, dtype=np.float32), (C2, 1)))  # (C2*HID, HID)

    f1b = p["fc1_b"].reshape(1, HID)
    f2w = p["fc2_w"]
    f2b = p["fc2_b"].reshape(1, 6)

    kernel = functools.partial(_stn_theta_kernel, W1=W1, Wp1=Wp1, K2=K2, C1=C1,
                               L1=L1, L2=L2)

    def const_spec(arr):
        zeros = (0,) * arr.ndim
        return pl.BlockSpec(arr.shape, lambda b, _z=zeros: _z)

    consts = [w1s, b1c, s1, w2s, b2c, s2, afc, msk, ssel, f1b, f2w, f2b]
    theta = pl.pallas_call(
        kernel,
        out_shape=jax.ShapeDtypeStruct((B, 1, 6), jnp.float32),
        grid=(B,),
        in_specs=[pl.BlockSpec((1, K1 * K1 * C_in, L1), lambda b: (b, 0, 0))]
                 + [const_spec(a) for a in consts],
        out_specs=pl.BlockSpec((1, 1, 6), lambda b: (b, 0, 0)),
        scratch_shapes=[pltpu.VMEM((K2 * K2 * C1, L2), jnp.float32)],
        compiler_params=pltpu.CompilerParams(
            dimension_semantics=("parallel",),
            vmem_limit_bytes=32 * 1024 * 1024),
    )(cols, *consts)
    return theta.reshape(B, 2, 3)


# ----------------------------------------------------------------------------
# Kernel 2: fused affine_grid + grid_sample (bilinear, zeros, align_corners=False).
# ----------------------------------------------------------------------------
def _grid_sample_kernel(theta_ref, xw_ref, xt_ref, yt_ref, ys_ref, xs_ref,
                        sel_ref, o_ref, *, H, W):
    b = pl.program_id(0)
    # theta lives in SMEM: six scalar reads, no padded VMEM tile.
    t00 = theta_ref[b, 0]; t01 = theta_ref[b, 1]; t02 = theta_ref[b, 2]
    t10 = theta_ref[b, 3]; t11 = theta_ref[b, 4]; t12 = theta_ref[b, 5]

    xt = xt_ref[...]                                     # (1, PB) target x coords
    yt = yt_ref[...]                                     # (1, PB) target y coords
    gx = (t00 * xt + t01 * yt + t02 + 1.0) * (0.5 * W) - 0.5
    gy = (t10 * xt + t11 * yt + t12 + 1.0) * (0.5 * H) - 0.5

    # Separable bilinear weights; out-of-range taps get weight 0 (zeros padding).
    wy = jnp.maximum(1.0 - jnp.abs(gy - ys_ref[...]), 0.0)     # (H, PB)
    wx = jnp.maximum(1.0 - jnp.abs(gx - xs_ref[...]), 0.0)     # (C*W, PB)

    # One stacked matmul over all channels, then the x-reduction as a second
    # matmul with a block-of-ones channel selector; single (C, PB) slab store.
    u = jnp.dot(xw_ref[0], wy, preferred_element_type=jnp.float32)       # (C*W, PB)
    o_ref[0] = jnp.dot(sel_ref[...], u * wx, preferred_element_type=jnp.float32)


def _affine_grid_sample(x, theta_flat):
    B, C, H, W = x.shape
    P = H * W
    P_pad = ((P + 127) // 128) * 128
    PB = 128
    for cand in (1024, 896, 768, 640, 512, 384, 256, 128):
        if P_pad % cand == 0:
            PB = cand
            break
    npb = P_pad // PB

    # Image resident per batch as (C*W, H):  xw[b, c*W + x, y] = x[b, c, y, x].
    xw = jnp.transpose(x, (0, 1, 3, 2)).reshape(B, C * W, H)

    # Host constants: normalized target coords (align_corners=False) and the
    # per-sublane source indices for the separable bilinear weights.
    jj = (2.0 * np.arange(W, dtype=np.float64) + 1.0) / W - 1.0
    ii = (2.0 * np.arange(H, dtype=np.float64) + 1.0) / H - 1.0
    xt = np.pad(np.tile(jj, H), (0, P_pad - P)).astype(np.float32).reshape(1, P_pad)
    yt = np.pad(np.repeat(ii, W), (0, P_pad - P)).astype(np.float32).reshape(1, P_pad)
    ys = np.arange(H, dtype=np.float32).reshape(H, 1)
    xs = np.tile(np.arange(W, dtype=np.float32), C).reshape(C * W, 1)
    sel = np.kron(np.eye(C, dtype=np.float32), np.ones((1, W), np.float32))

    kernel = functools.partial(_grid_sample_kernel, H=H, W=W)
    out = pl.pallas_call(
        kernel,
        out_shape=jax.ShapeDtypeStruct((B, C, P_pad), jnp.float32),
        grid=(B, npb),
        in_specs=[
            pl.BlockSpec(memory_space=pltpu.MemorySpace.SMEM),       # theta (B, 6)
            pl.BlockSpec((1, C * W, H), lambda b, q: (b, 0, 0)),     # resident image
            pl.BlockSpec((1, PB), lambda b, q: (0, q)),              # xt block
            pl.BlockSpec((1, PB), lambda b, q: (0, q)),              # yt block
            pl.BlockSpec((H, 1), lambda b, q: (0, 0)),               # y indices
            pl.BlockSpec((C * W, 1), lambda b, q: (0, 0)),           # x indices (tiled)
            pl.BlockSpec((C, C * W), lambda b, q: (0, 0)),           # channel selector
        ],
        out_specs=pl.BlockSpec((1, C, PB), lambda b, q: (b, 0, q)),
        compiler_params=pltpu.CompilerParams(
            dimension_semantics=("parallel", "arbitrary"),
            vmem_limit_bytes=32 * 1024 * 1024),
        cost_estimate=pl.CostEstimate(
            flops=2 * B * P_pad * C * W * (H + C),
            transcendentals=0,
            bytes_accessed=4 * (B * C * W * H + B * C * P_pad + B * 6
                                + 2 * P_pad + H + C * W + C * C * W)),
    )(jnp.asarray(theta_flat, jnp.float32), xw,
      jnp.asarray(xt), jnp.asarray(yt), jnp.asarray(ys), jnp.asarray(xs),
      jnp.asarray(sel))
    return out[:, :, :P].reshape(B, C, H, W)


@jax.jit
def stn_forward(x, params):
    theta = _localization_theta(x, params)           # (B, 2, 3)
    out = _affine_grid_sample(x, theta.reshape(-1, 6))
    return out, theta


# ----------------------------------------------------------------------------
# Parameters + pure-JAX reference (for correctness checking).
# ----------------------------------------------------------------------------
def init_params(key, c_in, identity_fc2=True):
    ks = jax.random.split(key, 7)

    def u(k, shape, fan_in):
        s = float(fan_in) ** -0.5
        return jax.random.uniform(k, shape, jnp.float32, -s, s)

    # PyTorch zeroes fc2's weight and uses the identity bias; identity_fc2=False
    # adds a small random weight so the sampling path is exercised non-trivially.
    fc2_w = (jnp.zeros((32, 6), jnp.float32) if identity_fc2
             else 0.05 * jax.random.normal(ks[6], (32, 6), jnp.float32))
    return {
        "conv1_w": u(ks[0], (8, c_in, 7, 7), c_in * 49),
        "conv1_b": u(ks[1], (8,), c_in * 49),
        "conv2_w": u(ks[2], (10, 8, 5, 5), 8 * 25),
        "conv2_b": u(ks[3], (10,), 8 * 25),
        "fc1_w": u(ks[4], (90, 32), 90),
        "fc1_b": u(ks[5], (32,), 90),
        "fc2_w": fc2_w,
        "fc2_b": jnp.array([1, 0, 0, 0, 1, 0], jnp.float32),
    }


def _adaptive_avg_pool_ref(x, n_out):
    B, C, H, W = x.shape
    rows = []
    for i in range(n_out):
        hs, he = (i * H) // n_out, -((-(i + 1) * H) // n_out)
        cols = []
        for j in range(n_out):
            ws, we = (j * W) // n_out, -((-(j + 1) * W) // n_out)
            cols.append(jnp.mean(x[:, :, hs:he, ws:we], axis=(2, 3)))
        rows.append(jnp.stack(cols, axis=-1))
    return jnp.stack(rows, axis=-2)


def _grid_sample_ref(x, theta):
    B, C, H, W = x.shape
    jj = (2.0 * jnp.arange(W, dtype=jnp.float32) + 1.0) / W - 1.0
    ii = (2.0 * jnp.arange(H, dtype=jnp.float32) + 1.0) / H - 1.0
    xt, yt = jnp.meshgrid(jj, ii)
    base = jnp.stack([xt.ravel(), yt.ravel(), jnp.ones(H * W, jnp.float32)], 0)
    src = jnp.einsum('bij,jp->bip', theta, base)
    gx = ((src[:, 0] + 1.0) * W - 1.0) / 2.0
    gy = ((src[:, 1] + 1.0) * H - 1.0) / 2.0
    x0 = jnp.floor(gx); y0 = jnp.floor(gy)
    fx = gx - x0; fy = gy - y0

    def tap(xi, yi, w):
        inb = (xi >= 0) & (xi <= W - 1) & (yi >= 0) & (yi <= H - 1)
        xc = jnp.clip(xi, 0, W - 1).astype(jnp.int32)
        yc = jnp.clip(yi, 0, H - 1).astype(jnp.int32)
        v = jax.vmap(lambda img, yy, xx: img[:, yy, xx])(x, yc, xc)
        return v * (w * inb)[:, None, :]

    out = (tap(x0, y0, (1 - fx) * (1 - fy)) + tap(x0 + 1, y0, fx * (1 - fy))
           + tap(x0, y0 + 1, (1 - fx) * fy) + tap(x0 + 1, y0 + 1, fx * fy))
    return out.reshape(B, C, H, W)


def stn_reference(x, p):
    dn = ("NCHW", "OIHW", "NCHW")
    y = jax.lax.conv_general_dilated(x, p["conv1_w"], (1, 1), "VALID",
                                     dimension_numbers=dn)
    y = y + p["conv1_b"][None, :, None, None]
    y = jax.lax.reduce_window(y, -jnp.inf, jax.lax.max, (1, 1, 2, 2), (1, 1, 2, 2),
                              "VALID")
    y = jnp.maximum(y, 0.0)
    y = jax.lax.conv_general_dilated(y, p["conv2_w"], (1, 1), "VALID",
                                     dimension_numbers=dn)
    y = y + p["conv2_b"][None, :, None, None]
    y = jax.lax.reduce_window(y, -jnp.inf, jax.lax.max, (1, 1, 2, 2), (1, 1, 2, 2),
                              "VALID")
    y = jnp.maximum(y, 0.0)
    y = _adaptive_avg_pool_ref(y, 3)
    feat = y.reshape(y.shape[0], -1)
    h = jnp.maximum(feat @ p["fc1_w"] + p["fc1_b"], 0.0)
    theta = (h @ p["fc2_w"] + p["fc2_b"]).reshape(-1, 2, 3)
    return theta, _grid_sample_ref(x, theta)


if __name__ == "__main__":
    key = jax.random.PRNGKey(0)
    kx, kp = jax.random.split(key)

    # The localization net (conv7 -> pool2 -> conv5 -> pool2) needs spatial >= 18,
    # so use 32x32 (16x16 is infeasible for this module).
    B, C, H, W = 2, 4, 32, 32
    x = jax.random.normal(kx, (B, C, H, W), dtype=jnp.float32)

    # (a) PyTorch-faithful fc2 init (zero weight + identity bias) and
    # (b) a perturbed fc2 so the affine-grid / bilinear path is non-trivial.
    params_id = init_params(kp, C, identity_fc2=True)
    params_rand = init_params(kp, C, identity_fc2=False)

    for params in (params_id, params_rand):
        out, theta = stn_forward(x, params)
        out = jax.block_until_ready(out)

        with jax.default_matmul_precision("float32"):
            theta_ref, out_ref = stn_reference(x, params)

        assert out.shape == (B, C, H, W)
        assert jnp.allclose(theta, theta_ref, atol=1e-3, rtol=1e-3), "theta mismatch"
        assert jnp.allclose(out, out_ref, atol=3e-3, rtol=3e-3), \
            "output mismatch vs JAX reference"

    print("KERNEL_OK")
</pallas_src>

<mosaic_0001>
module attributes {stable_mosaic.version = 11 : i64} {
  func.func @_stn_theta_kernel(%arg0: i32, %arg1: memref<1x196x676xf32, #tpu.memory_space<vmem>>, %arg2: memref<8x196xf32, #tpu.memory_space<vmem>>, %arg3: memref<8x1xf32, #tpu.memory_space<vmem>>, %arg4: memref<649x173xf32, #tpu.memory_space<vmem>>, %arg5: memref<10x200xf32, #tpu.memory_space<vmem>>, %arg6: memref<10x1xf32, #tpu.memory_space<vmem>>, %arg7: memref<103x16xf32, #tpu.memory_space<vmem>>, %arg8: memref<16x320xf32, #tpu.memory_space<vmem>>, %arg9: memref<10x320xf32, #tpu.memory_space<vmem>>, %arg10: memref<320x32xf32, #tpu.memory_space<vmem>>, %arg11: memref<1x32xf32, #tpu.memory_space<vmem>>, %arg12: memref<32x6xf32, #tpu.memory_space<vmem>>, %arg13: memref<1x6xf32, #tpu.memory_space<vmem>>, %arg14: memref<1x1x6xf32, #tpu.memory_space<vmem>>, %arg15: memref<200x117xf32, #tpu.memory_space<vmem>>) attributes {dimension_semantics = [#tpu.dimension_semantics<parallel>], iteration_bounds = array<i64: 2>, scalar_prefetch = 0 : i64, scratch_operands = 1 : i64, tpu.core_type = #tpu.core_type<tc>, window_params = [{transform_indices = @transform_0, window_bounds = array<i64: 1, 196, 676>}, {pipeline_mode = #tpu.pipeline_mode<synchronous>, transform_indices = @transform_1, window_bounds = array<i64: 8, 196>}, {pipeline_mode = #tpu.pipeline_mode<synchronous>, transform_indices = @transform_2, window_bounds = array<i64: 8, 1>}, {pipeline_mode = #tpu.pipeline_mode<synchronous>, transform_indices = @transform_3, window_bounds = array<i64: 649, 173>}, {pipeline_mode = #tpu.pipeline_mode<synchronous>, transform_indices = @transform_4, window_bounds = array<i64: 10, 200>}, {pipeline_mode = #tpu.pipeline_mode<synchronous>, transform_indices = @transform_5, window_bounds = array<i64: 10, 1>}, {pipeline_mode = #tpu.pipeline_mode<synchronous>, transform_indices = @transform_6, window_bounds = array<i64: 103, 16>}, {pipeline_mode = #tpu.pipeline_mode<synchronous>, transform_indices = @transform_7, window_bounds = array<i64: 16, 320>}, {pipeline_mode = #tpu.pipeline_mode<synchronous>, transform_indices = @transform_8, window_bounds = array<i64: 10, 320>}, {pipeline_mode = #tpu.pipeline_mode<synchronous>, transform_indices = @transform_9, window_bounds = array<i64: 320, 32>}, {pipeline_mode = #tpu.pipeline_mode<synchronous>, transform_indices = @transform_10, window_bounds = array<i64: 1, 32>}, {pipeline_mode = #tpu.pipeline_mode<synchronous>, transform_indices = @transform_11, window_bounds = array<i64: 32, 6>}, {pipeline_mode = #tpu.pipeline_mode<synchronous>, transform_indices = @transform_12, window_bounds = array<i64: 1, 6>}, {transform_indices = @transform_13, window_bounds = array<i64: 1, 1, 6>}]} {
    %c0 = arith.constant 0 : index
    %c0_0 = arith.constant 0 : index
    %0 = vector.load %arg2[%c0, %c0_0] : memref<8x196xf32, #tpu.memory_space<vmem>>, vector<8x196xf32>
    %c0_1 = arith.constant 0 : index
    %c0_2 = arith.constant 0 : index
    %c0_3 = arith.constant 0 : index
    %1 = vector.load %arg1[%c0_1, %c0_2, %c0_3] : memref<1x196x676xf32, #tpu.memory_space<vmem>>, vector<1x196x676xf32>
    %2 = vector.shape_cast %1 : vector<1x196x676xf32> to vector<196x676xf32>
    %cst = arith.constant dense<0.000000e+00> : vector<8x676xf32>
    %3 = tpu.matmul %0, %2, %cst {dimension_numbers = #tpu.dot_dimension_numbers<[1], [0], [0], [1], [0, 0, 1, 1], [], []>} : vector<8x196xf32>, vector<196x676xf32>, vector<8x676xf32> -> vector<8x676xf32>
    %c0_4 = arith.constant 0 : index
    %c0_5 = arith.constant 0 : index
    %4 = vector.load %arg3[%c0_4, %c0_5] : memref<8x1xf32, #tpu.memory_space<vmem>>, vector<8x1xf32>
    %5 = vector.broadcast %4 : vector<8x1xf32> to vector<8x676xf32>
    %6 = arith.addf %3, %5 : vector<8x676xf32>
    %7 = vector.extract_strided_slice %6 {offsets = [0, 0], sizes = [8, 675], strides = [1, 1]} : vector<8x676xf32> to vector<8x675xf32>
    %8 = vector.extract_strided_slice %6 {offsets = [0, 1], sizes = [8, 675], strides = [1, 1]} : vector<8x676xf32> to vector<8x675xf32>
    %9 = arith.maximumf %7, %8 : vector<8x675xf32>
    %10 = vector.extract_strided_slice %9 {offsets = [0, 0], sizes = [8, 649], strides = [1, 1]} : vector<8x675xf32> to vector<8x649xf32>
    %11 = vector.extract_strided_slice %9 {offsets = [0, 26], sizes = [8, 649], strides = [1, 1]} : vector<8x675xf32> to vector<8x649xf32>
    %12 = arith.maximumf %10, %11 : vector<8x649xf32>
    %c0_6 = arith.constant 0 : index
    %c0_7 = arith.constant 0 : index
    %13 = vector.load %arg4[%c0_6, %c0_7] : memref<649x173xf32, #tpu.memory_space<vmem>>, vector<649x173xf32>
    %cst_8 = arith.constant dense<0.000000e+00> : vector<8x173xf32>
    %14 = tpu.matmul %12, %13, %cst_8 {dimension_numbers = #tpu.dot_dimension_numbers<[1], [0], [0], [1], [0, 0, 1, 1], [], []>} : vector<8x649xf32>, vector<649x173xf32>, vector<8x173xf32> -> vector<8x173xf32>
    %cst_9 = arith.constant 0.000000e+00 : f32
    %15 = vector.broadcast %cst_9 : f32 to vector<8x173xf32>
    %16 = arith.maximumf %14, %15 : vector<8x173xf32>
    %17 = vector.extract_strided_slice %16 {offsets = [0, 0], sizes = [8, 117], strides = [1, 1]} : vector<8x173xf32> to vector<8x117xf32>
    %c0_10 = arith.constant 0 : index
    %c0_11 = arith.constant 0 : index
    %18 = vector.load %arg15[%c0_10, %c0_11] : memref<200x117xf32, #tpu.memory_space<vmem>>, vector<8x117xf32>
    tpu.vector_store %arg15[%c0_10, %c0_11], %17 {strides = array<i32>} : memref<200x117xf32, #tpu.memory_space<vmem>>, vector<8x117xf32>,
    %19 = vector.extract_strided_slice %16 {offsets = [0, 1], sizes = [8, 117], strides = [1, 1]} : vector<8x173xf32> to vector<8x117xf32>
    %c8 = arith.constant 8 : index
    %c0_12 = arith.constant 0 : index
    %20 = vector.load %arg15[%c8, %c0_12] : memref<200x117xf32, #tpu.memory_space<vmem>>, vector<8x117xf32>
    tpu.vector_store %arg15[%c8, %c0_12], %19 {strides = array<i32>} : memref<200x117xf32, #tpu.memory_space<vmem>>, vector<8x117xf32>,
    %21 = vector.extract_strided_slice %16 {offsets = [0, 2], sizes = [8, 117], strides = [1, 1]} : vector<8x173xf32> to vector<8x117xf32>
    %c16 = arith.constant 16 : index
    %c0_13 = arith.constant 0 : index
    %22 = vector.load %arg15[%c16, %c0_13] : memref<200x117xf32, #tpu.memory_space<vmem>>, vector<8x117xf32>
    tpu.vector_store %arg15[%c16, %c0_13], %21 {strides = array<i32>} : memref<200x117xf32, #tpu.memory_space<vmem>>, vector<8x117xf32>,
    %23 = vector.extract_strided_slice %16 {offsets = [0, 3], sizes = [8, 117], strides = [1, 1]} : vector<8x173xf32> to vector<8x117xf32>
    %c24 = arith.constant 24 : index
    %c0_14 = arith.constant 0 : index
    %24 = vector.load %arg15[%c24, %c0_14] : memref<200x117xf32, #tpu.memory_space<vmem>>, vector<8x117xf32>
    tpu.vector_store %arg15[%c24, %c0_14], %23 {strides = array<i32>} : memref<200x117xf32, #tpu.memory_space<vmem>>, vector<8x117xf32>,
    %25 = vector.extract_strided_slice %16 {offsets = [0, 4], sizes = [8, 117], strides = [1, 1]} : vector<8x173xf32> to vector<8x117xf32>
    %c32 = arith.constant 32 : index
    %c0_15 = arith.constant 0 : index
    %26 = vector.load %arg15[%c32, %c0_15] : memref<200x117xf32, #tpu.memory_space<vmem>>, vector<8x117xf32>
    tpu.vector_store %arg15[%c32, %c0_15], %25 {strides = array<i32>} : memref<200x117xf32, #tpu.memory_space<vmem>>, vector<8x117xf32>,
    %27 = vector.extract_strided_slice %16 {offsets = [0, 13], sizes = [8, 117], strides = [1, 1]} : vector<8x173xf32> to vector<8x117xf32>
    %c40 = arith.constant 40 : index
    %c0_16 = arith.constant 0 : index
    %28 = vector.load %arg15[%c40, %c0_16] : memref<200x117xf32, #tpu.memory_space<vmem>>, vector<8x117xf32>
    tpu.vector_store %arg15[%c40, %c0_16], %27 {strides = array<i32>} : memref<200x117xf32, #tpu.memory_space<vmem>>, vector<8x117xf32>,
    %29 = vector.extract_strided_slice %16 {offsets = [0, 14], sizes = [8, 117], strides = [1, 1]} : vector<8x173xf32> to vector<8x117xf32>
    %c48 = arith.constant 48 : index
    %c0_17 = arith.constant 0 : index
    %30 = vector.load %arg15[%c48, %c0_17] : memref<200x117xf32, #tpu.memory_space<vmem>>, vector<8x117xf32>
    tpu.vector_store %arg15[%c48, %c0_17], %29 {strides = array<i32>} : memref<200x117xf32, #tpu.memory_space<vmem>>, vector<8x117xf32>,
    %31 = vector.extract_strided_slice %16 {offsets = [0, 15], sizes = [8, 117], strides = [1, 1]} : vector<8x173xf32> to vector<8x117xf32>
    %c56 = arith.constant 56 : index
    %c0_18 = arith.constant 0 : index
    %32 = vector.load %arg15[%c56, %c0_18] : memref<200x117xf32, #tpu.memory_space<vmem>>, vector<8x117xf32>
    tpu.vector_store %arg15[%c56, %c0_18], %31 {strides = array<i32>} : memref<200x117xf32, #tpu.memory_space<vmem>>, vector<8x117xf32>,
    %33 = vector.extract_strided_slice %16 {offsets = [0, 16], sizes = [8, 117], strides = [1, 1]} : vector<8x173xf32> to vector<8x117xf32>
    %c64 = arith.constant 64 : index
    %c0_19 = arith.constant 0 : index
    %34 = vector.load %arg15[%c64, %c0_19] : memref<200x117xf32, #tpu.memory_space<vmem>>, vector<8x117xf32>
    tpu.vector_store %arg15[%c64, %c0_19], %33 {strides = array<i32>} : memref<200x117xf32, #tpu.memory_space<vmem>>, vector<8x117xf32>,
    %35 = vector.extract_strided_slice %16 {offsets = [0, 17], sizes = [8, 117], strides = [1, 1]} : vector<8x173xf32> to vector<8x117xf32>
    %c72 = arith.constant 72 : index
    %c0_20 = arith.constant 0 : index
    %36 = vector.load %arg15[%c72, %c0_20] : memref<200x117xf32, #tpu.memory_space<vmem>>, vector<8x117xf32>
    tpu.vector_store %arg15[%c72, %c0_20], %35 {strides = array<i32>} : memref<200x117xf32, #tpu.memory_space<vmem>>, vector<8x117xf32>,
    %37 = vector.extract_strided_slice %16 {offsets = [0, 26], sizes = [8, 117], strides = [1, 1]} : vector<8x173xf32> to vector<8x117xf32>
    %c80 = arith.constant 80 : index
    %c0_21 = arith.constant 0 : index
    %38 = vector.load %arg15[%c80, %c0_21] : memref<200x117xf32, #tpu.memory_space<vmem>>, vector<8x117xf32>
    tpu.vector_store %arg15[%c80, %c0_21], %37 {strides = array<i32>} : memref<200x117xf32, #tpu.memory_space<vmem>>, vector<8x117xf32>,
    %39 = vector.extract_strided_slice %16 {offsets = [0, 27], sizes = [8, 117], strides = [1, 1]} : vector<8x173xf32> to vector<8x117xf32>
    %c88 = arith.constant 88 : index
    %c0_22 = arith.constant 0 : index
    %40 = vector.load %arg15[%c88, %c0_22] : memref<200x117xf32, #tpu.memory_space<vmem>>, vector<8x117xf32>
    tpu.vector_store %arg15[%c88, %c0_22], %39 {strides = array<i32>} : memref<200x117xf32, #tpu.memory_space<vmem>>, vector<8x117xf32>,
    %41 = vector.extract_strided_slice %16 {offsets = [0, 28], sizes = [8, 117], strides = [1, 1]} : vector<8x173xf32> to vector<8x117xf32>
    %c96 = arith.constant 96 : index
    %c0_23 = arith.constant 0 : index
    %42 = vector.load %arg15[%c96, %c0_23] : memref<200x117xf32, #tpu.memory_space<vmem>>, vector<8x117xf32>
    tpu.vector_store %arg15[%c96, %c0_23], %41 {strides = array<i32>} : memref<200x117xf32, #tpu.memory_space<vmem>>, vector<8x117xf32>,
    %43 = vector.extract_strided_slice %16 {offsets = [0, 29], sizes = [8, 117], strides = [1, 1]} : vector<8x173xf32> to vector<8x117xf32>
    %c104 = arith.constant 104 : index
    %c0_24 = arith.constant 0 : index
    %44 = vector.load %arg15[%c104, %c0_24] : memref<200x117xf32, #tpu.memory_space<vmem>>, vector<8x117xf32>
    tpu.vector_store %arg15[%c104, %c0_24], %43 {strides = array<i32>} : memref<200x117xf32, #tpu.memory_space<vmem>>, vector<8x117xf32>,
    %45 = vector.extract_strided_slice %16 {offsets = [0, 30], sizes = [8, 117], strides = [1, 1]} : vector<8x173xf32> to vector<8x117xf32>
    %c112 = arith.constant 112 : index
    %c0_25 = arith.constant 0 : index
    %46 = vector.load %arg15[%c112, %c0_25] : memref<200x117xf32, #tpu.memory_space<vmem>>, vector<8x117xf32>
    tpu.vector_store %arg15[%c112, %c0_25], %45 {strides = array<i32>} : memref<200x117xf32, #tpu.memory_space<vmem>>, vector<8x117xf32>,
    %47 = vector.extract_strided_slice %16 {offsets = [0, 39], sizes = [8, 117], strides = [1, 1]} : vector<8x173xf32> to vector<8x117xf32>
    %c120 = arith.constant 120 : index
    %c0_26 = arith.constant 0 : index
    %48 = vector.load %arg15[%c120, %c0_26] : memref<200x117xf32, #tpu.memory_space<vmem>>, vector<8x117xf32>
    tpu.vector_store %arg15[%c120, %c0_26], %47 {strides = array<i32>} : memref<200x117xf32, #tpu.memory_space<vmem>>, vector<8x117xf32>,
    %49 = vector.extract_strided_slice %16 {offsets = [0, 40], sizes = [8, 117], strides = [1, 1]} : vector<8x173xf32> to vector<8x117xf32>
    %c128 = arith.constant 128 : index
    %c0_27 = arith.constant 0 : index
    %50 = vector.load %arg15[%c128, %c0_27] : memref<200x117xf32, #tpu.memory_space<vmem>>, vector<8x117xf32>
    tpu.vector_store %arg15[%c128, %c0_27], %49 {strides = array<i32>} : memref<200x117xf32, #tpu.memory_space<vmem>>, vector<8x117xf32>,
    %51 = vector.extract_strided_slice %16 {offsets = [0, 41], sizes = [8, 117], strides = [1, 1]} : vector<8x173xf32> to vector<8x117xf32>
    %c136 = arith.constant 136 : index
    %c0_28 = arith.constant 0 : index
    %52 = vector.load %arg15[%c136, %c0_28] : memref<200x117xf32, #tpu.memory_space<vmem>>, vector<8x117xf32>
    tpu.vector_store %arg15[%c136, %c0_28], %51 {strides = array<i32>} : memref<200x117xf32, #tpu.memory_space<vmem>>, vector<8x117xf32>,
    %53 = vector.extract_strided_slice %16 {offsets = [0, 42], sizes = [8, 117], strides = [1, 1]} : vector<8x173xf32> to vector<8x117xf32>
    %c144 = arith.constant 144 : index
    %c0_29 = arith.constant 0 : index
    %54 = vector.load %arg15[%c144, %c0_29] : memref<200x117xf32, #tpu.memory_space<vmem>>, vector<8x117xf32>
    tpu.vector_store %arg15[%c144, %c0_29], %53 {strides = array<i32>} : memref<200x117xf32, #tpu.memory_space<vmem>>, vector<8x117xf32>,
    %55 = vector.extract_strided_slice %16 {offsets = [0, 43], sizes = [8, 117], strides = [1, 1]} : vector<8x173xf32> to vector<8x117xf32>
    %c152 = arith.constant 152 : index
    %c0_30 = arith.constant 0 : index
    %56 = vector.load %arg15[%c152, %c0_30] : memref<200x117xf32, #tpu.memory_space<vmem>>, vector<8x117xf32>
    tpu.vector_store %arg15[%c152, %c0_30], %55 {strides = array<i32>} : memref<200x117xf32, #tpu.memory_space<vmem>>, vector<8x117xf32>,
    %57 = vector.extract_strided_slice %16 {offsets = [0, 52], sizes = [8, 117], strides = [1, 1]} : vector<8x173xf32> to vector<8x117xf32>
    %c160 = arith.constant 160 : index
    %c0_31 = arith.constant 0 : index
    %58 = vector.load %arg15[%c160, %c0_31] : memref<200x117xf32, #tpu.memory_space<vmem>>, vector<8x117xf32>
    tpu.vector_store %arg15[%c160, %c0_31], %57 {strides = array<i32>} : memref<200x117xf32, #tpu.memory_space<vmem>>, vector<8x117xf32>,
    %59 = vector.extract_strided_slice %16 {offsets = [0, 53], sizes = [8, 117], strides = [1, 1]} : vector<8x173xf32> to vector<8x117xf32>
    %c168 = arith.constant 168 : index
    %c0_32 = arith.constant 0 : index
    %60 = vector.load %arg15[%c168, %c0_32] : memref<200x117xf32, #tpu.memory_space<vmem>>, vector<8x117xf32>
    tpu.vector_store %arg15[%c168, %c0_32], %59 {strides = array<i32>} : memref<200x117xf32, #tpu.memory_space<vmem>>, vector<8x117xf32>,
    %61 = vector.extract_strided_slice %16 {offsets = [0, 54], sizes = [8, 117], strides = [1, 1]} : vector<8x173xf32> to vector<8x117xf32>
    %c176 = arith.constant 176 : index
    %c0_33 = arith.constant 0 : index
    %62 = vector.load %arg15[%c176, %c0_33] : memref<200x117xf32, #tpu.memory_space<vmem>>, vector<8x117xf32>
    tpu.vector_store %arg15[%c176, %c0_33], %61 {strides = array<i32>} : memref<200x117xf32, #tpu.memory_space<vmem>>, vector<8x117xf32>,
    %63 = vector.extract_strided_slice %16 {offsets = [0, 55], sizes = [8, 117], strides = [1, 1]} : vector<8x173xf32> to vector<8x117xf32>
    %c184 = arith.constant 184 : index
    %c0_34 = arith.constant 0 : index
    %64 = vector.load %arg15[%c184, %c0_34] : memref<200x117xf32, #tpu.memory_space<vmem>>, vector<8x117xf32>
    tpu.vector_store %arg15[%c184, %c0_34], %63 {strides = array<i32>} : memref<200x117xf32, #tpu.memory_space<vmem>>, vector<8x117xf32>,
    %65 = vector.extract_strided_slice %16 {offsets = [0, 56], sizes = [8, 117], strides = [1, 1]} : vector<8x173xf32> to vector<8x117xf32>
    %c192 = arith.constant 192 : index
    %c0_35 = arith.constant 0 : index
    %66 = vector.load %arg15[%c192, %c0_35] : memref<200x117xf32, #tpu.memory_space<vmem>>, vector<8x117xf32>
    tpu.vector_store %arg15[%c192, %c0_35], %65 {strides = array<i32>} : memref<200x117xf32, #tpu.memory_space<vmem>>, vector<8x117xf32>,
    %c0_36 = arith.constant 0 : index
    %c0_37 = arith.constant 0 : index
    %67 = vector.load %arg5[%c0_36, %c0_37] : memref<10x200xf32, #tpu.memory_space<vmem>>, vector<10x200xf32>
    %c0_38 = arith.constant 0 : index
    %c0_39 = arith.constant 0 : index
    %68 = vector.load %arg15[%c0_38, %c0_39] : memref<200x117xf32, #tpu.memory_space<vmem>>, vector<200x117xf32>
    %cst_40 = arith.constant dense<0.000000e+00> : vector<10x117xf32>
    %69 = tpu.matmul %67, %68, %cst_40 {dimension_numbers = #tpu.dot_dimension_numbers<[1], [0], [0], [1], [0, 0, 1, 1], [], []>} : vector<10x200xf32>, vector<200x117xf32>, vector<10x117xf32> -> vector<10x117xf32>
    %c0_41 = arith.constant 0 : index
    %c0_42 = arith.constant 0 : index
    %70 = vector.load %arg6[%c0_41, %c0_42] : memref<10x1xf32, #tpu.memory_space<vmem>>, vector<10x1xf32>
    %71 = vector.broadcast %70 : vector<10x1xf32> to vector<10x117xf32>
    %72 = arith.addf %69, %71 : vector<10x117xf32>
    %73 = vector.extract_strided_slice %72 {offsets = [0, 0], sizes = [10, 116], strides = [1, 1]} : vector<10x117xf32> to vector<10x116xf32>
    %74 = vector.extract_strided_slice %72 {offsets = [0, 1], sizes = [10, 116], strides = [1, 1]} : vector<10x117xf32> to vector<10x116xf32>
    %75 = arith.maximumf %73, %74 : vector<10x116xf32>
    %76 = vector.extract_strided_slice %75 {offsets = [0, 0], sizes = [10, 103], strides = [1, 1]} : vector<10x116xf32> to vector<10x103xf32>
    %77 = vector.extract_strided_slice %75 {offsets = [0, 13], sizes = [10, 103], strides = [1, 1]} : vector<10x116xf32> to vector<10x103xf32>
    %78 = arith.maximumf %76, %77 : vector<10x103xf32>
    %c0_43 = arith.constant 0 : index
    %c0_44 = arith.constant 0 : index
    %79 = vector.load %arg7[%c0_43, %c0_44] : memref<103x16xf32, #tpu.memory_space<vmem>>, vector<103x16xf32>
    %cst_45 = arith.constant dense<0.000000e+00> : vector<10x16xf32>
    %80 = tpu.matmul %78, %79, %cst_45 {dimension_numbers = #tpu.dot_dimension_numbers<[1], [0], [0], [1], [0, 0, 1, 1], [], []>} : vector<10x103xf32>, vector<103x16xf32>, vector<10x16xf32> -> vector<10x16xf32>
    %cst_46 = arith.constant 0.000000e+00 : f32
    %81 = vector.broadcast %cst_46 : f32 to vector<10x16xf32>
    %82 = arith.maximumf %80, %81 : vector<10x16xf32>
    %c0_47 = arith.constant 0 : index
    %c0_48 = arith.constant 0 : index
    %83 = vector.load %arg8[%c0_47, %c0_48] : memref<16x320xf32, #tpu.memory_space<vmem>>, vector<16x320xf32>
    %cst_49 = arith.constant dense<0.000000e+00> : vector<10x320xf32>
    %84 = tpu.matmul %82, %83, %cst_49 {dimension_numbers = #tpu.dot_dimension_numbers<[1], [0], [0], [1], [0, 0, 1, 1], [], []>} : vector<10x16xf32>, vector<16x320xf32>, vector<10x320xf32> -> vector<10x320xf32>
    %c0_50 = arith.constant 0 : index
    %c0_51 = arith.constant 0 : index
    %85 = vector.load %arg9[%c0_50, %c0_51] : memref<10x320xf32, #tpu.memory_space<vmem>>, vector<10x320xf32>
    %86 = arith.mulf %84, %85 : vector<10x320xf32>
    %cst_52 = arith.constant dense<0.000000e+00> : vector<320xf32>
    %87 = vector.multi_reduction <add>, %86, %cst_52 [0] : vector<10x320xf32> to vector<320xf32>
    %88 = vector.shape_cast %87 : vector<320xf32> to vector<1x320xf32>
    %c0_53 = arith.constant 0 : index
    %c0_54 = arith.constant 0 : index
    %89 = vector.load %arg10[%c0_53, %c0_54] : memref<320x32xf32, #tpu.memory_space<vmem>>, vector<320x32xf32>
    %cst_55 = arith.constant dense<0.000000e+00> : vector<1x32xf32>
    %90 = tpu.matmul %88, %89, %cst_55 {dimension_numbers = #tpu.dot_dimension_numbers<[1], [0], [0], [1], [0, 0, 1, 1], [], []>} : vector<1x320xf32>, vector<320x32xf32>, vector<1x32xf32> -> vector<1x32xf32>
    %c0_56 = arith.constant 0 : index
    %c0_57 = arith.constant 0 : index
    %91 = vector.load %arg11[%c0_56, %c0_57] : memref<1x32xf32, #tpu.memory_space<vmem>>, vector<1x32xf32>
    %92 = arith.addf %90, %91 : vector<1x32xf32>
    %cst_58 = arith.constant 0.000000e+00 : f32
    %93 = vector.broadcast %cst_58 : f32 to vector<1x32xf32>
    %94 = arith.maximumf %92, %93 : vector<1x32xf32>
    %c0_59 = arith.constant 0 : index
    %c0_60 = arith.constant 0 : index
    %95 = vector.load %arg12[%c0_59, %c0_60] : memref<32x6xf32, #tpu.memory_space<vmem>>, vector<32x6xf32>
    %cst_61 = arith.constant dense<0.000000e+00> : vector<1x6xf32>
    %96 = tpu.matmul %94, %95, %cst_61 {dimension_numbers = #tpu.dot_dimension_numbers<[1], [0], [0], [1], [0, 0, 1, 1], [], []>} : vector<1x32xf32>, vector<32x6xf32>, vector<1x6xf32> -> vector<1x6xf32>
    %c0_62 = arith.constant 0 : index
    %c0_63 = arith.constant 0 : index
    %97 = vector.load %arg13[%c0_62, %c0_63] : memref<1x6xf32, #tpu.memory_space<vmem>>, vector<1x6xf32>
    %98 = arith.addf %96, %97 : vector<1x6xf32>
    %c0_64 = arith.constant 0 : index
    %c0_65 = arith.constant 0 : index
    %c0_66 = arith.constant 0 : index
    %99 = vector.load %arg14[%c0_64, %c0_65, %c0_66] : memref<1x1x6xf32, #tpu.memory_space<vmem>>, vector<1x1x6xf32>
    %100 = vector.shape_cast %99 : vector<1x1x6xf32> to vector<1x6xf32>
    %101 = vector.shape_cast %98 : vector<1x6xf32> to vector<1x1x6xf32>
    tpu.vector_store %arg14[%c0_64, %c0_65, %c0_66], %101 {strides = array<i32>} : memref<1x1x6xf32, #tpu.memory_space<vmem>>, vector<1x1x6xf32>,
    return
  }
  func.func @transform_0(%arg0: i32) -> (i32, i32, i32) {
    %c0_i32 = arith.constant 0 : i32
    %c0_i32_0 = arith.constant 0 : i32
    %c0_i32_1 = arith.constant 0 : i32
    return %arg0, %c0_i32, %c0_i32_0 : i32, i32, i32
  }
  func.func @transform_1(%arg0: i32) -> (i32, i32) {
    %c0_i32 = arith.constant 0 : i32
    %c0_i32_0 = arith.constant 0 : i32
    %c0_i32_1 = arith.constant 0 : i32
    return %c0_i32, %c0_i32_0 : i32, i32
  }
  func.func @transform_2(%arg0: i32) -> (i32, i32) {
    %c0_i32 = arith.constant 0 : i32
    %c0_i32_0 = arith.constant 0 : i32
    %c0_i32_1 = arith.constant 0 : i32
    return %c0_i32, %c0_i32_0 : i32, i32
  }
  func.func @transform_3(%arg0: i32) -> (i32, i32) {
    %c0_i32 = arith.constant 0 : i32
    %c0_i32_0 = arith.constant 0 : i32
    %c0_i32_1 = arith.constant 0 : i32
    return %c0_i32, %c0_i32_0 : i32, i32
  }
  func.func @transform_4(%arg0: i32) -> (i32, i32) {
    %c0_i32 = arith.constant 0 : i32
    %c0_i32_0 = arith.constant 0 : i32
    %c0_i32_1 = arith.constant 0 : i32
    return %c0_i32, %c0_i32_0 : i32, i32
  }
  func.func @transform_5(%arg0: i32) -> (i32, i32) {
    %c0_i32 = arith.constant 0 : i32
    %c0_i32_0 = arith.constant 0 : i32
    %c0_i32_1 = arith.constant 0 : i32
    return %c0_i32, %c0_i32_0 : i32, i32
  }
  func.func @transform_6(%arg0: i32) -> (i32, i32) {
    %c0_i32 = arith.constant 0 : i32
    %c0_i32_0 = arith.constant 0 : i32
    %c0_i32_1 = arith.constant 0 : i32
    return %c0_i32, %c0_i32_0 : i32, i32
  }
  func.func @transform_7(%arg0: i32) -> (i32, i32) {
    %c0_i32 = arith.constant 0 : i32
    %c0_i32_0 = arith.constant 0 : i32
    %c0_i32_1 = arith.constant 0 : i32
    return %c0_i32, %c0_i32_0 : i32, i32
  }
  func.func @transform_8(%arg0: i32) -> (i32, i32) {
    %c0_i32 = arith.constant 0 : i32
    %c0_i32_0 = arith.constant 0 : i32
    %c0_i32_1 = arith.constant 0 : i32
    return %c0_i32, %c0_i32_0 : i32, i32
  }
  func.func @transform_9(%arg0: i32) -> (i32, i32) {
    %c0_i32 = arith.constant 0 : i32
    %c0_i32_0 = arith.constant 0 : i32
    %c0_i32_1 = arith.constant 0 : i32
    return %c0_i32, %c0_i32_0 : i32, i32
  }
  func.func @transform_10(%arg0: i32) -> (i32, i32) {
    %c0_i32 = arith.constant 0 : i32
    %c0_i32_0 = arith.constant 0 : i32
    %c0_i32_1 = arith.constant 0 : i32
    return %c0_i32, %c0_i32_0 : i32, i32
  }
  func.func @transform_11(%arg0: i32) -> (i32, i32) {
    %c0_i32 = arith.constant 0 : i32
    %c0_i32_0 = arith.constant 0 : i32
    %c0_i32_1 = arith.constant 0 : i32
    return %c0_i32, %c0_i32_0 : i32, i32
  }
  func.func @transform_12(%arg0: i32) -> (i32, i32) {
    %c0_i32 = arith.constant 0 : i32
    %c0_i32_0 = arith.constant 0 : i32
    %c0_i32_1 = arith.constant 0 : i32
    return %c0_i32, %c0_i32_0 : i32, i32
  }
  func.func @transform_13(%arg0: i32) -> (i32, i32, i32) {
    %c0_i32 = arith.constant 0 : i32
    %c0_i32_0 = arith.constant 0 : i32
    %c0_i32_1 = arith.constant 0 : i32
    return %arg0, %c0_i32, %c0_i32_0 : i32, i32, i32
  }
}

module attributes {stable_mosaic.version = 11 : i64} {
  func.func @_grid_sample_kernel(%arg0: i32, %arg1: i32, %arg2: memref<2x6xf32, #tpu.memory_space<smem>>, %arg3: memref<1x128x32xf32, #tpu.memory_space<vmem>>, %arg4: memref<1x1024xf32, #tpu.memory_space<vmem>>, %arg5: memref<1x1024xf32, #tpu.memory_space<vmem>>, %arg6: memref<32x1xf32, #tpu.memory_space<vmem>>, %arg7: memref<128x1xf32, #tpu.memory_space<vmem>>, %arg8: memref<4x128xf32, #tpu.memory_space<vmem>>, %arg9: memref<1x4x1024xf32, #tpu.memory_space<vmem>>) attributes {dimension_semantics = [#tpu.dimension_semantics<parallel>, #tpu.dimension_semantics<arbitrary>], iteration_bounds = array<i64: 2, 1>, scalar_prefetch = 0 : i64, scratch_operands = 0 : i64, tpu.core_type = #tpu.core_type<tc>, window_params = [{transform_indices = @transform_0, window_bounds = array<i64: 2, 6>}, {transform_indices = @transform_1, window_bounds = array<i64: 1, 128, 32>}, {transform_indices = @transform_2, window_bounds = array<i64: 1, 1024>}, {transform_indices = @transform_3, window_bounds = array<i64: 1, 1024>}, {pipeline_mode = #tpu.pipeline_mode<synchronous>, transform_indices = @transform_4, window_bounds = array<i64: 32, 1>}, {pipeline_mode = #tpu.pipeline_mode<synchronous>, transform_indices = @transform_5, window_bounds = array<i64: 128, 1>}, {pipeline_mode = #tpu.pipeline_mode<synchronous>, transform_indices = @transform_6, window_bounds = array<i64: 4, 128>}, {transform_indices = @transform_7, window_bounds = array<i64: 1, 4, 1024>}]} {
    %0 = arith.index_cast %arg0 : i32 to index
    %c0 = arith.constant 0 : index
    %1 = memref.load %arg2[%0, %c0] : memref<2x6xf32, #tpu.memory_space<smem>>
    %2 = arith.index_cast %arg0 : i32 to index
    %c1 = arith.constant 1 : index
    %3 = memref.load %arg2[%2, %c1] : memref<2x6xf32, #tpu.memory_space<smem>>
    %4 = arith.index_cast %arg0 : i32 to index
    %c2 = arith.constant 2 : index
    %5 = memref.load %arg2[%4, %c2] : memref<2x6xf32, #tpu.memory_space<smem>>
    %6 = arith.index_cast %arg0 : i32 to index
    %c3 = arith.constant 3 : index
    %7 = memref.load %arg2[%6, %c3] : memref<2x6xf32, #tpu.memory_space<smem>>
    %8 = arith.index_cast %arg0 : i32 to index
    %c4 = arith.constant 4 : index
    %9 = memref.load %arg2[%8, %c4] : memref<2x6xf32, #tpu.memory_space<smem>>
    %10 = arith.index_cast %arg0 : i32 to index
    %c5 = arith.constant 5 : index
    %11 = memref.load %arg2[%10, %c5] : memref<2x6xf32, #tpu.memory_space<smem>>
    %c0_0 = arith.constant 0 : index
    %c0_1 = arith.constant 0 : index
    %12 = vector.load %arg4[%c0_0, %c0_1] : memref<1x1024xf32, #tpu.memory_space<vmem>>, vector<1x1024xf32>
    %c0_2 = arith.constant 0 : index
    %c0_3 = arith.constant 0 : index
    %13 = vector.load %arg5[%c0_2, %c0_3] : memref<1x1024xf32, #tpu.memory_space<vmem>>, vector<1x1024xf32>
    %14 = vector.broadcast %1 : f32 to vector<1x1024xf32>
    %15 = arith.mulf %14, %12 : vector<1x1024xf32>
    %16 = vector.broadcast %3 : f32 to vector<1x1024xf32>
    %17 = arith.mulf %16, %13 : vector<1x1024xf32>
    %18 = arith.addf %15, %17 : vector<1x1024xf32>
    %19 = vector.broadcast %5 : f32 to vector<1x1024xf32>
    %20 = arith.addf %18, %19 : vector<1x1024xf32>
    %cst = arith.constant 1.000000e+00 : f32
    %21 = vector.broadcast %cst : f32 to vector<1x1024xf32>
    %22 = arith.addf %20, %21 : vector<1x1024xf32>
    %cst_4 = arith.constant 1.600000e+01 : f32
    %23 = vector.broadcast %cst_4 : f32 to vector<1x1024xf32>
    %24 = arith.mulf %22, %23 : vector<1x1024xf32>
    %cst_5 = arith.constant 5.000000e-01 : f32
    %25 = vector.broadcast %cst_5 : f32 to vector<1x1024xf32>
    %26 = arith.subf %24, %25 : vector<1x1024xf32>
    %27 = vector.broadcast %7 : f32 to vector<1x1024xf32>
    %28 = arith.mulf %27, %12 : vector<1x1024xf32>
    %29 = vector.broadcast %9 : f32 to vector<1x1024xf32>
    %30 = arith.mulf %29, %13 : vector<1x1024xf32>
    %31 = arith.addf %28, %30 : vector<1x1024xf32>
    %32 = vector.broadcast %11 : f32 to vector<1x1024xf32>
    %33 = arith.addf %31, %32 : vector<1x1024xf32>
    %cst_6 = arith.constant 1.000000e+00 : f32
    %34 = vector.broadcast %cst_6 : f32 to vector<1x1024xf32>
    %35 = arith.addf %33, %34 : vector<1x1024xf32>
    %cst_7 = arith.constant 1.600000e+01 : f32
    %36 = vector.broadcast %cst_7 : f32 to vector<1x1024xf32>
    %37 = arith.mulf %35, %36 : vector<1x1024xf32>
    %cst_8 = arith.constant 5.000000e-01 : f32
    %38 = vector.broadcast %cst_8 : f32 to vector<1x1024xf32>
    %39 = arith.subf %37, %38 : vector<1x1024xf32>
    %c0_9 = arith.constant 0 : index
    %c0_10 = arith.constant 0 : index
    %40 = vector.load %arg6[%c0_9, %c0_10] : memref<32x1xf32, #tpu.memory_space<vmem>>, vector<32x1xf32>
    %41 = vector.broadcast %39 : vector<1x1024xf32> to vector<32x1024xf32>
    %42 = vector.broadcast %40 : vector<32x1xf32> to vector<32x1024xf32>
    %43 = arith.subf %41, %42 : vector<32x1024xf32>
    %44 = math.absf %43 : vector<32x1024xf32>
    %cst_11 = arith.constant 1.000000e+00 : f32
    %45 = vector.broadcast %cst_11 : f32 to vector<32x1024xf32>
    %46 = arith.subf %45, %44 : vector<32x1024xf32>
    %cst_12 = arith.constant 0.000000e+00 : f32
    %47 = vector.broadcast %cst_12 : f32 to vector<32x1024xf32>
    %48 = arith.maximumf %46, %47 : vector<32x1024xf32>
    %c0_13 = arith.constant 0 : index
    %c0_14 = arith.constant 0 : index
    %49 = vector.load %arg7[%c0_13, %c0_14] : memref<128x1xf32, #tpu.memory_space<vmem>>, vector<128x1xf32>
    %50 = vector.broadcast %26 : vector<1x1024xf32> to vector<128x1024xf32>
    %51 = vector.broadcast %49 : vector<128x1xf32> to vector<128x1024xf32>
    %52 = arith.subf %50, %51 : vector<128x1024xf32>
    %53 = math.absf %52 : vector<128x1024xf32>
    %cst_15 = arith.constant 1.000000e+00 : f32
    %54 = vector.broadcast %cst_15 : f32 to vector<128x1024xf32>
    %55 = arith.subf %54, %53 : vector<128x1024xf32>
    %cst_16 = arith.constant 0.000000e+00 : f32
    %56 = vector.broadcast %cst_16 : f32 to vector<128x1024xf32>
    %57 = arith.maximumf %55, %56 : vector<128x1024xf32>
    %c0_17 = arith.constant 0 : index
    %c0_18 = arith.constant 0 : index
    %c0_19 = arith.constant 0 : index
    %58 = vector.load %arg3[%c0_17, %c0_18, %c0_19] : memref<1x128x32xf32, #tpu.memory_space<vmem>>, vector<1x128x32xf32>
    %59 = vector.shape_cast %58 : vector<1x128x32xf32> to vector<128x32xf32>
    %cst_20 = arith.constant dense<0.000000e+00> : vector<128x1024xf32>
    %60 = tpu.matmul %59, %48, %cst_20 {dimension_numbers = #tpu.dot_dimension_numbers<[1], [0], [0], [1], [0, 0, 1, 1], [], []>} : vector<128x32xf32>, vector<32x1024xf32>, vector<128x1024xf32> -> vector<128x1024xf32>
    %c0_21 = arith.constant 0 : index
    %c0_22 = arith.constant 0 : index
    %61 = vector.load %arg8[%c0_21, %c0_22] : memref<4x128xf32, #tpu.memory_space<vmem>>, vector<4x128xf32>
    %62 = arith.mulf %60, %57 : vector<128x1024xf32>
    %cst_23 = arith.constant dense<0.000000e+00> : vector<4x1024xf32>
    %63 = tpu.matmul %61, %62, %cst_23 {dimension_numbers = #tpu.dot_dimension_numbers<[1], [0], [0], [1], [0, 0, 1, 1], [], []>} : vector<4x128xf32>, vector<128x1024xf32>, vector<4x1024xf32> -> vector<4x1024xf32>
    %c0_24 = arith.constant 0 : index
    %c0_25 = arith.constant 0 : index
    %c0_26 = arith.constant 0 : index
    %64 = vector.load %arg9[%c0_24, %c0_25, %c0_26] : memref<1x4x1024xf32, #tpu.memory_space<vmem>>, vector<1x4x1024xf32>
    %65 = vector.shape_cast %64 : vector<1x4x1024xf32> to vector<4x1024xf32>
    %66 = vector.shape_cast %63 : vector<4x1024xf32> to vector<1x4x1024xf32>
    tpu.vector_store %arg9[%c0_24, %c0_25, %c0_26], %66 {strides = array<i32>} : memref<1x4x1024xf32, #tpu.memory_space<vmem>>, vector<1x4x1024xf32>,
    return
  }
  func.func @transform_0(%arg0: i32, %arg1: i32) -> (i32, i32) {
    %c0_i32 = arith.constant 0 : i32
    %c0_i32_0 = arith.constant 0 : i32
    %c0_i32_1 = arith.constant 0 : i32
    return %c0_i32, %c0_i32_0 : i32, i32
  }
  func.func @transform_1(%arg0: i32, %arg1: i32) -> (i32, i32, i32) {
    %c0_i32 = arith.constant 0 : i32
    %c0_i32_0 = arith.constant 0 : i32
    %c0_i32_1 = arith.constant 0 : i32
    return %arg0, %c0_i32, %c0_i32_0 : i32, i32, i32
  }
  func.func @transform_2(%arg0: i32, %arg1: i32) -> (i32, i32) {
    %c0_i32 = arith.constant 0 : i32
    %c0_i32_0 = arith.constant 0 : i32
    return %c0_i32, %arg1 : i32, i32
  }
  func.func @transform_3(%arg0: i32, %arg1: i32) -> (i32, i32) {
    %c0_i32 = arith.constant 0 : i32
    %c0_i32_0 = arith.constant 0 : i32
    return %c0_i32, %arg1 : i32, i32
  }
  func.func @transform_4(%arg0: i32, %arg1: i32) -> (i32, i32) {
    %c0_i32 = arith.constant 0 : i32
    %c0_i32_0 = arith.constant 0 : i32
    %c0_i32_1 = arith.constant 0 : i32
    return %c0_i32, %c0_i32_0 : i32, i32
  }
  func.func @transform_5(%arg0: i32, %arg1: i32) -> (i32, i32) {
    %c0_i32 = arith.constant 0 : i32
    %c0_i32_0 = arith.constant 0 : i32
    %c0_i32_1 = arith.constant 0 : i32
    return %c0_i32, %c0_i32_0 : i32, i32
  }
  func.func @transform_6(%arg0: i32, %arg1: i32) -> (i32, i32) {
    %c0_i32 = arith.constant 0 : i32
    %c0_i32_0 = arith.constant 0 : i32
    %c0_i32_1 = arith.constant 0 : i32
    return %c0_i32, %c0_i32_0 : i32, i32
  }
  func.func @transform_7(%arg0: i32, %arg1: i32) -> (i32, i32, i32) {
    %c0_i32 = arith.constant 0 : i32
    %c0_i32_0 = arith.constant 0 : i32
    return %arg0, %c0_i32, %arg1 : i32, i32, i32
  }
}

</mosaic_0001>

<llo_original>
// kernel: stn_forward.3
$region0: #{stn_forward.3}
  #allocation0 [shape = 'u32[]', space=smem, size = 0x4, offset = 0x4, fixed_abs, tag = 'smem constant byte address 0x4 - core index']
  #allocation1 [shape = 'u32[144,128]{1,0:T(1,128)}', space=vmem, size = 0x12000, scoped, tag = 'internal scratch']
  %s0 = inlined_call_operand.vmem [shape: f32[2,6], index: 0, kind: input, shape index: {}]
  %s1 = inlined_call_operand.vmem [shape: f32[2,128,32], index: 1, kind: input, shape index: {}]
  %s2 = inlined_call_operand.vmem [shape: f32[1,1024], index: 2, kind: input, shape index: {}]
  %s3 = inlined_call_operand.vmem [shape: f32[1,1024], index: 3, kind: input, shape index: {}]
  %s4 = inlined_call_operand.vmem [shape: f32[32,1], index: 4, kind: input, shape index: {}]
  %s5 = inlined_call_operand.vmem [shape: f32[128,1], index: 5, kind: input, shape index: {}]
  %s6 = inlined_call_operand.vmem [shape: f32[4,128], index: 6, kind: input, shape index: {}]
  %s7 = inlined_call_operand.vmem [shape: f32[2,4,1024], index: 7, kind: output, shape index: {}]
  %s8 = sld [smem:[#allocation0]]
  $region65: #{stn_forward.3} parent=0
    _
  %s10 = ssub.s32 1, %s8
  %s11 = scalar_select 0, %s10, %s8
  $region1: #{stn_forward.3} parent=0
    #allocation2 [shape = 'u8[1024]{0}', space=smem, size = 0x400, scoped, tag = 'input window, operand 0, single buffered']
    #allocation3 [shape = 's32[2]{0}', space=sflag, size = 0x8, scoped, tag = 'scoped memory for stn_forward.3']
    %12 = vsyncpa [#allocation3], 0
    loop: start=0, step=1, limit=4
    $region2: #{stn_forward.3} parent=1 // loop_pre_header
      _
    $region3: #{stn_forward.3} parent=1 // loop_header
      %s14 = sphi 0, %s18
      %p15 = scmp.ge.s32.totalorder %s14, 4
      %s21 = sphi 0, %s33
      %s22 = sphi 0, %s29
      %s23 = sphi 0, %s21
      %s24 = sphi 0, %s22
      %s25 = sphi 0, %s23
      %s26 = sphi 0, %s24
      %s34 = sphi 0, %s34
      %s36 = sphi 0, %s34
      %s37 = sphi 0, %s36
      %s51 = sphi 0, %s37
      %s57 = sphi 0, %s59
      %s60 = sphi 0, %s57
      %s61 = sphi 0, %s60
      %s77 = sphi 0, %s61
      %s83 = sphi 0, %s85
      %s86 = sphi 0, %s83
      %s87 = sphi 0, %s86
      %s103 = sphi 0, %s87
      %s109 = sphi 0, %s111
      %s112 = sphi 0, %s109
      %s113 = sphi 0, %s112
      %s129 = sphi 0, %s113
      %s133 = sphi 0, %s133
      %s135 = sphi 0, %s133
      %s136 = sphi 0, %s135
      %s150 = sphi 0, %s136
      %s154 = sphi 0, %s154
      %s156 = sphi 0, %s154
      %s157 = sphi 0, %s156
      %s171 = sphi 0, %s157
      %s175 = sphi 0, %s175
      %s177 = sphi 0, %s175
      %s178 = sphi 0, %s177
      %s192 = sphi 0, %s178
      %s200 = sphi 0, %s202
      %s203 = sphi 0, %s200
      %s204 = sphi 0, %s203
      %s220 = sphi 0, %s204
    $region4: #{stn_forward.3} parent=1 // loop_header_branch
      %17 = sbr.rel (%p15) target = $region8
    $region5: #{stn_forward.3} parent=1 // loop_body
      %s19 = ssub.s32 %s14, 1
      %s20 = ssub.s32 %s14, 2
      %s27 = sadd.s32 1, %s22
      %p28 = scmp.ge.s32.totalorder %s27, 1
      %s29 = scalar_select %p28, 0, %s27
      %s30 = sadd.s32 1, %s21
      %s31 = scalar_select %p28, %s30, %s21
      %p32 = scmp.ge.s32.totalorder %s31, 2
      %s33 = scalar_select %p32, 0, %s31
      %s35 = sadd.s32 %s34, 1
      %p38 = scmp.eq.s32.totalorder %s14, 1
      %p39 = scmp.ne.s32.totalorder %s34, %s36
      %p40 = scmp.eq.s32.totalorder %s14, 0
      %p41 = por %p39, %p40
      %p42 = scmp.ne.s32.totalorder %s34, %s36
      %p43 = scmp.eq.s32.totalorder %s19, 1
      %p44 = por %p42, %p43
      %p45 = scmp.ne.s32.totalorder %s36, %s37
      %p46 = scmp.eq.s32.totalorder %s19, 0
      %p47 = por %p45, %p46
      %p48 = scmp.ne.s32.totalorder %s36, %s37
      %p49 = scmp.eq.s32.totalorder %s20, 1
      %p50 = por %p48, %p49
      %p52 = scmp.ne.s32.totalorder %s37, %s51
      %p53 = scmp.eq.s32.totalorder %s20, 0
      %p54 = por %p52, %p53
      %s55 = ssub.s32 %s21, %s33
      %p56 = scmp.eq.s32.totalorder %s55, 0
      %s58 = sadd.s32 %s57, 1
      %s59 = scalar_select %p56, %s57, %s58
      %p62 = pneg %p56
      %p63 = scmp.eq.s32.totalorder %s14, 1
      %p64 = por %p62, %p63
      %p65 = scmp.ne.s32.totalorder %s57, %s60
      %p66 = scmp.eq.s32.totalorder %s14, 0
      %p67 = por %p65, %p66
      %p68 = scmp.ne.s32.totalorder %s57, %s60
      %p69 = scmp.eq.s32.totalorder %s19, 1
      %p70 = por %p68, %p69
      %p71 = scmp.ne.s32.totalorder %s60, %s61
      %p72 = scmp.eq.s32.totalorder %s19, 0
      %p73 = por %p71, %p72
      %p74 = scmp.ne.s32.totalorder %s60, %s61
      %p75 = scmp.eq.s32.totalorder %s20, 1
      %p76 = por %p74, %p75
      %p78 = scmp.ne.s32.totalorder %s61, %s77
      %p79 = scmp.eq.s32.totalorder %s20, 0
      %p80 = por %p78, %p79
      %s81 = ssub.s32 %s22, %s29
      %p82 = scmp.eq.s32.totalorder %s81, 0
      %s84 = sadd.s32 %s83, 1
      %s85 = scalar_select %p82, %s83, %s84
      %p88 = pneg %p82
      %p89 = scmp.eq.s32.totalorder %s14, 1
      %p90 = por %p88, %p89
      %p91 = scmp.ne.s32.totalorder %s83, %s86
      %p92 = scmp.eq.s32.totalorder %s14, 0
      %p93 = por %p91, %p92
      %p94 = scmp.ne.s32.totalorder %s83, %s86
      %p95 = scmp.eq.s32.totalorder %s19, 1
      %p96 = por %p94, %p95
      %p97 = scmp.ne.s32.totalorder %s86, %s87
      %p98 = scmp.eq.s32.totalorder %s19, 0
      %p99 = por %p97, %p98
      %p100 = scmp.ne.s32.totalorder %s86, %s87
      %p101 = scmp.eq.s32.totalorder %s20, 1
      %p102 = por %p100, %p101
      %p104 = scmp.ne.s32.totalorder %s87, %s103
      %p105 = scmp.eq.s32.totalorder %s20, 0
      %p106 = por %p104, %p105
      %s107 = ssub.s32 %s22, %s29
      %p108 = scmp.eq.s32.totalorder %s107, 0
      %s110 = sadd.s32 %s109, 1
      %s111 = scalar_select %p108, %s109, %s110
      %p114 = pneg %p108
      %p115 = scmp.eq.s32.totalorder %s14, 1
      %p116 = por %p114, %p115
      %p117 = scmp.ne.s32.totalorder %s109, %s112
      %p118 = scmp.eq.s32.totalorder %s14, 0
      %p119 = por %p117, %p118
      %p120 = scmp.ne.s32.totalorder %s109, %s112
      %p121 = scmp.eq.s32.totalorder %s19, 1
      %p122 = por %p120, %p121
      %p123 = scmp.ne.s32.totalorder %s112, %s113
      %p124 = scmp.eq.s32.totalorder %s19, 0
      %p125 = por %p123, %p124
      %p126 = scmp.ne.s32.totalorder %s112, %s113
      %p127 = scmp.eq.s32.totalorder %s20, 1
      %p128 = por %p126, %p127
      %p130 = scmp.ne.s32.totalorder %s113, %s129
      %p131 = scmp.eq.s32.totalorder %s20, 0
      %p132 = por %p130, %p131
      %s134 = sadd.s32 %s133, 1
      %p137 = scmp.eq.s32.totalorder %s14, 1
      %p138 = scmp.ne.s32.totalorder %s133, %s135
      %p139 = scmp.eq.s32.totalorder %s14, 0
      %p140 = por %p138, %p139
      %p141 = scmp.ne.s32.totalorder %s133, %s135
      %p142 = scmp.eq.s32.totalorder %s19, 1
      %p143 = por %p141, %p142
      %p144 = scmp.ne.s32.totalorder %s135, %s136
      %p145 = scmp.eq.s32.totalorder %s19, 0
      %p146 = por %p144, %p145
      %p147 = scmp.ne.s32.totalorder %s135, %s136
      %p148 = scmp.eq.s32.totalorder %s20, 1
      %p149 = por %p147, %p148
      %p151 = scmp.ne.s32.totalorder %s136, %s150
      %p152 = scmp.eq.s32.totalorder %s20, 0
      %p153 = por %p151, %p152
      %s155 = sadd.s32 %s154, 1
      %p158 = scmp.eq.s32.totalorder %s14, 1
      %p159 = scmp.ne.s32.totalorder %s154, %s156
      %p160 = scmp.eq.s32.totalorder %s14, 0
      %p161 = por %p159, %p160
      %p162 = scmp.ne.s32.totalorder %s154, %s156
      %p163 = scmp.eq.s32.totalorder %s19, 1
      %p164 = por %p162, %p163
      %p165 = scmp.ne.s32.totalorder %s156, %s157
      %p166 = scmp.eq.s32.totalorder %s19, 0
      %p167 = por %p165, %p166
      %p168 = scmp.ne.s32.totalorder %s156, %s157
      %p169 = scmp.eq.s32.totalorder %s20, 1
      %p170 = por %p168, %p169
      %p172 = scmp.ne.s32.totalorder %s157, %s171
      %p173 = scmp.eq.s32.totalorder %s20, 0
      %p174 = por %p172, %p173
      %s176 = sadd.s32 %s175, 1
      %p179 = scmp.eq.s32.totalorder %s14, 1
      %p180 = scmp.ne.s32.totalorder %s175, %s177
      %p181 = scmp.eq.s32.totalorder %s14, 0
      %p182 = por %p180, %p181
      %p183 = scmp.ne.s32.totalorder %s175, %s177
      %p184 = scmp.eq.s32.totalorder %s19, 1
      %p185 = por %p183, %p184
      %p186 = scmp.ne.s32.totalorder %s177, %s178
      %p187 = scmp.eq.s32.totalorder %s19, 0
      %p188 = por %p186, %p187
      %p189 = scmp.ne.s32.totalorder %s177, %s178
      %p190 = scmp.eq.s32.totalorder %s20, 1
      %p191 = por %p189, %p190
      %p193 = scmp.ne.s32.totalorder %s178, %s192
      %p194 = scmp.eq.s32.totalorder %s20, 0
      %p195 = por %p193, %p194
      %s196 = ssub.s32 %s21, %s33
      %s197 = ssub.s32 %s22, %s29
      %s198 = sor.u32 %s196, %s197
      %p199 = scmp.eq.s32.totalorder %s198, 0
      %s201 = sadd.s32 %s200, 1
      %s202 = scalar_select %p199, %s200, %s201
      %p205 = pneg %p199
      %p206 = scmp.eq.s32.totalorder %s14, 1
      %p207 = por %p205, %p206
      %p208 = scmp.ne.s32.totalorder %s200, %s203
      %p209 = scmp.eq.s32.totalorder %s14, 0
      %p210 = por %p208, %p209
      %p211 = scmp.ne.s32.totalorder %s200, %s203
      %p212 = scmp.eq.s32.totalorder %s19, 1
      %p213 = por %p211, %p212
      %p214 = scmp.ne.s32.totalorder %s203, %s204
      %p215 = scmp.eq.s32.totalorder %s19, 0
      %p216 = por %p214, %p215
      %p217 = scmp.ne.s32.totalorder %s203, %s204
      %p218 = scmp.eq.s32.totalorder %s20, 1
      %p219 = por %p217, %p218
      %p221 = scmp.ne.s32.totalorder %s204, %s220
      %p222 = scmp.eq.s32.totalorder %s20, 0
      %p223 = por %p221, %p222
      %p224 = scmp.le.s32.totalorder 1, %s14
      %p225 = scmp.lt.s32.totalorder %s14, 3
      %p226 = pnand %p224, %p225
      %p227 = pneg %p226
      // Predicated region
      $region9: #{stn_forward.3} parent=5 // pred_check
        _
      $region10: #{stn_forward.3} parent=5 // pred_check_branch
        %229 = sbr.rel (%p226) target = $region12
      $region11: #{stn_forward.3} parent=5 // pred_region
        %s230 = ssub.s32 %s14, 1
        // Predicated region
        $region13: #{stn_forward.3} parent=11 // pred_check
          %p231 = pneg %p47
        $region14: #{stn_forward.3} parent=11 // pred_check_branch
          %233 = sbr.rel (%p231) target = $region16
        $region15: #{stn_forward.3} parent=11 // pred_region
          %s235 = ssub.s32 32, 32
          %236 = vsyncadd [#allocation3], %s235
          %s238 = sshll.u32 %s0, 4
          %s239 = int_to_ptr.vmem [resolvable:$true] %s238
          %241 = dma.vmem_to_smem %s239, 32, [#allocation2], [#allocation3]
        $region16: #{stn_forward.3} parent=11 // pred_fallthru
          _
        // Predicated region
        $region17: #{stn_forward.3} parent=11 // pred_check
          %p242 = pneg %p99
        $region18: #{stn_forward.3} parent=11 // pred_check_branch
          %244 = sbr.rel (%p242) target = $region20
        $region19: #{stn_forward.3} parent=11 // pred_region
          %s245 = smul.u32 8, %s24
          %p246 = scmp.lt.s32.totalorder %s245, 7
          %s247 = scalar_select %p246, %s245, 7
          %s248 = scalar_lea.vmem %s2, %s247
          %s249 = smul.u32 8, %s24
        $region20: #{stn_forward.3} parent=11 // pred_fallthru
          _
        // Predicated region
        $region21: #{stn_forward.3} parent=11 // pred_check
          %p250 = pneg %p125
        $region22: #{stn_forward.3} parent=11 // pred_check_branch
          %252 = sbr.rel (%p250) target = $region24
        $region23: #{stn_forward.3} parent=11 // pred_region
          %s253 = smul.u32 8, %s24
          %p254 = scmp.lt.s32.totalorder %s253, 7
          %s255 = scalar_select %p254, %s253, 7
          %s256 = scalar_lea.vmem %s3, %s255
          %s257 = smul.u32 8, %s24
        $region24: #{stn_forward.3} parent=11 // pred_fallthru
          _
        // Predicated region
        $region25: #{stn_forward.3} parent=11 // pred_check
          %p258 = pneg %p146
        $region26: #{stn_forward.3} parent=11 // pred_check_branch
          %260 = sbr.rel (%p258) target = $region28
        $region27: #{stn_forward.3} parent=11 // pred_region
          _
        $region28: #{stn_forward.3} parent=11 // pred_fallthru
          _
        // Predicated region
        $region29: #{stn_forward.3} parent=11 // pred_check
          %p261 = pneg %p167
        $region30: #{stn_forward.3} parent=11 // pred_check_branch
          %263 = sbr.rel (%p261) target = $region32
        $region31: #{stn_forward.3} parent=11 // pred_region
          _
        $region32: #{stn_forward.3} parent=11 // pred_fallthru
          _
        // Predicated region
        $region33: #{stn_forward.3} parent=11 // pred_check
          %p264 = pneg %p188
        $region34: #{stn_forward.3} parent=11 // pred_check_branch
          %266 = sbr.rel (%p264) target = $region36
        $region35: #{stn_forward.3} parent=11 // pred_region
          _
        $region36: #{stn_forward.3} parent=11 // pred_fallthru
          _
      $region12: #{stn_forward.3} parent=5 // pred_fallthru
        _
      %p267 = scmp.lt.s32.totalorder %s14, 2
      // Predicated region
      $region37: #{stn_forward.3} parent=5 // pred_check
        %p268 = pneg %p267
      $region38: #{stn_forward.3} parent=5 // pred_check_branch
        %270 = sbr.rel (%p268) target = $region40
      $region39: #{stn_forward.3} parent=5 // pred_region
        // Predicated region
        $region41: #{stn_forward.3} parent=39 // pred_check
          %p271 = pneg %p67
        $region42: #{stn_forward.3} parent=39 // pred_check_branch
          %273 = sbr.rel (%p271) target = $region44
        $region43: #{stn_forward.3} parent=39 // pred_region
          %p274 = scmp.lt.s32.totalorder %s21, 1
          %s275 = scalar_select %p274, %s21, 1
          %s276 = smul.addr %s275, 16
          %s277 = smul.addr %s276, 8
          %s278 = scalar_lea.vmem %s1, %s277
        $region44: #{stn_forward.3} parent=39 // pred_fallthru
          _
      $region40: #{stn_forward.3} parent=5 // pred_fallthru
        _
      %p279 = scmp.le.s32.totalorder 1, %s14
      %p280 = scmp.lt.s32.totalorder %s14, 3
      %p281 = pnand %p279, %p280
      %p282 = pneg %p281
      // Predicated region
      $region45: #{stn_forward.3} parent=5 // pred_check
        _
      $region46: #{stn_forward.3} parent=5 // pred_check_branch
        %284 = sbr.rel (%p281) target = $region48
      $region47: #{stn_forward.3} parent=5 // pred_region
        %s285 = ssub.s32 %s14, 1
        // Predicated region
        $region49: #{stn_forward.3} parent=47 // pred_check
          %p286 = pneg %p47
        $region50: #{stn_forward.3} parent=47 // pred_check_branch
          %288 = sbr.rel (%p286) target = $region52
        $region51: #{stn_forward.3} parent=47 // pred_region
          %289 = dma.done [#allocation3], 32
        $region52: #{stn_forward.3} parent=47 // pred_fallthru
          _
        %290 = sfence
        %p291 = pneg %p47
        %p292 = pneg %p44
        %p293 = scmp.lt.s32.totalorder %s23, 1
        %s294 = scalar_select %p293, %s23, 1
        %s295 = smul.addr %s294, 16
        %s296 = smul.addr %s295, 8
        %s297 = scalar_lea.vmem %s1, %s296
        %p298 = pneg %p73
        %p299 = pneg %p70
        %s300 = smul.u32 8, %s24
        %p301 = scmp.lt.s32.totalorder %s300, 7
        %s302 = scalar_select %p301, %s300, 7
        %s303 = scalar_lea.vmem %s2, %s302
        %p304 = pneg %p99
        %p305 = pneg %p96
        %s306 = smul.u32 8, %s24
        %p307 = scmp.lt.s32.totalorder %s306, 7
        %s308 = scalar_select %p307, %s306, 7
        %s309 = scalar_lea.vmem %s3, %s308
        %p310 = pneg %p125
        %p311 = pneg %p122
        %p312 = pneg %p146
        %p313 = pneg %p143
        %p314 = pneg %p167
        %p315 = pneg %p164
        %p316 = pneg %p188
        %p317 = pneg %p185
        %p318 = pneg %p216
        %p319 = pneg %p213
        %s320 = smul.u32 8, %s24
        %p321 = scmp.lt.s32.totalorder %s23, 1
        %s322 = scalar_select %p321, %s23, 1
        %p323 = scmp.lt.s32.totalorder %s320, 7
        %s324 = scalar_select %p323, %s320, 7
        %s325 = smul.addr %s322, 8
        %s326 = sadd.s32 %s324, %s325
        %s327 = smul.addr %s326, 4
        %s328 = scalar_lea.vmem %s7, %s327
        %p329 = scmp.lt.s32.totalorder %s23, 1
        %s330 = scalar_select %p329, %s23, 1
        %s331 = smul.addr %s330, 16
        %s332 = smul.addr %s331, 8
        %s333 = scalar_lea.vmem %s1, %s332
        %s334 = smul.u32 8, %s24
        %p335 = scmp.lt.s32.totalorder %s334, 7
        %s336 = scalar_select %p335, %s334, 7
        %s337 = scalar_lea.vmem %s2, %s336
        %s338 = smul.u32 8, %s24
        %s339 = smul.u32 8, %s24
        %p340 = scmp.lt.s32.totalorder %s339, 7
        %s341 = scalar_select %p340, %s339, 7
        %s342 = scalar_lea.vmem %s3, %s341
        %s343 = smul.u32 8, %s24
        %s344 = smul.u32 8, %s24
        %p345 = scmp.lt.s32.totalorder %s23, 1
        %s346 = scalar_select %p345, %s23, 1
        %p347 = scmp.lt.s32.totalorder %s344, 7
        %s348 = scalar_select %p347, %s344, 7
        %s349 = smul.addr %s346, 8
        %s350 = sadd.s32 %s348, %s349
        %s351 = smul.addr %s350, 4
        %s352 = scalar_lea.vmem %s7, %s351
        %s353 = smul.u32 8, %s24
        %s354 = smul.u32 %s23, 128
        %s355 = sld [smem:[#allocation2 + %s354]]
        %s356 = sadd.s32 %s354, 1
        %s357 = sld [smem:[#allocation2 + %s356]]
        %s358 = sadd.s32 %s354, 2
        %s359 = sld [smem:[#allocation2 + %s358]]
        %s360 = sadd.s32 %s354, 3
        %s361 = sld [smem:[#allocation2 + %s360]]
        %s362 = sadd.s32 %s354, 4
        %s363 = sld [smem:[#allocation2 + %s362]]
        %s364 = sadd.s32 %s354, 5
        %s365 = sld [smem:[#allocation2 + %s364]]
        %v366 = vld [vmem:[%s337] sm:$0xff]
        %v367 = vld [vmem:[%s342] sm:$0xff]
        %v368 = vstv %s355
        %v369 = vmul.f32 %v368, %v366
        %v370 = vstv %s357
        %v371 = vmul.f32 %v370, %v367
        %v372 = vadd.f32 %v369, %v371
        %v373 = vstv %s359
        %v374 = vadd.f32 %v372, %v373
        %v375 = vadd.f32 %v374, 1.0
        %v376 = vmul.f32 %v375, 16.0
        %v377 = vsub.f32 %v376, 0.5
        %v378 = vstv %s361
        %v379 = vmul.f32 %v378, %v366
        %v380 = vstv %s363
        %v381 = vmul.f32 %v380, %v367
        %v382 = vadd.f32 %v379, %v381
        %v383 = vstv %s365
        %v384 = vadd.f32 %v382, %v383
        %v385 = vadd.f32 %v384, 1.0
        %v386 = vmul.f32 %v385, 16.0
        %v387 = vsub.f32 %v386, 0.5
        %v388 = vld [vmem:[%s4] sm:$0xff]
        %v389 = vld [vmem:[%s4 + $0x8] sm:$0xff]
        %v390 = vld [vmem:[%s4 + $0x10] sm:$0xff]
        %v391 = vld [vmem:[%s4 + $0x18] sm:$0xff]
        %v393 = vlaneseq
        %v394 = vshrl.u32 %v393, 7
        %v395 = vsub.s32 0, %v394
        %v396 = vrot.slane %v387, %v395
        %v397 = vlaneseq
        %v398 = vshrl.u32 %v397, 7
        %v399 = vsub.s32 1, %v398
        %v400 = vrot.slane %v387, %v399
        %v401 = vlaneseq
        %v402 = vshrl.u32 %v401, 7
        %v403 = vsub.s32 2, %v402
        %v404 = vrot.slane %v387, %v403
        %v405 = vlaneseq
        %v406 = vshrl.u32 %v405, 7
        %v407 = vsub.s32 3, %v406
        %v408 = vrot.slane %v387, %v407
        %v409 = vlaneseq
        %v410 = vshrl.u32 %v409, 7
        %v411 = vsub.s32 4, %v410
        %v412 = vrot.slane %v387, %v411
        %v413 = vlaneseq
        %v414 = vshrl.u32 %v413, 7
        %v415 = vsub.s32 5, %v414
        %v416 = vrot.slane %v387, %v415
        %v417 = vlaneseq
        %v418 = vshrl.u32 %v417, 7
        %v419 = vsub.s32 6, %v418
        %v420 = vrot.slane %v387, %v419
        %v421 = vlaneseq
        %v422 = vshrl.u32 %v421, 7
        %v423 = vsub.s32 7, %v422
        %v424 = vrot.slane %v387, %v423
        %434 = vset.pattern.permute.xlu0 0
        %435 = vperm.xlu0 %434, %v388
        %v436 = vpop.permute.xlu0 %435
        %439 = vset.pattern.permute.xlu0 0
        %440 = vperm.xlu0 %439, %v389
        %v441 = vpop.permute.xlu0 %440
        %444 = vset.pattern.permute.xlu0 0
        %445 = vperm.xlu0 %444, %v390
        %v446 = vpop.permute.xlu0 %445
        %449 = vset.pattern.permute.xlu0 0
        %450 = vperm.xlu0 %449, %v391
        %v451 = vpop.permute.xlu0 %450
        %v453 = vsub.f32 %v396, %v436
        %v454 = vsub.f32 %v400, %v436
        %v455 = vsub.f32 %v404, %v436
        %v456 = vsub.f32 %v408, %v436
        %v457 = vsub.f32 %v412, %v436
        %v458 = vsub.f32 %v416, %v436
        %v459 = vsub.f32 %v420, %v436
        %v460 = vsub.f32 %v424, %v436
        %v461 = vsub.f32 %v396, %v441
        %v462 = vsub.f32 %v400, %v441
        %v463 = vsub.f32 %v404, %v441
        %v464 = vsub.f32 %v408, %v441
        %v465 = vsub.f32 %v412, %v441
        %v466 = vsub.f32 %v416, %v441
        %v467 = vsub.f32 %v420, %v441
        %v468 = vsub.f32 %v424, %v441
        %v469 = vsub.f32 %v396, %v446
        %v470 = vsub.f32 %v400, %v446
        %v471 = vsub.f32 %v404, %v446
        %v472 = vsub.f32 %v408, %v446
        %v473 = vsub.f32 %v412, %v446
        %v474 = vsub.f32 %v416, %v446
        %v475 = vsub.f32 %v420, %v446
        %v476 = vsub.f32 %v424, %v446
        %v477 = vsub.f32 %v396, %v451
        %v478 = vsub.f32 %v400, %v451
        %v479 = vsub.f32 %v404, %v451
        %v480 = vsub.f32 %v408, %v451
        %v481 = vsub.f32 %v412, %v451
        %v482 = vsub.f32 %v416, %v451
        %v483 = vsub.f32 %v420, %v451
        %v484 = vsub.f32 %v424, %v451
        %v485 = vand.u32 2147483647, %v453
        %v486 = vand.u32 2147483647, %v454
        %v487 = vand.u32 2147483647, %v455
        %v488 = vand.u32 2147483647, %v456
        %v489 = vand.u32 2147483647, %v457
        %v490 = vand.u32 2147483647, %v458
        %v491 = vand.u32 2147483647, %v459
        %v492 = vand.u32 2147483647, %v460
        %v493 = vand.u32 2147483647, %v461
        %v494 = vand.u32 2147483647, %v462
        %v495 = vand.u32 2147483647, %v463
        %v496 = vand.u32 2147483647, %v464
        %v497 = vand.u32 2147483647, %v465
        %v498 = vand.u32 2147483647, %v466
        %v499 = vand.u32 2147483647, %v467
        %v500 = vand.u32 2147483647, %v468
        %v501 = vand.u32 2147483647, %v469
        %v502 = vand.u32 2147483647, %v470
        %v503 = vand.u32 2147483647, %v471
        %v504 = vand.u32 2147483647, %v472
        %v505 = vand.u32 2147483647, %v473
        %v506 = vand.u32 2147483647, %v474
        %v507 = vand.u32 2147483647, %v475
        %v508 = vand.u32 2147483647, %v476
        %v509 = vand.u32 2147483647, %v477
        %v510 = vand.u32 2147483647, %v478
        %v511 = vand.u32 2147483647, %v479
        %v512 = vand.u32 2147483647, %v480
        %v513 = vand.u32 2147483647, %v481
        %v514 = vand.u32 2147483647, %v482
        %v515 = vand.u32 2147483647, %v483
        %v516 = vand.u32 2147483647, %v484
        %v517 = vsub.f32 1.0, %v485
        %v518 = vsub.f32 1.0, %v486
        %v519 = vsub.f32 1.0, %v487
        %v520 = vsub.f32 1.0, %v488
        %v521 = vsub.f32 1.0, %v489
        %v522 = vsub.f32 1.0, %v490
        %v523 = vsub.f32 1.0, %v491
        %v524 = vsub.f32 1.0, %v492
        %v525 = vsub.f32 1.0, %v493
        %v526 = vsub.f32 1.0, %v494
        %v527 = vsub.f32 1.0, %v495
        %v528 = vsub.f32 1.0, %v496
        %v529 = vsub.f32 1.0, %v497
        %v530 = vsub.f32 1.0, %v498
        %v531 = vsub.f32 1.0, %v499
        %v532 = vsub.f32 1.0, %v500
        %v533 = vsub.f32 1.0, %v501
        %v534 = vsub.f32 1.0, %v502
        %v535 = vsub.f32 1.0, %v503
        %v536 = vsub.f32 1.0, %v504
        %v537 = vsub.f32 1.0, %v505
        %v538 = vsub.f32 1.0, %v506
        %v539 = vsub.f32 1.0, %v507
        %v540 = vsub.f32 1.0, %v508
        %v541 = vsub.f32 1.0, %v509
        %v542 = vsub.f32 1.0, %v510
        %v543 = vsub.f32 1.0, %v511
        %v544 = vsub.f32 1.0, %v512
        %v545 = vsub.f32 1.0, %v513
        %v546 = vsub.f32 1.0, %v514
        %v547 = vsub.f32 1.0, %v515
        %v548 = vsub.f32 1.0, %v516
        %v549 = vmax.f32 %v517, 0.0
        %v550 = vmax.f32 %v518, 0.0
        %v551 = vmax.f32 %v519, 0.0
        %v552 = vmax.f32 %v520, 0.0
        %v553 = vmax.f32 %v521, 0.0
        %v554 = vmax.f32 %v522, 0.0
        %v555 = vmax.f32 %v523, 0.0
        %v556 = vmax.f32 %v524, 0.0
        %v557 = vmax.f32 %v525, 0.0
        %v558 = vmax.f32 %v526, 0.0
        %v559 = vmax.f32 %v527, 0.0
        %v560 = vmax.f32 %v528, 0.0
        %v561 = vmax.f32 %v529, 0.0
        %v562 = vmax.f32 %v530, 0.0
        %v563 = vmax.f32 %v531, 0.0
        %v564 = vmax.f32 %v532, 0.0
        %v565 = vmax.f32 %v533, 0.0
        %v566 = vmax.f32 %v534, 0.0
        %v567 = vmax.f32 %v535, 0.0
        %v568 = vmax.f32 %v536, 0.0
        %v569 = vmax.f32 %v537, 0.0
        %v570 = vmax.f32 %v538, 0.0
        %v571 = vmax.f32 %v539, 0.0
        %v572 = vmax.f32 %v540, 0.0
        %v573 = vmax.f32 %v541, 0.0
        %v574 = vmax.f32 %v542, 0.0
        %v575 = vmax.f32 %v543, 0.0
        %v576 = vmax.f32 %v544, 0.0
        %v577 = vmax.f32 %v545, 0.0
        %v578 = vmax.f32 %v546, 0.0
        %v579 = vmax.f32 %v547, 0.0
        %v580 = vmax.f32 %v548, 0.0
        %v581 = vld [vmem:[%s5] sm:$0xff]
        %v582 = vld [vmem:[%s5 + $0x8] sm:$0xff]
        %v583 = vld [vmem:[%s5 + $0x10] sm:$0xff]
        %v584 = vld [vmem:[%s5 + $0x18] sm:$0xff]
        %v585 = vld [vmem:[%s5 + $0x20] sm:$0xff]
        %v586 = vld [vmem:[%s5 + $0x28] sm:$0xff]
        %v587 = vld [vmem:[%s5 + $0x30] sm:$0xff]
        %v588 = vld [vmem:[%s5 + $0x38] sm:$0xff]
        %v589 = vld [vmem:[%s5 + $0x40] sm:$0xff]
        %v590 = vld [vmem:[%s5 + $0x48] sm:$0xff]
        %v591 = vld [vmem:[%s5 + $0x50] sm:$0xff]
        %v592 = vld [vmem:[%s5 + $0x58] sm:$0xff]
        %v593 = vld [vmem:[%s5 + $0x60] sm:$0xff]
        %v594 = vld [vmem:[%s5 + $0x68] sm:$0xff]
        %v595 = vld [vmem:[%s5 + $0x70] sm:$0xff]
        %v596 = vld [vmem:[%s5 + $0x78] sm:$0xff]
        %v598 = vlaneseq
        %v599 = vshrl.u32 %v598, 7
        %v600 = vsub.s32 0, %v599
        %v601 = vrot.slane %v377, %v600
        %v602 = vlaneseq
        %v603 = vshrl.u32 %v602, 7
        %v604 = vsub.s32 1, %v603
        %v605 = vrot.slane %v377, %v604
        %v606 = vlaneseq
        %v607 = vshrl.u32 %v606, 7
        %v608 = vsub.s32 2, %v607
        %v609 = vrot.slane %v377, %v608
        %v610 = vlaneseq
        %v611 = vshrl.u32 %v610, 7
        %v612 = vsub.s32 3, %v611
        %v613 = vrot.slane %v377, %v612
        %v614 = vlaneseq
        %v615 = vshrl.u32 %v614, 7
        %v616 = vsub.s32 4, %v615
        %v617 = vrot.slane %v377, %v616
        %v618 = vlaneseq
        %v619 = vshrl.u32 %v618, 7
        %v620 = vsub.s32 5, %v619
        %v621 = vrot.slane %v377, %v620
        %v622 = vlaneseq
        %v623 = vshrl.u32 %v622, 7
        %v624 = vsub.s32 6, %v623
        %v625 = vrot.slane %v377, %v624
        %v626 = vlaneseq
        %v627 = vshrl.u32 %v626, 7
        %v628 = vsub.s32 7, %v627
        %v629 = vrot.slane %v377, %v628
        %639 = vset.pattern.permute.xlu0 0
        %640 = vperm.xlu0 %639, %v581
        %v641 = vpop.permute.xlu0 %640
        %644 = vset.pattern.permute.xlu0 0
        %645 = vperm.xlu0 %644, %v582
        %v646 = vpop.permute.xlu0 %645
        %649 = vset.pattern.permute.xlu0 0
        %650 = vperm.xlu0 %649, %v583
        %v651 = vpop.permute.xlu0 %650
        %654 = vset.pattern.permute.xlu0 0
        %655 = vperm.xlu0 %654, %v584
        %v656 = vpop.permute.xlu0 %655
        %659 = vset.pattern.permute.xlu0 0
        %660 = vperm.xlu0 %659, %v585
        %v661 = vpop.permute.xlu0 %660
        %664 = vset.pattern.permute.xlu0 0
        %665 = vperm.xlu0 %664, %v586
        %v666 = vpop.permute.xlu0 %665
        %669 = vset.pattern.permute.xlu0 0
        %670 = vperm.xlu0 %669, %v587
        %v671 = vpop.permute.xlu0 %670
        %674 = vset.pattern.permute.xlu0 0
        %675 = vperm.xlu0 %674, %v588
        %v676 = vpop.permute.xlu0 %675
        %679 = vset.pattern.permute.xlu0 0
        %680 = vperm.xlu0 %679, %v589
        %v681 = vpop.permute.xlu0 %680
        %684 = vset.pattern.permute.xlu0 0
        %685 = vperm.xlu0 %684, %v590
        %v686 = vpop.permute.xlu0 %685
        %689 = vset.pattern.permute.xlu0 0
        %690 = vperm.xlu0 %689, %v591
        %v691 = vpop.permute.xlu0 %690
        %694 = vset.pattern.permute.xlu0 0
        %695 = vperm.xlu0 %694, %v592
        %v696 = vpop.permute.xlu0 %695
        %699 = vset.pattern.permute.xlu0 0
        %700 = vperm.xlu0 %699, %v593
        %v701 = vpop.permute.xlu0 %700
        %704 = vset.pattern.permute.xlu0 0
        %705 = vperm.xlu0 %704, %v594
        %v706 = vpop.permute.xlu0 %705
        %709 = vset.pattern.permute.xlu0 0
        %710 = vperm.xlu0 %709, %v595
        %v711 = vpop.permute.xlu0 %710
        %714 = vset.pattern.permute.xlu0 0
        %715 = vperm.xlu0 %714, %v596
        %v716 = vpop.permute.xlu0 %715
        %v718 = vsub.f32 %v601, %v641
        %v719 = vsub.f32 %v605, %v641
        %v720 = vsub.f32 %v609, %v641
        %v721 = vsub.f32 %v613, %v641
        %v722 = vsub.f32 %v617, %v641
        %v723 = vsub.f32 %v621, %v641
        %v724 = vsub.f32 %v625, %v641
        %v725 = vsub.f32 %v629, %v641
        %v726 = vsub.f32 %v601, %v646
        %v727 = vsub.f32 %v605, %v646
        %v728 = vsub.f32 %v609, %v646
        %v729 = vsub.f32 %v613, %v646
        %v730 = vsub.f32 %v617, %v646
        %v731 = vsub.f32 %v621, %v646
        %v732 = vsub.f32 %v625, %v646
        %v733 = vsub.f32 %v629, %v646
        %v734 = vsub.f32 %v601, %v651
        %v735 = vsub.f32 %v605, %v651
        %v736 = vsub.f32 %v609, %v651
        %v737 = vsub.f32 %v613, %v651
        %v738 = vsub.f32 %v617, %v651
        %v739 = vsub.f32 %v621, %v651
        %v740 = vsub.f32 %v625, %v651
        %v741 = vsub.f32 %v629, %v651
        %v742 = vsub.f32 %v601, %v656
        %v743 = vsub.f32 %v605, %v656
        %v744 = vsub.f32 %v609, %v656
        %v745 = vsub.f32 %v613, %v656
        %v746 = vsub.f32 %v617, %v656
        %v747 = vsub.f32 %v621, %v656
        %v748 = vsub.f32 %v625, %v656
        %v749 = vsub.f32 %v629, %v656
        %v750 = vsub.f32 %v601, %v661
        %v751 = vsub.f32 %v605, %v661
        %v752 = vsub.f32 %v609, %v661
        %v753 = vsub.f32 %v613, %v661
        %v754 = vsub.f32 %v617, %v661
        %v755 = vsub.f32 %v621, %v661
        %v756 = vsub.f32 %v625, %v661
        %v757 = vsub.f32 %v629, %v661
        %v758 = vsub.f32 %v601, %v666
        %v759 = vsub.f32 %v605, %v666
        %v760 = vsub.f32 %v609, %v666
        %v761 = vsub.f32 %v613, %v666
        %v762 = vsub.f32 %v617, %v666
        %v763 = vsub.f32 %v621, %v666
        %v764 = vsub.f32 %v625, %v666
        %v765 = vsub.f32 %v629, %v666
        %v766 = vsub.f32 %v601, %v671
        %v767 = vsub.f32 %v605, %v671
        %v768 = vsub.f32 %v609, %v671
        %v769 = vsub.f32 %v613, %v671
        %v770 = vsub.f32 %v617, %v671
        %v771 = vsub.f32 %v621, %v671
        %v772 = vsub.f32 %v625, %v671
        %v773 = vsub.f32 %v629, %v671
        %v774 = vsub.f32 %v601, %v676
        %v775 = vsub.f32 %v605, %v676
        %v776 = vsub.f32 %v609, %v676
        %v777 = vsub.f32 %v613, %v676
        %v778 = vsub.f32 %v617, %v676
        %v779 = vsub.f32 %v621, %v676
        %v780 = vsub.f32 %v625, %v676
        %v781 = vsub.f32 %v629, %v676
        %v782 = vsub.f32 %v601, %v681
        %v783 = vsub.f32 %v605, %v681
        %v784 = vsub.f32 %v609, %v681
        %v785 = vsub.f32 %v613, %v681
        %v786 = vsub.f32 %v617, %v681
        %v787 = vsub.f32 %v621, %v681
        %v788 = vsub.f32 %v625, %v681
        %v789 = vsub.f32 %v629, %v681
        %v790 = vsub.f32 %v601, %v686
        %v791 = vsub.f32 %v605, %v686
        %v792 = vsub.f32 %v609, %v686
        %v793 = vsub.f32 %v613, %v686
        %v794 = vsub.f32 %v617, %v686
        %v795 = vsub.f32 %v621, %v686
        %v796 = vsub.f32 %v625, %v686
        %v797 = vsub.f32 %v629, %v686
        %v798 = vsub.f32 %v601, %v691
        %v799 = vsub.f32 %v605, %v691
        %v800 = vsub.f32 %v609, %v691
        %v801 = vsub.f32 %v613, %v691
        %v802 = vsub.f32 %v617, %v691
        %v803 = vsub.f32 %v621, %v691
        %v804 = vsub.f32 %v625, %v691
        %v805 = vsub.f32 %v629, %v691
        %v806 = vsub.f32 %v601, %v696
        %v807 = vsub.f32 %v605, %v696
        %v808 = vsub.f32 %v609, %v696
        %v809 = vsub.f32 %v613, %v696
        %v810 = vsub.f32 %v617, %v696
        %v811 = vsub.f32 %v621, %v696
        %v812 = vsub.f32 %v625, %v696
        %v813 = vsub.f32 %v629, %v696
        %v814 = vsub.f32 %v601, %v701
        %v815 = vsub.f32 %v605, %v701
        %v816 = vsub.f32 %v609, %v701
        %v817 = vsub.f32 %v613, %v701
        %v818 = vsub.f32 %v617, %v701
        %v819 = vsub.f32 %v621, %v701
        %v820 = vsub.f32 %v625, %v701
        %v821 = vsub.f32 %v629, %v701
        %v822 = vsub.f32 %v601, %v706
        %v823 = vsub.f32 %v605, %v706
        %v824 = vsub.f32 %v609, %v706
        %v825 = vsub.f32 %v613, %v706
        %v826 = vsub.f32 %v617, %v706
        %v827 = vsub.f32 %v621, %v706
        %v828 = vsub.f32 %v625, %v706
        %v829 = vsub.f32 %v629, %v706
        %v830 = vsub.f32 %v601, %v711
        %v831 = vsub.f32 %v605, %v711
        %v832 = vsub.f32 %v609, %v711
        %v833 = vsub.f32 %v613, %v711
        %v834 = vsub.f32 %v617, %v711
        %v835 = vsub.f32 %v621, %v711
        %v836 = vsub.f32 %v625, %v711
        %v837 = vsub.f32 %v629, %v711
        %v838 = vsub.f32 %v601, %v716
        %v839 = vsub.f32 %v605, %v716
        %v840 = vsub.f32 %v609, %v716
        %v841 = vsub.f32 %v613, %v716
        %v842 = vsub.f32 %v617, %v716
        %v843 = vsub.f32 %v621, %v716
        %v844 = vsub.f32 %v625, %v716
        %v845 = vsub.f32 %v629, %v716
        %v846 = vand.u32 2147483647, %v718
        %v847 = vand.u32 2147483647, %v719
        %v848 = vand.u32 2147483647, %v720
        %v849 = vand.u32 2147483647, %v721
        %v850 = vand.u32 2147483647, %v722
        %v851 = vand.u32 2147483647, %v723
        %v852 = vand.u32 2147483647, %v724
        %v853 = vand.u32 2147483647, %v725
        %v854 = vand.u32 2147483647, %v726
        %v855 = vand.u32 2147483647, %v727
        %v856 = vand.u32 2147483647, %v728
        %v857 = vand.u32 2147483647, %v729
        %v858 = vand.u32 2147483647, %v730
        %v859 = vand.u32 2147483647, %v731
        %v860 = vand.u32 2147483647, %v732
        %v861 = vand.u32 2147483647, %v733
        %v862 = vand.u32 2147483647, %v734
        %v863 = vand.u32 2147483647, %v735
        %v864 = vand.u32 2147483647, %v736
        %v865 = vand.u32 2147483647, %v737
        %v866 = vand.u32 2147483647, %v738
        %v867 = vand.u32 2147483647, %v739
        %v868 = vand.u32 2147483647, %v740
        %v869 = vand.u32 2147483647, %v741
        %v870 = vand.u32 2147483647, %v742
        %v871 = vand.u32 2147483647, %v743
        %v872 = vand.u32 2147483647, %v744
        %v873 = vand.u32 2147483647, %v745
        %v874 = vand.u32 2147483647, %v746
        %v875 = vand.u32 2147483647, %v747
        %v876 = vand.u32 2147483647, %v748
        %v877 = vand.u32 2147483647, %v749
        %v878 = vand.u32 2147483647, %v750
        %v879 = vand.u32 2147483647, %v751
        %v880 = vand.u32 2147483647, %v752
        %v881 = vand.u32 2147483647, %v753
        %v882 = vand.u32 2147483647, %v754
        %v883 = vand.u32 2147483647, %v755
        %v884 = vand.u32 2147483647, %v756
        %v885 = vand.u32 2147483647, %v757
        %v886 = vand.u32 2147483647, %v758
        %v887 = vand.u32 2147483647, %v759
        %v888 = vand.u32 2147483647, %v760
        %v889 = vand.u32 2147483647, %v761
        %v890 = vand.u32 2147483647, %v762
        %v891 = vand.u32 2147483647, %v763
        %v892 = vand.u32 2147483647, %v764
        %v893 = vand.u32 2147483647, %v765
        %v894 = vand.u32 2147483647, %v766
        %v895 = vand.u32 2147483647, %v767
        %v896 = vand.u32 2147483647, %v768
        %v897 = vand.u32 2147483647, %v769
        %v898 = vand.u32 2147483647, %v770
        %v899 = vand.u32 2147483647, %v771
        %v900 = vand.u32 2147483647, %v772
        %v901 = vand.u32 2147483647, %v773
        %v902 = vand.u32 2147483647, %v774
        %v903 = vand.u32 2147483647, %v775
        %v904 = vand.u32 2147483647, %v776
        %v905 = vand.u32 2147483647, %v777
        %v906 = vand.u32 2147483647, %v778
        %v907 = vand.u32 2147483647, %v779
        %v908 = vand.u32 2147483647, %v780
        %v909 = vand.u32 2147483647, %v781
        %v910 = vand.u32 2147483647, %v782
        %v911 = vand.u32 2147483647, %v783
        %v912 = vand.u32 2147483647, %v784
        %v913 = vand.u32 2147483647, %v785
        %v914 = vand.u32 2147483647, %v786
        %v915 = vand.u32 2147483647, %v787
        %v916 = vand.u32 2147483647, %v788
        %v917 = vand.u32 2147483647, %v789
        %v918 = vand.u32 2147483647, %v790
        %v919 = vand.u32 2147483647, %v791
        %v920 = vand.u32 2147483647, %v792
        %v921 = vand.u32 2147483647, %v793
        %v922 = vand.u32 2147483647, %v794
        %v923 = vand.u32 2147483647, %v795
        %v924 = vand.u32 2147483647, %v796
        %v925 = vand.u32 2147483647, %v797
        %v926 = vand.u32 2147483647, %v798
        %v927 = vand.u32 2147483647, %v799
        %v928 = vand.u32 2147483647, %v800
        %v929 = vand.u32 2147483647, %v801
        %v930 = vand.u32 2147483647, %v802
        %v931 = vand.u32 2147483647, %v803
        %v932 = vand.u32 2147483647, %v804
        %v933 = vand.u32 2147483647, %v805
        %v934 = vand.u32 2147483647, %v806
        %v935 = vand.u32 2147483647, %v807
        %v936 = vand.u32 2147483647, %v808
        %v937 = vand.u32 2147483647, %v809
        %v938 = vand.u32 2147483647, %v810
        %v939 = vand.u32 2147483647, %v811
        %v940 = vand.u32 2147483647, %v812
        %v941 = vand.u32 2147483647, %v813
        %v942 = vand.u32 2147483647, %v814
        %v943 = vand.u32 2147483647, %v815
        %v944 = vand.u32 2147483647, %v816
        %v945 = vand.u32 2147483647, %v817
        %v946 = vand.u32 2147483647, %v818
        %v947 = vand.u32 2147483647, %v819
        %v948 = vand.u32 2147483647, %v820
        %v949 = vand.u32 2147483647, %v821
        %v950 = vand.u32 2147483647, %v822
        %v951 = vand.u32 2147483647, %v823
        %v952 = vand.u32 2147483647, %v824
        %v953 = vand.u32 2147483647, %v825
        %v954 = vand.u32 2147483647, %v826
        %v955 = vand.u32 2147483647, %v827
        %v956 = vand.u32 2147483647, %v828
        %v957 = vand.u32 2147483647, %v829
        %v958 = vand.u32 2147483647, %v830
        %v959 = vand.u32 2147483647, %v831
        %v960 = vand.u32 2147483647, %v832
        %v961 = vand.u32 2147483647, %v833
        %v962 = vand.u32 2147483647, %v834
        %v963 = vand.u32 2147483647, %v835
        %v964 = vand.u32 2147483647, %v836
        %v965 = vand.u32 2147483647, %v837
        %v966 = vand.u32 2147483647, %v838
        %v967 = vand.u32 2147483647, %v839
        %v968 = vand.u32 2147483647, %v840
        %v969 = vand.u32 2147483647, %v841
        %v970 = vand.u32 2147483647, %v842
        %v971 = vand.u32 2147483647, %v843
        %v972 = vand.u32 2147483647, %v844
        %v973 = vand.u32 2147483647, %v845
        %v974 = vsub.f32 1.0, %v846
        %v975 = vsub.f32 1.0, %v847
        %v976 = vsub.f32 1.0, %v848
        %v977 = vsub.f32 1.0, %v849
        %v978 = vsub.f32 1.0, %v850
        %v979 = vsub.f32 1.0, %v851
        %v980 = vsub.f32 1.0, %v852
        %v981 = vsub.f32 1.0, %v853
        %v982 = vsub.f32 1.0, %v854
        %v983 = vsub.f32 1.0, %v855
        %v984 = vsub.f32 1.0, %v856
        %v985 = vsub.f32 1.0, %v857
        %v986 = vsub.f32 1.0, %v858
        %v987 = vsub.f32 1.0, %v859
        %v988 = vsub.f32 1.0, %v860
        %v989 = vsub.f32 1.0, %v861
        %v990 = vsub.f32 1.0, %v862
        %v991 = vsub.f32 1.0, %v863
        %v992 = vsub.f32 1.0, %v864
        %v993 = vsub.f32 1.0, %v865
        %v994 = vsub.f32 1.0, %v866
        %v995 = vsub.f32 1.0, %v867
        %v996 = vsub.f32 1.0, %v868
        %v997 = vsub.f32 1.0, %v869
        %v998 = vsub.f32 1.0, %v870
        %v999 = vsub.f32 1.0, %v871
        %v1000 = vsub.f32 1.0, %v872
        %v1001 = vsub.f32 1.0, %v873
        %v1002 = vsub.f32 1.0, %v874
        %v1003 = vsub.f32 1.0, %v875
        %v1004 = vsub.f32 1.0, %v876
        %v1005 = vsub.f32 1.0, %v877
        %v1006 = vsub.f32 1.0, %v878
        %v1007 = vsub.f32 1.0, %v879
        %v1008 = vsub.f32 1.0, %v880
        %v1009 = vsub.f32 1.0, %v881
        %v1010 = vsub.f32 1.0, %v882
        %v1011 = vsub.f32 1.0, %v883
        %v1012 = vsub.f32 1.0, %v884
        %v1013 = vsub.f32 1.0, %v885
        %v1014 = vsub.f32 1.0, %v886
        %v1015 = vsub.f32 1.0, %v887
        %v1016 = vsub.f32 1.0, %v888
        %v1017 = vsub.f32 1.0, %v889
        %v1018 = vsub.f32 1.0, %v890
        %v1019 = vsub.f32 1.0, %v891
        %v1020 = vsub.f32 1.0, %v892
        %v1021 = vsub.f32 1.0, %v893
        %v1022 = vsub.f32 1.0, %v894
        %v1023 = vsub.f32 1.0, %v895
        %v1024 = vsub.f32 1.0, %v896
        %v1025 = vsub.f32 1.0, %v897
        %v1026 = vsub.f32 1.0, %v898
        %v1027 = vsub.f32 1.0, %v899
        %v1028 = vsub.f32 1.0, %v900
        %v1029 = vsub.f32 1.0, %v901
        %v1030 = vsub.f32 1.0, %v902
        %v1031 = vsub.f32 1.0, %v903
        %v1032 = vsub.f32 1.0, %v904
        %v1033 = vsub.f32 1.0, %v905
        %v1034 = vsub.f32 1.0, %v906
        %v1035 = vsub.f32 1.0, %v907
        %v1036 = vsub.f32 1.0, %v908
        %v1037 = vsub.f32 1.0, %v909
        %v1038 = vsub.f32 1.0, %v910
        %v1039 = vsub.f32 1.0, %v911
        %v1040 = vsub.f32 1.0, %v912
        %v1041 = vsub.f32 1.0, %v913
        %v1042 = vsub.f32 1.0, %v914
        %v1043 = vsub.f32 1.0, %v915
        %v1044 = vsub.f32 1.0, %v916
        %v1045 = vsub.f32 1.0, %v917
        %v1046 = vsub.f32 1.0, %v918
        %v1047 = vsub.f32 1.0, %v919
        %v1048 = vsub.f32 1.0, %v920
        %v1049 = vsub.f32 1.0, %v921
        %v1050 = vsub.f32 1.0, %v922
        %v1051 = vsub.f32 1.0, %v923
        %v1052 = vsub.f32 1.0, %v924
        %v1053 = vsub.f32 1.0, %v925
        %v1054 = vsub.f32 1.0, %v926
        %v1055 = vsub.f32 1.0, %v927
        %v1056 = vsub.f32 1.0, %v928
        %v1057 = vsub.f32 1.0, %v929
        %v1058 = vsub.f32 1.0, %v930
        %v1059 = vsub.f32 1.0, %v931
        %v1060 = vsub.f32 1.0, %v932
        %v1061 = vsub.f32 1.0, %v933
        %v1062 = vsub.f32 1.0, %v934
        %v1063 = vsub.f32 1.0, %v935
        %v1064 = vsub.f32 1.0, %v936
        %v1065 = vsub.f32 1.0, %v937
        %v1066 = vsub.f32 1.0, %v938
        %v1067 = vsub.f32 1.0, %v939
        %v1068 = vsub.f32 1.0, %v940
        %v1069 = vsub.f32 1.0, %v941
        %v1070 = vsub.f32 1.0, %v942
        %v1071 = vsub.f32 1.0, %v943
        %v1072 = vsub.f32 1.0, %v944
        %v1073 = vsub.f32 1.0, %v945
        %v1074 = vsub.f32 1.0, %v946
        %v1075 = vsub.f32 1.0, %v947
        %v1076 = vsub.f32 1.0, %v948
        %v1077 = vsub.f32 1.0, %v949
        %v1078 = vsub.f32 1.0, %v950
        %v1079 = vsub.f32 1.0, %v951
        %v1080 = vsub.f32 1.0, %v952
        %v1081 = vsub.f32 1.0, %v953
        %v1082 = vsub.f32 1.0, %v954
        %v1083 = vsub.f32 1.0, %v955
        %v1084 = vsub.f32 1.0, %v956
        %v1085 = vsub.f32 1.0, %v957
        %v1086 = vsub.f32 1.0, %v958
        %v1087 = vsub.f32 1.0, %v959
        %v1088 = vsub.f32 1.0, %v960
        %v1089 = vsub.f32 1.0, %v961
        %v1090 = vsub.f32 1.0, %v962
        %v1091 = vsub.f32 1.0, %v963
        %v1092 = vsub.f32 1.0, %v964
        %v1093 = vsub.f32 1.0, %v965
        %v1094 = vsub.f32 1.0, %v966
        %v1095 = vsub.f32 1.0, %v967
        %v1096 = vsub.f32 1.0, %v968
        %v1097 = vsub.f32 1.0, %v969
        %v1098 = vsub.f32 1.0, %v970
        %v1099 = vsub.f32 1.0, %v971
        %v1100 = vsub.f32 1.0, %v972
        %v1101 = vsub.f32 1.0, %v973
        %v1102 = vmax.f32 %v974, 0.0
        %v1103 = vmax.f32 %v975, 0.0
        %v1104 = vmax.f32 %v976, 0.0
        %v1105 = vmax.f32 %v977, 0.0
        %v1106 = vmax.f32 %v978, 0.0
        %v1107 = vmax.f32 %v979, 0.0
        %v1108 = vmax.f32 %v980, 0.0
        %v1109 = vmax.f32 %v981, 0.0
        %v1110 = vmax.f32 %v982, 0.0
        %v1111 = vmax.f32 %v983, 0.0
        %v1112 = vmax.f32 %v984, 0.0
        %v1113 = vmax.f32 %v985, 0.0
        %v1114 = vmax.f32 %v986, 0.0
        %v1115 = vmax.f32 %v987, 0.0
        %v1116 = vmax.f32 %v988, 0.0
        %v1117 = vmax.f32 %v989, 0.0
        %v1118 = vmax.f32 %v990, 0.0
        %v1119 = vmax.f32 %v991, 0.0
        %v1120 = vmax.f32 %v992, 0.0
        %v1121 = vmax.f32 %v993, 0.0
        %v1122 = vmax.f32 %v994, 0.0
        %v1123 = vmax.f32 %v995, 0.0
        %v1124 = vmax.f32 %v996, 0.0
        %v1125 = vmax.f32 %v997, 0.0
        %v1126 = vmax.f32 %v998, 0.0
        %v1127 = vmax.f32 %v999, 0.0
        %v1128 = vmax.f32 %v1000, 0.0
        %v1129 = vmax.f32 %v1001, 0.0
        %v1130 = vmax.f32 %v1002, 0.0
        %v1131 = vmax.f32 %v1003, 0.0
        %v1132 = vmax.f32 %v1004, 0.0
        %v1133 = vmax.f32 %v1005, 0.0
        %v1134 = vmax.f32 %v1006, 0.0
        %v1135 = vmax.f32 %v1007, 0.0
        %v1136 = vmax.f32 %v1008, 0.0
        %v1137 = vmax.f32 %v1009, 0.0
        %v1138 = vmax.f32 %v1010, 0.0
        %v1139 = vmax.f32 %v1011, 0.0
        %v1140 = vmax.f32 %v1012, 0.0
        %v1141 = vmax.f32 %v1013, 0.0
        %v1142 = vmax.f32 %v1014, 0.0
        %v1143 = vmax.f32 %v1015, 0.0
        %v1144 = vmax.f32 %v1016, 0.0
        %v1145 = vmax.f32 %v1017, 0.0
        %v1146 = vmax.f32 %v1018, 0.0
        %v1147 = vmax.f32 %v1019, 0.0
        %v1148 = vmax.f32 %v1020, 0.0
        %v1149 = vmax.f32 %v1021, 0.0
        %v1150 = vmax.f32 %v1022, 0.0
        %v1151 = vmax.f32 %v1023, 0.0
        %v1152 = vmax.f32 %v1024, 0.0
        %v1153 = vmax.f32 %v1025, 0.0
        %v1154 = vmax.f32 %v1026, 0.0
        %v1155 = vmax.f32 %v1027, 0.0
        %v1156 = vmax.f32 %v1028, 0.0
        %v1157 = vmax.f32 %v1029, 0.0
        %v1158 = vmax.f32 %v1030, 0.0
        %v1159 = vmax.f32 %v1031, 0.0
        %v1160 = vmax.f32 %v1032, 0.0
        %v1161 = vmax.f32 %v1033, 0.0
        %v1162 = vmax.f32 %v1034, 0.0
        %v1163 = vmax.f32 %v1035, 0.0
        %v1164 = vmax.f32 %v1036, 0.0
        %v1165 = vmax.f32 %v1037, 0.0
        %v1166 = vmax.f32 %v1038, 0.0
        %v1167 = vmax.f32 %v1039, 0.0
        %v1168 = vmax.f32 %v1040, 0.0
        %v1169 = vmax.f32 %v1041, 0.0
        %v1170 = vmax.f32 %v1042, 0.0
        %v1171 = vmax.f32 %v1043, 0.0
        %v1172 = vmax.f32 %v1044, 0.0
        %v1173 = vmax.f32 %v1045, 0.0
        %v1174 = vmax.f32 %v1046, 0.0
        %v1175 = vmax.f32 %v1047, 0.0
        %v1176 = vmax.f32 %v1048, 0.0
        %v1177 = vmax.f32 %v1049, 0.0
        %v1178 = vmax.f32 %v1050, 0.0
        %v1179 = vmax.f32 %v1051, 0.0
        %v1180 = vmax.f32 %v1052, 0.0
        %v1181 = vmax.f32 %v1053, 0.0
        %v1182 = vmax.f32 %v1054, 0.0
        %v1183 = vmax.f32 %v1055, 0.0
        %v1184 = vmax.f32 %v1056, 0.0
        %v1185 = vmax.f32 %v1057, 0.0
        %v1186 = vmax.f32 %v1058, 0.0
        %v1187 = vmax.f32 %v1059, 0.0
        %v1188 = vmax.f32 %v1060, 0.0
        %v1189 = vmax.f32 %v1061, 0.0
        %v1190 = vmax.f32 %v1062, 0.0
        %v1191 = vmax.f32 %v1063, 0.0
        %v1192 = vmax.f32 %v1064, 0.0
        %v1193 = vmax.f32 %v1065, 0.0
        %v1194 = vmax.f32 %v1066, 0.0
        %v1195 = vmax.f32 %v1067, 0.0
        %v1196 = vmax.f32 %v1068, 0.0
        %v1197 = vmax.f32 %v1069, 0.0
        %v1198 = vmax.f32 %v1070, 0.0
        %v1199 = vmax.f32 %v1071, 0.0
        %v1200 = vmax.f32 %v1072, 0.0
        %v1201 = vmax.f32 %v1073, 0.0
        %v1202 = vmax.f32 %v1074, 0.0
        %v1203 = vmax.f32 %v1075, 0.0
        %v1204 = vmax.f32 %v1076, 0.0
        %v1205 = vmax.f32 %v1077, 0.0
        %v1206 = vmax.f32 %v1078, 0.0
        %v1207 = vmax.f32 %v1079, 0.0
        %v1208 = vmax.f32 %v1080, 0.0
        %v1209 = vmax.f32 %v1081, 0.0
        %v1210 = vmax.f32 %v1082, 0.0
        %v1211 = vmax.f32 %v1083, 0.0
        %v1212 = vmax.f32 %v1084, 0.0
        %v1213 = vmax.f32 %v1085, 0.0
        %v1214 = vmax.f32 %v1086, 0.0
        %v1215 = vmax.f32 %v1087, 0.0
        %v1216 = vmax.f32 %v1088, 0.0
        %v1217 = vmax.f32 %v1089, 0.0
        %v1218 = vmax.f32 %v1090, 0.0
        %v1219 = vmax.f32 %v1091, 0.0
        %v1220 = vmax.f32 %v1092, 0.0
        %v1221 = vmax.f32 %v1093, 0.0
        %v1222 = vmax.f32 %v1094, 0.0
        %v1223 = vmax.f32 %v1095, 0.0
        %v1224 = vmax.f32 %v1096, 0.0
        %v1225 = vmax.f32 %v1097, 0.0
        %v1226 = vmax.f32 %v1098, 0.0
        %v1227 = vmax.f32 %v1099, 0.0
        %v1228 = vmax.f32 %v1100, 0.0
        %v1229 = vmax.f32 %v1101, 0.0
        %v1230 = vld [vmem:[%s333] sm:$0xff]
        %v1231 = vld [vmem:[%s333 + $0x8] sm:$0xff]
        %v1232 = vld [vmem:[%s333 + $0x10] sm:$0xff]
        %v1233 = vld [vmem:[%s333 + $0x18] sm:$0xff]
        %v1234 = vld [vmem:[%s333 + $0x20] sm:$0xff]
        %v1235 = vld [vmem:[%s333 + $0x28] sm:$0xff]
        %v1236 = vld [vmem:[%s333 + $0x30] sm:$0xff]
        %v1237 = vld [vmem:[%s333 + $0x38] sm:$0xff]
        %v1238 = vld [vmem:[%s333 + $0x40] sm:$0xff]
        %v1239 = vld [vmem:[%s333 + $0x48] sm:$0xff]
        %v1240 = vld [vmem:[%s333 + $0x50] sm:$0xff]
        %v1241 = vld [vmem:[%s333 + $0x58] sm:$0xff]
        %v1242 = vld [vmem:[%s333 + $0x60] sm:$0xff]
        %v1243 = vld [vmem:[%s333 + $0x68] sm:$0xff]
        %v1244 = vld [vmem:[%s333 + $0x70] sm:$0xff]
        %v1245 = vld [vmem:[%s333 + $0x78] sm:$0xff]
        %vm1246 = vcmask 261120
        %v1248 = vsel %vm1246, %v1230, 0
        %v1251 = vsel %vm1246, %v1231, 0
        %v1254 = vsel %vm1246, %v1232, 0
        %v1257 = vsel %vm1246, %v1233, 0
        %v1260 = vsel %vm1246, %v1234, 0
        %v1263 = vsel %vm1246, %v1235, 0
        %v1266 = vsel %vm1246, %v1236, 0
        %v1269 = vsel %vm1246, %v1237, 0
        %v1272 = vsel %vm1246, %v1238, 0
        %v1275 = vsel %vm1246, %v1239, 0
        %v1278 = vsel %vm1246, %v1240, 0
        %v1281 = vsel %vm1246, %v1241, 0
        %v1284 = vsel %vm1246, %v1242, 0
        %v1287 = vsel %vm1246, %v1243, 0
        %v1290 = vsel %vm1246, %v1244, 0
        %v1293 = vsel %vm1246, %v1245, 0
        %1295 = vmatprep.subr.mxu0 %v550
        %1296 = vmatpush1.msra.mxu0 %v549
        %1297 = vmatprep.subr.mxu0 %v558
        %1298 = vmatpush1.msra.mxu0 %v557
        %1299 = vmatprep.subr.mxu0 %v566
        %1300 = vmatpush1.msra.mxu0 %v565
        %1301 = vmatprep.subr.mxu0 %v574
        %1302 = vmatpush1.msra.mxu0 %v573
        %1303 = vmatprep.subr.mxu0 0.0
        %1304 = vmatpush1.msra.mxu0 0.0
        %1305 = vmatprep.subr.mxu0 0.0
        %1306 = vmatpush1.msra.mxu0 0.0
        %1307 = vmatprep.subr.mxu0 0.0
        %1308 = vmatpush1.msra.mxu0 0.0
        %1309 = vmatprep.subr.mxu0 0.0
        %1310 = vmatpush1.msra.mxu0 0.0
        %1311 = vmatprep.subr.mxu0 0.0
        %1312 = vmatpush1.msra.mxu0 0.0
        %1313 = vmatprep.subr.mxu0 0.0
        %1314 = vmatpush1.msra.mxu0 0.0
        %1315 = vmatprep.subr.mxu0 0.0
        %1316 = vmatpush1.msra.mxu0 0.0
        %1317 = vmatprep.subr.mxu0 0.0
        %1318 = vmatpush1.msra.mxu0 0.0
        %1319 = vmatprep.subr.mxu0 0.0
        %1320 = vmatpush1.msra.mxu0 0.0
        %1321 = vmatprep.subr.mxu0 0.0
        %1322 = vmatpush1.msra.mxu0 0.0
        %1323 = vmatprep.subr.mxu0 0.0
        %1324 = vmatpush1.msra.mxu0 0.0
        %1325 = vmatprep.subr.mxu0 0.0
        %1326 = vmatpush1.msra.mxu0 0.0
        %1327 = vmatprep.subr.mxu0 0.0
        %1328 = vmatpush1.msra.mxu0 0.0
        %1329 = vmatprep.subr.mxu0 0.0
        %1330 = vmatpush1.msra.mxu0 0.0
        %1331 = vmatprep.subr.mxu0 0.0
        %1332 = vmatpush1.msra.mxu0 0.0
        %1333 = vmatprep.subr.mxu0 0.0
        %1334 = vmatpush1.msra.mxu0 0.0
        %1335 = vmatprep.subr.mxu0 0.0
        %1336 = vmatpush1.msra.mxu0 0.0
        %1337 = vmatprep.subr.mxu0 0.0
        %1338 = vmatpush1.msra.mxu0 0.0
        %1339 = vmatprep.subr.mxu0 0.0
        %1340 = vmatpush1.msra.mxu0 0.0
        %1341 = vmatprep.subr.mxu0 0.0
        %1342 = vmatpush1.msra.mxu0 0.0
        %1343 = vmatprep.subr.mxu0 0.0
        %1344 = vmatpush1.msra.mxu0 0.0
        %1345 = vmatprep.subr.mxu0 0.0
        %1346 = vmatpush1.msra.mxu0 0.0
        %1347 = vmatprep.subr.mxu0 0.0
        %1348 = vmatpush1.msra.mxu0 0.0
        %1349 = vmatprep.subr.mxu0 0.0
        %1350 = vmatpush1.msra.mxu0 0.0
        %1351 = vmatprep.subr.mxu0 0.0
        %1352 = vmatpush1.msra.mxu0 0.0
        %1353 = vmatprep.subr.mxu0 0.0
        %1354 = vmatpush1.msra.mxu0 0.0
        %1355 = vmatprep.subr.mxu0 0.0
        %1356 = vmatpush1.msra.mxu0 0.0
        %1357 = vmatprep.subr.mxu0 0.0
        %1358 = vmatpush1.msra.mxu0 0.0
        %1359 = vmatprep.mubr.f32.mxu0 0.0
        %1360 = vmatmul.mubr.f32.gmra.mrb[0].mxu0 %v1248
        %v1361 = vpop.f32.mrb[0].mxu0
        %v1362 = vadd.f32 0.0, %v1361
        %v1363 = vpop.f32.mrb[0].mxu0
        %v1364 = vadd.f32 0.0, %v1363
        %1365 = vmatprep.mubr.f32.mxu0 0.0
        %1366 = vmatmul.mubr.f32.gmra.mrb[0].mxu0 %v1251
        %v1367 = vpop.f32.mrb[0].mxu0
        %v1368 = vadd.f32 0.0, %v1367
        %v1369 = vpop.f32.mrb[0].mxu0
        %v1370 = vadd.f32 0.0, %v1369
        %1371 = vmatprep.mubr.f32.mxu0 0.0
        %1372 = vmatmul.mubr.f32.gmra.mrb[0].mxu0 %v1254
        %v1373 = vpop.f32.mrb[0].mxu0
        %v1374 = vadd.f32 0.0, %v1373
        %v1375 = vpop.f32.mrb[0].mxu0
        %v1376 = vadd.f32 0.0, %v1375
        %1377 = vmatprep.mubr.f32.mxu0 0.0
        %1378 = vmatmul.mubr.f32.gmra.mrb[0].mxu0 %v1257
        %v1379 = vpop.f32.mrb[0].mxu0
        %v1380 = vadd.f32 0.0, %v1379
        %v1381 = vpop.f32.mrb[0].mxu0
        %v1382 = vadd.f32 0.0, %v1381
        %1383 = vmatprep.mubr.f32.mxu0 0.0
        %1384 = vmatmul.mubr.f32.gmra.mrb[0].mxu0 %v1260
        %v1385 = vpop.f32.mrb[0].mxu0
        %v1386 = vadd.f32 0.0, %v1385
        %v1387 = vpop.f32.mrb[0].mxu0
        %v1388 = vadd.f32 0.0, %v1387
        %1389 = vmatprep.mubr.f32.mxu0 0.0
        %1390 = vmatmul.mubr.f32.gmra.mrb[0].mxu0 %v1263
        %v1391 = vpop.f32.mrb[0].mxu0
        %v1392 = vadd.f32 0.0, %v1391
        %v1393 = vpop.f32.mrb[0].mxu0
        %v1394 = vadd.f32 0.0, %v1393
        %1395 = vmatprep.mubr.f32.mxu0 0.0
        %1396 = vmatmul.mubr.f32.gmra.mrb[0].mxu0 %v1266
        %v1397 = vpop.f32.mrb[0].mxu0
        %v1398 = vadd.f32 0.0, %v1397
        %v1399 = vpop.f32.mrb[0].mxu0
        %v1400 = vadd.f32 0.0, %v1399
        %1401 = vmatprep.mubr.f32.mxu0 0.0
        %1402 = vmatmul.mubr.f32.gmra.mrb[0].mxu0 %v1269
        %v1403 = vpop.f32.mrb[0].mxu0
        %v1404 = vadd.f32 0.0, %v1403
        %v1405 = vpop.f32.mrb[0].mxu0
        %v1406 = vadd.f32 0.0, %v1405
        %1407 = vmatprep.mubr.f32.mxu0 0.0
        %1408 = vmatmul.mubr.f32.gmra.mrb[0].mxu0 %v1272
        %v1409 = vpop.f32.mrb[0].mxu0
        %v1410 = vadd.f32 0.0, %v1409
        %v1411 = vpop.f32.mrb[0].mxu0
        %v1412 = vadd.f32 0.0, %v1411
        %1413 = vmatprep.mubr.f32.mxu0 0.0
        %1414 = vmatmul.mubr.f32.gmra.mrb[0].mxu0 %v1275
        %v1415 = vpop.f32.mrb[0].mxu0
        %v1416 = vadd.f32 0.0, %v1415
        %v1417 = vpop.f32.mrb[0].mxu0
        %v1418 = vadd.f32 0.0, %v1417
        %1419 = vmatprep.mubr.f32.mxu0 0.0
        %1420 = vmatmul.mubr.f32.gmra.mrb[0].mxu0 %v1278
        %v1421 = vpop.f32.mrb[0].mxu0
        %v1422 = vadd.f32 0.0, %v1421
        %v1423 = vpop.f32.mrb[0].mxu0
        %v1424 = vadd.f32 0.0, %v1423
        %1425 = vmatprep.mubr.f32.mxu0 0.0
        %1426 = vmatmul.mubr.f32.gmra.mrb[0].mxu0 %v1281
        %v1427 = vpop.f32.mrb[0].mxu0
        %v1428 = vadd.f32 0.0, %v1427
        %v1429 = vpop.f32.mrb[0].mxu0
        %v1430 = vadd.f32 0.0, %v1429
        %1431 = vmatprep.mubr.f32.mxu0 0.0
        %1432 = vmatmul.mubr.f32.gmra.mrb[0].mxu0 %v1284
        %v1433 = vpop.f32.mrb[0].mxu0
        %v1434 = vadd.f32 0.0, %v1433
        %v1435 = vpop.f32.mrb[0].mxu0
        %v1436 = vadd.f32 0.0, %v1435
        %1437 = vmatprep.mubr.f32.mxu0 0.0
        %1438 = vmatmul.mubr.f32.gmra.mrb[0].mxu0 %v1287
        %v1439 = vpop.f32.mrb[0].mxu0
        %v1440 = vadd.f32 0.0, %v1439
        %v1441 = vpop.f32.mrb[0].mxu0
        %v1442 = vadd.f32 0.0, %v1441
        %1443 = vmatprep.mubr.f32.mxu0 0.0
        %1444 = vmatmul.mubr.f32.gmra.mrb[0].mxu0 %v1290
        %v1445 = vpop.f32.mrb[0].mxu0
        %v1446 = vadd.f32 0.0, %v1445
        %v1447 = vpop.f32.mrb[0].mxu0
        %v1448 = vadd.f32 0.0, %v1447
        %1449 = vmatprep.mubr.f32.mxu0 0.0
        %1450 = vmatmul.mubr.f32.gmra.mrb[0].mxu0 %v1293
        %v1451 = vpop.f32.mrb[0].mxu0
        %v1452 = vadd.f32 0.0, %v1451
        %v1453 = vpop.f32.mrb[0].mxu0
        %v1454 = vadd.f32 0.0, %v1453
        %1455 = vdwg.mxu0
        %1456 = vmatprep.subr.mxu0 %v552
        %1457 = vmatpush1.msra.mxu0 %v551
        %1458 = vmatprep.subr.mxu0 %v560
        %1459 = vmatpush1.msra.mxu0 %v559
        %1460 = vmatprep.subr.mxu0 %v568
        %1461 = vmatpush1.msra.mxu0 %v567
        %1462 = vmatprep.subr.mxu0 %v576
        %1463 = vmatpush1.msra.mxu0 %v575
        %1464 = vmatprep.subr.mxu0 0.0
        %1465 = vmatpush1.msra.mxu0 0.0
        %1466 = vmatprep.subr.mxu0 0.0
        %1467 = vmatpush1.msra.mxu0 0.0
        %1468 = vmatprep.subr.mxu0 0.0
        %1469 = vmatpush1.msra.mxu0 0.0
        %1470 = vmatprep.subr.mxu0 0.0
        %1471 = vmatpush1.msra.mxu0 0.0
        %1472 = vmatprep.subr.mxu0 0.0
        %1473 = vmatpush1.msra.mxu0 0.0
        %1474 = vmatprep.subr.mxu0 0.0
        %1475 = vmatpush1.msra.mxu0 0.0
        %1476 = vmatprep.subr.mxu0 0.0
        %1477 = vmatpush1.msra.mxu0 0.0
        %1478 = vmatprep.subr.mxu0 0.0
        %1479 = vmatpush1.msra.mxu0 0.0
        %1480 = vmatprep.subr.mxu0 0.0
        %1481 = vmatpush1.msra.mxu0 0.0
        %1482 = vmatprep.subr.mxu0 0.0
        %1483 = vmatpush1.msra.mxu0 0.0
        %1484 = vmatprep.subr.mxu0 0.0
        %1485 = vmatpush1.msra.mxu0 0.0
        %1486 = vmatprep.subr.mxu0 0.0
        %1487 = vmatpush1.msra.mxu0 0.0
        %1488 = vmatprep.subr.mxu0 0.0
        %1489 = vmatpush1.msra.mxu0 0.0
        %1490 = vmatprep.subr.mxu0 0.0
        %1491 = vmatpush1.msra.mxu0 0.0
        %1492 = vmatprep.subr.mxu0 0.0
        %1493 = vmatpush1.msra.mxu0 0.0
        %1494 = vmatprep.subr.mxu0 0.0
        %1495 = vmatpush1.msra.mxu0 0.0
        %1496 = vmatprep.subr.mxu0 0.0
        %1497 = vmatpush1.msra.mxu0 0.0
        %1498 = vmatprep.subr.mxu0 0.0
        %1499 = vmatpush1.msra.mxu0 0.0
        %1500 = vmatprep.subr.mxu0 0.0
        %1501 = vmatpush1.msra.mxu0 0.0
        %1502 = vmatprep.subr.mxu0 0.0
        %1503 = vmatpush1.msra.mxu0 0.0
        %1504 = vmatprep.subr.mxu0 0.0
        %1505 = vmatpush1.msra.mxu0 0.0
        %1506 = vmatprep.subr.mxu0 0.0
        %1507 = vmatpush1.msra.mxu0 0.0
        %1508 = vmatprep.subr.mxu0 0.0
        %1509 = vmatpush1.msra.mxu0 0.0
        %1510 = vmatprep.subr.mxu0 0.0
        %1511 = vmatpush1.msra.mxu0 0.0
        %1512 = vmatprep.subr.mxu0 0.0
        %1513 = vmatpush1.msra.mxu0 0.0
        %1514 = vmatprep.subr.mxu0 0.0
        %1515 = vmatpush1.msra.mxu0 0.0
        %1516 = vmatprep.subr.mxu0 0.0
        %1517 = vmatpush1.msra.mxu0 0.0
        %1518 = vmatprep.subr.mxu0 0.0
        %1519 = vmatpush1.msra.mxu0 0.0
        %1520 = vmatprep.mubr.f32.mxu0 0.0
        %1521 = vmatmul.mubr.f32.gmra.mrb[0].mxu0 %v1248
        %v1522 = vpop.f32.mrb[0].mxu0
        %v1523 = vadd.f32 0.0, %v1522
        %v1524 = vpop.f32.mrb[0].mxu0
        %v1525 = vadd.f32 0.0, %v1524
        %1526 = vmatprep.mubr.f32.mxu0 0.0
        %1527 = vmatmul.mubr.f32.gmra.mrb[0].mxu0 %v1251
        %v1528 = vpop.f32.mrb[0].mxu0
        %v1529 = vadd.f32 0.0, %v1528
        %v1530 = vpop.f32.mrb[0].mxu0
        %v1531 = vadd.f32 0.0, %v1530
        %1532 = vmatprep.mubr.f32.mxu0 0.0
        %1533 = vmatmul.mubr.f32.gmra.mrb[0].mxu0 %v1254
        %v1534 = vpop.f32.mrb[0].mxu0
        %v1535 = vadd.f32 0.0, %v1534
        %v1536 = vpop.f32.mrb[0].mxu0
        %v1537 = vadd.f32 0.0, %v1536
        %1538 = vmatprep.mubr.f32.mxu0 0.0
        %1539 = vmatmul.mubr.f32.gmra.mrb[0].mxu0 %v1257
        %v1540 = vpop.f32.mrb[0].mxu0
        %v1541 = vadd.f32 0.0, %v1540
        %v1542 = vpop.f32.mrb[0].mxu0
        %v1543 = vadd.f32 0.0, %v1542
        %1544 = vmatprep.mubr.f32.mxu0 0.0
        %1545 = vmatmul.mubr.f32.gmra.mrb[0].mxu0 %v1260
        %v1546 = vpop.f32.mrb[0].mxu0
        %v1547 = vadd.f32 0.0, %v1546
        %v1548 = vpop.f32.mrb[0].mxu0
        %v1549 = vadd.f32 0.0, %v1548
        %1550 = vmatprep.mubr.f32.mxu0 0.0
        %1551 = vmatmul.mubr.f32.gmra.mrb[0].mxu0 %v1263
        %v1552 = vpop.f32.mrb[0].mxu0
        %v1553 = vadd.f32 0.0, %v1552
        %v1554 = vpop.f32.mrb[0].mxu0
        %v1555 = vadd.f32 0.0, %v1554
        %1556 = vmatprep.mubr.f32.mxu0 0.0
        %1557 = vmatmul.mubr.f32.gmra.mrb[0].mxu0 %v1266
        %v1558 = vpop.f32.mrb[0].mxu0
        %v1559 = vadd.f32 0.0, %v1558
        %v1560 = vpop.f32.mrb[0].mxu0
        %v1561 = vadd.f32 0.0, %v1560
        %1562 = vmatprep.mubr.f32.mxu0 0.0
        %1563 = vmatmul.mubr.f32.gmra.mrb[0].mxu0 %v1269
        %v1564 = vpop.f32.mrb[0].mxu0
        %v1565 = vadd.f32 0.0, %v1564
        %v1566 = vpop.f32.mrb[0].mxu0
        %v1567 = vadd.f32 0.0, %v1566
        %1568 = vmatprep.mubr.f32.mxu0 0.0
        %1569 = vmatmul.mubr.f32.gmra.mrb[0].mxu0 %v1272
        %v1570 = vpop.f32.mrb[0].mxu0
        %v1571 = vadd.f32 0.0, %v1570
        %v1572 = vpop.f32.mrb[0].mxu0
        %v1573 = vadd.f32 0.0, %v1572
        %1574 = vmatprep.mubr.f32.mxu0 0.0
        %1575 = vmatmul.mubr.f32.gmra.mrb[0].mxu0 %v1275
        %v1576 = vpop.f32.mrb[0].mxu0
        %v1577 = vadd.f32 0.0, %v1576
        %v1578 = vpop.f32.mrb[0].mxu0
        %v1579 = vadd.f32 0.0, %v1578
        %1580 = vmatprep.mubr.f32.mxu0 0.0
        %1581 = vmatmul.mubr.f32.gmra.mrb[0].mxu0 %v1278
        %v1582 = vpop.f32.mrb[0].mxu0
        %v1583 = vadd.f32 0.0, %v1582
        %v1584 = vpop.f32.mrb[0].mxu0
        %v1585 = vadd.f32 0.0, %v1584
        %1586 = vmatprep.mubr.f32.mxu0 0.0
        %1587 = vmatmul.mubr.f32.gmra.mrb[0].mxu0 %v1281
        %v1588 = vpop.f32.mrb[0].mxu0
        %v1589 = vadd.f32 0.0, %v1588
        %v1590 = vpop.f32.mrb[0].mxu0
        %v1591 = vadd.f32 0.0, %v1590
        %1592 = vmatprep.mubr.f32.mxu0 0.0
        %1593 = vmatmul.mubr.f32.gmra.mrb[0].mxu0 %v1284
        %v1594 = vpop.f32.mrb[0].mxu0
        %v1595 = vadd.f32 0.0, %v1594
        %v1596 = vpop.f32.mrb[0].mxu0
        %v1597 = vadd.f32 0.0, %v1596
        %1598 = vmatprep.mubr.f32.mxu0 0.0
        %1599 = vmatmul.mubr.f32.gmra.mrb[0].mxu0 %v1287
        %v1600 = vpop.f32.mrb[0].mxu0
        %v1601 = vadd.f32 0.0, %v1600
        %v1602 = vpop.f32.mrb[0].mxu0
        %v1603 = vadd.f32 0.0, %v1602
        %1604 = vmatprep.mubr.f32.mxu0 0.0
        %1605 = vmatmul.mubr.f32.gmra.mrb[0].mxu0 %v1290
        %v1606 = vpop.f32.mrb[0].mxu0
        %v1607 = vadd.f32 0.0, %v1606
        %v1608 = vpop.f32.mrb[0].mxu0
        %v1609 = vadd.f32 0.0, %v1608
        %1610 = vmatprep.mubr.f32.mxu0 0.0
        %1611 = vmatmul.mubr.f32.gmra.mrb[0].mxu0 %v1293
        %v1612 = vpop.f32.mrb[0].mxu0
        %v1613 = vadd.f32 0.0, %v1612
        %v1614 = vpop.f32.mrb[0].mxu0
        %v1615 = vadd.f32 0.0, %v1614
        %1616 = vdwg.mxu0
        %1617 = vmatprep.subr.mxu0 %v554
        %1618 = vmatpush1.msra.mxu0 %v553
        %1619 = vmatprep.subr.mxu0 %v562
        %1620 = vmatpush1.msra.mxu0 %v561
        %1621 = vmatprep.subr.mxu0 %v570
        %1622 = vmatpush1.msra.mxu0 %v569
        %1623 = vmatprep.subr.mxu0 %v578
        %1624 = vmatpush1.msra.mxu0 %v577
        %1625 = vmatprep.subr.mxu0 0.0
        %1626 = vmatpush1.msra.mxu0 0.0
        %1627 = vmatprep.subr.mxu0 0.0
        %1628 = vmatpush1.msra.mxu0 0.0
        %1629 = vmatprep.subr.mxu0 0.0
        %1630 = vmatpush1.msra.mxu0 0.0
        %1631 = vmatprep.subr.mxu0 0.0
        %1632 = vmatpush1.msra.mxu0 0.0
        %1633 = vmatprep.subr.mxu0 0.0
        %1634 = vmatpush1.msra.mxu0 0.0
        %1635 = vmatprep.subr.mxu0 0.0
        %1636 = vmatpush1.msra.mxu0 0.0
        %1637 = vmatprep.subr.mxu0 0.0
        %1638 = vmatpush1.msra.mxu0 0.0
        %1639 = vmatprep.subr.mxu0 0.0
        %1640 = vmatpush1.msra.mxu0 0.0
        %1641 = vmatprep.subr.mxu0 0.0
        %1642 = vmatpush1.msra.mxu0 0.0
        %1643 = vmatprep.subr.mxu0 0.0
        %1644 = vmatpush1.msra.mxu0 0.0
        %1645 = vmatprep.subr.mxu0 0.0
        %1646 = vmatpush1.msra.mxu0 0.0
        %1647 = vmatprep.subr.mxu0 0.0
        %1648 = vmatpush1.msra.mxu0 0.0
        %1649 = vmatprep.subr.mxu0 0.0
        %1650 = vmatpush1.msra.mxu0 0.0
        %1651 = vmatprep.subr.mxu0 0.0
        %1652 = vmatpush1.msra.mxu0 0.0
        %1653 = vmatprep.subr.mxu0 0.0
        %1654 = vmatpush1.msra.mxu0 0.0
        %1655 = vmatprep.subr.mxu0 0.0
        %1656 = vmatpush1.msra.mxu0 0.0
        %1657 = vmatprep.subr.mxu0 0.0
        %1658 = vmatpush1.msra.mxu0 0.0
        %1659 = vmatprep.subr.mxu0 0.0
        %1660 = vmatpush1.msra.mxu0 0.0
        %1661 = vmatprep.subr.mxu0 0.0
        %1662 = vmatpush1.msra.mxu0 0.0
        %1663 = vmatprep.subr.mxu0 0.0
        %1664 = vmatpush1.msra.mxu0 0.0
        %1665 = vmatprep.subr.mxu0 0.0
        %1666 = vmatpush1.msra.mxu0 0.0
        %1667 = vmatprep.subr.mxu0 0.0
        %1668 = vmatpush1.msra.mxu0 0.0
        %1669 = vmatprep.subr.mxu0 0.0
        %1670 = vmatpush1.msra.mxu0 0.0
        %1671 = vmatprep.subr.mxu0 0.0
        %1672 = vmatpush1.msra.mxu0 0.0
        %1673 = vmatprep.subr.mxu0 0.0
        %1674 = vmatpush1.msra.mxu0 0.0
        %1675 = vmatprep.subr.mxu0 0.0
        %1676 = vmatpush1.msra.mxu0 0.0
        %1677 = vmatprep.subr.mxu0 0.0
        %1678 = vmatpush1.msra.mxu0 0.0
        %1679 = vmatprep.subr.mxu0 0.0
        %1680 = vmatpush1.msra.mxu0 0.0
        %1681 = vmatprep.mubr.f32.mxu0 0.0
        %1682 = vmatmul.mubr.f32.gmra.mrb[0].mxu0 %v1248
        %v1683 = vpop.f32.mrb[0].mxu0
        %v1684 = vadd.f32 0.0, %v1683
        %v1685 = vpop.f32.mrb[0].mxu0
        %v1686 = vadd.f32 0.0, %v1685
        %1687 = vmatprep.mubr.f32.mxu0 0.0
        %1688 = vmatmul.mubr.f32.gmra.mrb[0].mxu0 %v1251
        %v1689 = vpop.f32.mrb[0].mxu0
        %v1690 = vadd.f32 0.0, %v1689
        %v1691 = vpop.f32.mrb[0].mxu0
        %v1692 = vadd.f32 0.0, %v1691
        %1693 = vmatprep.mubr.f32.mxu0 0.0
        %1694 = vmatmul.mubr.f32.gmra.mrb[0].mxu0 %v1254
        %v1695 = vpop.f32.mrb[0].mxu0
        %v1696 = vadd.f32 0.0, %v1695
        %v1697 = vpop.f32.mrb[0].mxu0
        %v1698 = vadd.f32 0.0, %v1697
        %1699 = vmatprep.mubr.f32.mxu0 0.0
        %1700 = vmatmul.mubr.f32.gmra.mrb[0].mxu0 %v1257
        %v1701 = vpop.f32.mrb[0].mxu0
        %v1702 = vadd.f32 0.0, %v1701
        %v1703 = vpop.f32.mrb[0].mxu0
        %v1704 = vadd.f32 0.0, %v1703
        %1705 = vmatprep.mubr.f32.mxu0 0.0
        %1706 = vmatmul.mubr.f32.gmra.mrb[0].mxu0 %v1260
        %v1707 = vpop.f32.mrb[0].mxu0
        %v1708 = vadd.f32 0.0, %v1707
        %v1709 = vpop.f32.mrb[0].mxu0
        %v1710 = vadd.f32 0.0, %v1709
        %1711 = vmatprep.mubr.f32.mxu0 0.0
        %1712 = vmatmul.mubr.f32.gmra.mrb[0].mxu0 %v1263
        %v1713 = vpop.f32.mrb[0].mxu0
        %v1714 = vadd.f32 0.0, %v1713
        %v1715 = vpop.f32.mrb[0].mxu0
        %v1716 = vadd.f32 0.0, %v1715
        %1717 = vmatprep.mubr.f32.mxu0 0.0
        %1718 = vmatmul.mubr.f32.gmra.mrb[0].mxu0 %v1266
        %v1719 = vpop.f32.mrb[0].mxu0
        %v1720 = vadd.f32 0.0, %v1719
        %v1721 = vpop.f32.mrb[0].mxu0
        %v1722 = vadd.f32 0.0, %v1721
        %1723 = vmatprep.mubr.f32.mxu0 0.0
        %1724 = vmatmul.mubr.f32.gmra.mrb[0].mxu0 %v1269
        %v1725 = vpop.f32.mrb[0].mxu0
        %v1726 = vadd.f32 0.0, %v1725
        %v1727 = vpop.f32.mrb[0].mxu0
        %v1728 = vadd.f32 0.0, %v1727
        %1729 = vmatprep.mubr.f32.mxu0 0.0
        %1730 = vmatmul.mubr.f32.gmra.mrb[0].mxu0 %v1272
        %v1731 = vpop.f32.mrb[0].mxu0
        %v1732 = vadd.f32 0.0, %v1731
        %v1733 = vpop.f32.mrb[0].mxu0
        %v1734 = vadd.f32 0.0, %v1733
        %1735 = vmatprep.mubr.f32.mxu0 0.0
        %1736 = vmatmul.mubr.f32.gmra.mrb[0].mxu0 %v1275
        %v1737 = vpop.f32.mrb[0].mxu0
        %v1738 = vadd.f32 0.0, %v1737
        %v1739 = vpop.f32.mrb[0].mxu0
        %v1740 = vadd.f32 0.0, %v1739
        %1741 = vmatprep.mubr.f32.mxu0 0.0
        %1742 = vmatmul.mubr.f32.gmra.mrb[0].mxu0 %v1278
        %v1743 = vpop.f32.mrb[0].mxu0
        %v1744 = vadd.f32 0.0, %v1743
        %v1745 = vpop.f32.mrb[0].mxu0
        %v1746 = vadd.f32 0.0, %v1745
        %1747 = vmatprep.mubr.f32.mxu0 0.0
        %1748 = vmatmul.mubr.f32.gmra.mrb[0].mxu0 %v1281
        %v1749 = vpop.f32.mrb[0].mxu0
        %v1750 = vadd.f32 0.0, %v1749
        %v1751 = vpop.f32.mrb[0].mxu0
        %v1752 = vadd.f32 0.0, %v1751
        %1753 = vmatprep.mubr.f32.mxu0 0.0
        %1754 = vmatmul.mubr.f32.gmra.mrb[0].mxu0 %v1284
        %v1755 = vpop.f32.mrb[0].mxu0
        %v1756 = vadd.f32 0.0, %v1755
        %v1757 = vpop.f32.mrb[0].mxu0
        %v1758 = vadd.f32 0.0, %v1757
        %1759 = vmatprep.mubr.f32.mxu0 0.0
        %1760 = vmatmul.mubr.f32.gmra.mrb[0].mxu0 %v1287
        %v1761 = vpop.f32.mrb[0].mxu0
        %v1762 = vadd.f32 0.0, %v1761
        %v1763 = vpop.f32.mrb[0].mxu0
        %v1764 = vadd.f32 0.0, %v1763
        %1765 = vmatprep.mubr.f32.mxu0 0.0
        %1766 = vmatmul.mubr.f32.gmra.mrb[0].mxu0 %v1290
        %v1767 = vpop.f32.mrb[0].mxu0
        %v1768 = vadd.f32 0.0, %v1767
        %v1769 = vpop.f32.mrb[0].mxu0
        %v1770 = vadd.f32 0.0, %v1769
        %1771 = vmatprep.mubr.f32.mxu0 0.0
        %1772 = vmatmul.mubr.f32.gmra.mrb[0].mxu0 %v1293
        %v1773 = vpop.f32.mrb[0].mxu0
        %v1774 = vadd.f32 0.0, %v1773
        %v1775 = vpop.f32.mrb[0].mxu0
        %v1776 = vadd.f32 0.0, %v1775
        %1777 = vdwg.mxu0
        %1778 = vmatprep.subr.mxu0 %v556
        %1779 = vmatpush1.msra.mxu0 %v555
        %1780 = vmatprep.subr.mxu0 %v564
        %1781 = vmatpush1.msra.mxu0 %v563
        %1782 = vmatprep.subr.mxu0 %v572
        %1783 = vmatpush1.msra.mxu0 %v571
        %1784 = vmatprep.subr.mxu0 %v580
        %1785 = vmatpush1.msra.mxu0 %v579
        %1786 = vmatprep.subr.mxu0 0.0
        %1787 = vmatpush1.msra.mxu0 0.0
        %1788 = vmatprep.subr.mxu0 0.0
        %1789 = vmatpush1.msra.mxu0 0.0
        %1790 = vmatprep.subr.mxu0 0.0
        %1791 = vmatpush1.msra.mxu0 0.0
        %1792 = vmatprep.subr.mxu0 0.0
        %1793 = vmatpush1.msra.mxu0 0.0
        %1794 = vmatprep.subr.mxu0 0.0
        %1795 = vmatpush1.msra.mxu0 0.0
        %1796 = vmatprep.subr.mxu0 0.0
        %1797 = vmatpush1.msra.mxu0 0.0
        %1798 = vmatprep.subr.mxu0 0.0
        %1799 = vmatpush1.msra.mxu0 0.0
        %1800 = vmatprep.subr.mxu0 0.0
        %1801 = vmatpush1.msra.mxu0 0.0
        %1802 = vmatprep.subr.mxu0 0.0
        %1803 = vmatpush1.msra.mxu0 0.0
        %1804 = vmatprep.subr.mxu0 0.0
        %1805 = vmatpush1.msra.mxu0 0.0
        %1806 = vmatprep.subr.mxu0 0.0
        %1807 = vmatpush1.msra.mxu0 0.0
        %1808 = vmatprep.subr.mxu0 0.0
        %1809 = vmatpush1.msra.mxu0 0.0
        %1810 = vmatprep.subr.mxu0 0.0
        %1811 = vmatpush1.msra.mxu0 0.0
        %1812 = vmatprep.subr.mxu0 0.0
        %1813 = vmatpush1.msra.mxu0 0.0
        %1814 = vmatprep.subr.mxu0 0.0
        %1815 = vmatpush1.msra.mxu0 0.0
        %1816 = vmatprep.subr.mxu0 0.0
        %1817 = vmatpush1.msra.mxu0 0.0
        %1818 = vmatprep.subr.mxu0 0.0
        %1819 = vmatpush1.msra.mxu0 0.0
        %1820 = vmatprep.subr.mxu0 0.0
        %1821 = vmatpush1.msra.mxu0 0.0
        %1822 = vmatprep.subr.mxu0 0.0
        %1823 = vmatpush1.msra.mxu0 0.0
        %1824 = vmatprep.subr.mxu0 0.0
        %1825 = vmatpush1.msra.mxu0 0.0
        %1826 = vmatprep.subr.mxu0 0.0
        %1827 = vmatpush1.msra.mxu0 0.0
        %1828 = vmatprep.subr.mxu0 0.0
        %1829 = vmatpush1.msra.mxu0 0.0
        %1830 = vmatprep.subr.mxu0 0.0
        %1831 = vmatpush1.msra.mxu0 0.0
        %1832 = vmatprep.subr.mxu0 0.0
        %1833 = vmatpush1.msra.mxu0 0.0
        %1834 = vmatprep.subr.mxu0 0.0
        %1835 = vmatpush1.msra.mxu0 0.0
        %1836 = vmatprep.subr.mxu0 0.0
        %1837 = vmatpush1.msra.mxu0 0.0
        %1838 = vmatprep.subr.mxu0 0.0
        %1839 = vmatpush1.msra.mxu0 0.0
        %1840 = vmatprep.subr.mxu0 0.0
        %1841 = vmatpush1.msra.mxu0 0.0
        %1842 = vmatprep.mubr.f32.mxu0 0.0
        %1843 = vmatmul.mubr.f32.gmra.mrb[0].mxu0 %v1248
        %v1844 = vpop.f32.mrb[0].mxu0
        %v1845 = vadd.f32 0.0, %v1844
        %v1846 = vpop.f32.mrb[0].mxu0
        %v1847 = vadd.f32 0.0, %v1846
        %1848 = vmatprep.mubr.f32.mxu0 0.0
        %1849 = vmatmul.mubr.f32.gmra.mrb[0].mxu0 %v1251
        %v1850 = vpop.f32.mrb[0].mxu0
        %v1851 = vadd.f32 0.0, %v1850
        %v1852 = vpop.f32.mrb[0].mxu0
        %v1853 = vadd.f32 0.0, %v1852
        %1854 = vmatprep.mubr.f32.mxu0 0.0
        %1855 = vmatmul.mubr.f32.gmra.mrb[0].mxu0 %v1254
        %v1856 = vpop.f32.mrb[0].mxu0
        %v1857 = vadd.f32 0.0, %v1856
        %v1858 = vpop.f32.mrb[0].mxu0
        %v1859 = vadd.f32 0.0, %v1858
        %1860 = vmatprep.mubr.f32.mxu0 0.0
        %1861 = vmatmul.mubr.f32.gmra.mrb[0].mxu0 %v1257
        %v1862 = vpop.f32.mrb[0].mxu0
        %v1863 = vadd.f32 0.0, %v1862
        %v1864 = vpop.f32.mrb[0].mxu0
        %v1865 = vadd.f32 0.0, %v1864
        %1866 = vmatprep.mubr.f32.mxu0 0.0
        %1867 = vmatmul.mubr.f32.gmra.mrb[0].mxu0 %v1260
        %v1868 = vpop.f32.mrb[0].mxu0
        %v1869 = vadd.f32 0.0, %v1868
        %v1870 = vpop.f32.mrb[0].mxu0
        %v1871 = vadd.f32 0.0, %v1870
        %1872 = vmatprep.mubr.f32.mxu0 0.0
        %1873 = vmatmul.mubr.f32.gmra.mrb[0].mxu0 %v1263
        %v1874 = vpop.f32.mrb[0].mxu0
        %v1875 = vadd.f32 0.0, %v1874
        %v1876 = vpop.f32.mrb[0].mxu0
        %v1877 = vadd.f32 0.0, %v1876
        %1878 = vmatprep.mubr.f32.mxu0 0.0
        %1879 = vmatmul.mubr.f32.gmra.mrb[0].mxu0 %v1266
        %v1880 = vpop.f32.mrb[0].mxu0
        %v1881 = vadd.f32 0.0, %v1880
        %v1882 = vpop.f32.mrb[0].mxu0
        %v1883 = vadd.f32 0.0, %v1882
        %1884 = vmatprep.mubr.f32.mxu0 0.0
        %1885 = vmatmul.mubr.f32.gmra.mrb[0].mxu0 %v1269
        %v1886 = vpop.f32.mrb[0].mxu0
        %v1887 = vadd.f32 0.0, %v1886
        %v1888 = vpop.f32.mrb[0].mxu0
        %v1889 = vadd.f32 0.0, %v1888
        %1890 = vmatprep.mubr.f32.mxu0 0.0
        %1891 = vmatmul.mubr.f32.gmra.mrb[0].mxu0 %v1272
        %v1892 = vpop.f32.mrb[0].mxu0
        %v1893 = vadd.f32 0.0, %v1892
        %v1894 = vpop.f32.mrb[0].mxu0
        %v1895 = vadd.f32 0.0, %v1894
        %1896 = vmatprep.mubr.f32.mxu0 0.0
        %1897 = vmatmul.mubr.f32.gmra.mrb[0].mxu0 %v1275
        %v1898 = vpop.f32.mrb[0].mxu0
        %v1899 = vadd.f32 0.0, %v1898
        %v1900 = vpop.f32.mrb[0].mxu0
        %v1901 = vadd.f32 0.0, %v1900
        %1902 = vmatprep.mubr.f32.mxu0 0.0
        %1903 = vmatmul.mubr.f32.gmra.mrb[0].mxu0 %v1278
        %v1904 = vpop.f32.mrb[0].mxu0
        %v1905 = vadd.f32 0.0, %v1904
        %v1906 = vpop.f32.mrb[0].mxu0
        %v1907 = vadd.f32 0.0, %v1906
        %1908 = vmatprep.mubr.f32.mxu0 0.0
        %1909 = vmatmul.mubr.f32.gmra.mrb[0].mxu0 %v1281
        %v1910 = vpop.f32.mrb[0].mxu0
        %v1911 = vadd.f32 0.0, %v1910
        %v1912 = vpop.f32.mrb[0].mxu0
        %v1913 = vadd.f32 0.0, %v1912
        %1914 = vmatprep.mubr.f32.mxu0 0.0
        %1915 = vmatmul.mubr.f32.gmra.mrb[0].mxu0 %v1284
        %v1916 = vpop.f32.mrb[0].mxu0
        %v1917 = vadd.f32 0.0, %v1916
        %v1918 = vpop.f32.mrb[0].mxu0
        %v1919 = vadd.f32 0.0, %v1918
        %1920 = vmatprep.mubr.f32.mxu0 0.0
        %1921 = vmatmul.mubr.f32.gmra.mrb[0].mxu0 %v1287
        %v1922 = vpop.f32.mrb[0].mxu0
        %v1923 = vadd.f32 0.0, %v1922
        %v1924 = vpop.f32.mrb[0].mxu0
        %v1925 = vadd.f32 0.0, %v1924
        %1926 = vmatprep.mubr.f32.mxu0 0.0
        %1927 = vmatmul.mubr.f32.gmra.mrb[0].mxu0 %v1290
        %v1928 = vpop.f32.mrb[0].mxu0
        %v1929 = vadd.f32 0.0, %v1928
        %v1930 = vpop.f32.mrb[0].mxu0
        %v1931 = vadd.f32 0.0, %v1930
        %1932 = vmatprep.mubr.f32.mxu0 0.0
        %1933 = vmatmul.mubr.f32.gmra.mrb[0].mxu0 %v1293
        %v1934 = vpop.f32.mrb[0].mxu0
        %v1935 = vadd.f32 0.0, %v1934
        %v1936 = vpop.f32.mrb[0].mxu0
        %v1937 = vadd.f32 0.0, %v1936
        %1938 = vdwg.mxu0
        %v1939 = vld [vmem:[%s6] sm:$0xf]
        %v1940 = vmul.f32 %v1362, %v1102
        %v1941 = vmul.f32 %v1364, %v1103
        %v1942 = vmul.f32 %v1523, %v1104
        %v1943 = vmul.f32 %v1525, %v1105
        %v1944 = vmul.f32 %v1684, %v1106
        %v1945 = vmul.f32 %v1686, %v1107
        %v1946 = vmul.f32 %v1845, %v1108
        %v1947 = vmul.f32 %v1847, %v1109
        %v1948 = vmul.f32 %v1368, %v1110
        %v1949 = vmul.f32 %v1370, %v1111
        %v1950 = vmul.f32 %v1529, %v1112
        %v1951 = vmul.f32 %v1531, %v1113
        %v1952 = vmul.f32 %v1690, %v1114
        %v1953 = vmul.f32 %v1692, %v1115
        %v1954 = vmul.f32 %v1851, %v1116
        %v1955 = vmul.f32 %v1853, %v1117
        %v1956 = vmul.f32 %v1374, %v1118
        %v1957 = vmul.f32 %v1376, %v1119
        %v1958 = vmul.f32 %v1535, %v1120
        %v1959 = vmul.f32 %v1537, %v1121
        %v1960 = vmul.f32 %v1696, %v1122
        %v1961 = vmul.f32 %v1698, %v1123
        %v1962 = vmul.f32 %v1857, %v1124
        %v1963 = vmul.f32 %v1859, %v1125
        %v1964 = vmul.f32 %v1380, %v1126
        %v1965 = vmul.f32 %v1382, %v1127
        %v1966 = vmul.f32 %v1541, %v1128
        %v1967 = vmul.f32 %v1543, %v1129
        %v1968 = vmul.f32 %v1702, %v1130
        %v1969 = vmul.f32 %v1704, %v1131
        %v1970 = vmul.f32 %v1863, %v1132
        %v1971 = vmul.f32 %v1865, %v1133
        %v1972 = vmul.f32 %v1386, %v1134
        %v1973 = vmul.f32 %v1388, %v1135
        %v1974 = vmul.f32 %v1547, %v1136
        %v1975 = vmul.f32 %v1549, %v1137
        %v1976 = vmul.f32 %v1708, %v1138
        %v1977 = vmul.f32 %v1710, %v1139
        %v1978 = vmul.f32 %v1869, %v1140
        %v1979 = vmul.f32 %v1871, %v1141
        %v1980 = vmul.f32 %v1392, %v1142
        %v1981 = vmul.f32 %v1394, %v1143
        %v1982 = vmul.f32 %v1553, %v1144
        %v1983 = vmul.f32 %v1555, %v1145
        %v1984 = vmul.f32 %v1714, %v1146
        %v1985 = vmul.f32 %v1716, %v1147
        %v1986 = vmul.f32 %v1875, %v1148
        %v1987 = vmul.f32 %v1877, %v1149
        %v1988 = vmul.f32 %v1398, %v1150
        %v1989 = vmul.f32 %v1400, %v1151
        %v1990 = vmul.f32 %v1559, %v1152
        %v1991 = vmul.f32 %v1561, %v1153
        %v1992 = vmul.f32 %v1720, %v1154
        %v1993 = vmul.f32 %v1722, %v1155
        %v1994 = vmul.f32 %v1881, %v1156
        %v1995 = vmul.f32 %v1883, %v1157
        %v1996 = vmul.f32 %v1404, %v1158
        %v1997 = vmul.f32 %v1406, %v1159
        %v1998 = vmul.f32 %v1565, %v1160
        %v1999 = vmul.f32 %v1567, %v1161
        %v2000 = vmul.f32 %v1726, %v1162
        %v2001 = vmul.f32 %v1728, %v1163
        %v2002 = vmul.f32 %v1887, %v1164
        %v2003 = vmul.f32 %v1889, %v1165
        %v2004 = vmul.f32 %v1410, %v1166
        %v2005 = vmul.f32 %v1412, %v1167
        %v2006 = vmul.f32 %v1571, %v1168
        %v2007 = vmul.f32 %v1573, %v1169
        %v2008 = vmul.f32 %v1732, %v1170
        %v2009 = vmul.f32 %v1734, %v1171
        %v2010 = vmul.f32 %v1893, %v1172
        %v2011 = vmul.f32 %v1895, %v1173
        %v2012 = vmul.f32 %v1416, %v1174
        %v2013 = vmul.f32 %v1418, %v1175
        %v2014 = vmul.f32 %v1577, %v1176
        %v2015 = vmul.f32 %v1579, %v1177
        %v2016 = vmul.f32 %v1738, %v1178
        %v2017 = vmul.f32 %v1740, %v1179
        %v2018 = vmul.f32 %v1899, %v1180
        %v2019 = vmul.f32 %v1901, %v1181
        %v2020 = vmul.f32 %v1422, %v1182
        %v2021 = vmul.f32 %v1424, %v1183
        %v2022 = vmul.f32 %v1583, %v1184
        %v2023 = vmul.f32 %v1585, %v1185
        %v2024 = vmul.f32 %v1744, %v1186
        %v2025 = vmul.f32 %v1746, %v1187
        %v2026 = vmul.f32 %v1905, %v1188
        %v2027 = vmul.f32 %v1907, %v1189
        %v2028 = vmul.f32 %v1428, %v1190
        %v2029 = vmul.f32 %v1430, %v1191
        %v2030 = vmul.f32 %v1589, %v1192
        %v2031 = vmul.f32 %v1591, %v1193
        %v2032 = vmul.f32 %v1750, %v1194
        %v2033 = vmul.f32 %v1752, %v1195
        %v2034 = vmul.f32 %v1911, %v1196
        %v2035 = vmul.f32 %v1913, %v1197
        %v2036 = vmul.f32 %v1434, %v1198
        %v2037 = vmul.f32 %v1436, %v1199
        %v2038 = vmul.f32 %v1595, %v1200
        %v2039 = vmul.f32 %v1597, %v1201
        %v2040 = vmul.f32 %v1756, %v1202
        %v2041 = vmul.f32 %v1758, %v1203
        %v2042 = vmul.f32 %v1917, %v1204
        %v2043 = vmul.f32 %v1919, %v1205
        %v2044 = vmul.f32 %v1440, %v1206
        %v2045 = vmul.f32 %v1442, %v1207
        %v2046 = vmul.f32 %v1601, %v1208
        %v2047 = vmul.f32 %v1603, %v1209
        %v2048 = vmul.f32 %v1762, %v1210
        %v2049 = vmul.f32 %v1764, %v1211
        %v2050 = vmul.f32 %v1923, %v1212
        %v2051 = vmul.f32 %v1925, %v1213
        %v2052 = vmul.f32 %v1446, %v1214
        %v2053 = vmul.f32 %v1448, %v1215
        %v2054 = vmul.f32 %v1607, %v1216
        %v2055 = vmul.f32 %v1609, %v1217
        %v2056 = vmul.f32 %v1768, %v1218
        %v2057 = vmul.f32 %v1770, %v1219
        %v2058 = vmul.f32 %v1929, %v1220
        %v2059 = vmul.f32 %v1931, %v1221
        %v2060 = vmul.f32 %v1452, %v1222
        %v2061 = vmul.f32 %v1454, %v1223
        %v2062 = vmul.f32 %v1613, %v1224
        %v2063 = vmul.f32 %v1615, %v1225
        %v2064 = vmul.f32 %v1774, %v1226
        %v2065 = vmul.f32 %v1776, %v1227
        %v2066 = vmul.f32 %v1935, %v1228
        %v2067 = vmul.f32 %v1937, %v1229
        %2068 = vmatprep.subr.mxu0 %v1941
        %2069 = vmatpush1.msra.mxu0 %v1940
        %2070 = vmatprep.subr.mxu0 %v1949
        %2071 = vmatpush1.msra.mxu0 %v1948
        %2072 = vmatprep.subr.mxu0 %v1957
        %2073 = vmatpush1.msra.mxu0 %v1956
        %2074 = vmatprep.subr.mxu0 %v1965
        %2075 = vmatpush1.msra.mxu0 %v1964
        %2076 = vmatprep.subr.mxu0 %v1973
        %2077 = vmatpush1.msra.mxu0 %v1972
        %2078 = vmatprep.subr.mxu0 %v1981
        %2079 = vmatpush1.msra.mxu0 %v1980
        %2080 = vmatprep.subr.mxu0 %v1989
        %2081 = vmatpush1.msra.mxu0 %v1988
        %2082 = vmatprep.subr.mxu0 %v1997
        %2083 = vmatpush1.msra.mxu0 %v1996
        %2084 = vmatprep.subr.mxu0 %v2005
        %2085 = vmatpush1.msra.mxu0 %v2004
        %2086 = vmatprep.subr.mxu0 %v2013
        %2087 = vmatpush1.msra.mxu0 %v2012
        %2088 = vmatprep.subr.mxu0 %v2021
        %2089 = vmatpush1.msra.mxu0 %v2020
        %2090 = vmatprep.subr.mxu0 %v2029
        %2091 = vmatpush1.msra.mxu0 %v2028
        %2092 = vmatprep.subr.mxu0 %v2037
        %2093 = vmatpush1.msra.mxu0 %v2036
        %2094 = vmatprep.subr.mxu0 %v2045
        %2095 = vmatpush1.msra.mxu0 %v2044
        %2096 = vmatprep.subr.mxu0 %v2053
        %2097 = vmatpush1.msra.mxu0 %v2052
        %2098 = vmatprep.subr.mxu0 %v2061
        %2099 = vmatpush1.msra.mxu0 %v2060
        %2100 = vmatprep.subr.mxu0 0.0
        %2101 = vmatpush1.msra.mxu0 0.0
        %2102 = vmatprep.subr.mxu0 0.0
        %2103 = vmatpush1.msra.mxu0 0.0
        %2104 = vmatprep.subr.mxu0 0.0
        %2105 = vmatpush1.msra.mxu0 0.0
        %2106 = vmatprep.subr.mxu0 0.0
        %2107 = vmatpush1.msra.mxu0 0.0
        %2108 = vmatprep.subr.mxu0 0.0
        %2109 = vmatpush1.msra.mxu0 0.0
        %2110 = vmatprep.subr.mxu0 0.0
        %2111 = vmatpush1.msra.mxu0 0.0
        %2112 = vmatprep.subr.mxu0 0.0
        %2113 = vmatpush1.msra.mxu0 0.0
        %2114 = vmatprep.subr.mxu0 0.0
        %2115 = vmatpush1.msra.mxu0 0.0
        %2116 = vmatprep.subr.mxu0 0.0
        %2117 = vmatpush1.msra.mxu0 0.0
        %2118 = vmatprep.subr.mxu0 0.0
        %2119 = vmatpush1.msra.mxu0 0.0
        %2120 = vmatprep.subr.mxu0 0.0
        %2121 = vmatpush1.msra.mxu0 0.0
        %2122 = vmatprep.subr.mxu0 0.0
        %2123 = vmatpush1.msra.mxu0 0.0
        %2124 = vmatprep.subr.mxu0 0.0
        %2125 = vmatpush1.msra.mxu0 0.0
        %2126 = vmatprep.subr.mxu0 0.0
        %2127 = vmatpush1.msra.mxu0 0.0
        %2128 = vmatprep.subr.mxu0 0.0
        %2129 = vmatpush1.msra.mxu0 0.0
        %2130 = vmatprep.subr.mxu0 0.0
        %2131 = vmatpush1.msra.mxu0 0.0
        %2132 = vmatprep.mubr.f32.mxu0 0.0
        %2133 = vmatmul.mubr.f32.gmra.mrb[0].mxu0 %v1939
        %v2134 = vpop.f32.mrb[0].mxu0
        %v2135 = vadd.f32 0.0, %v2134
        %v2136 = vpop.f32.mrb[0].mxu0
        %v2137 = vadd.f32 0.0, %v2136
        %2138 = vdwg.mxu0
        %2139 = vmatprep.subr.mxu0 %v1943
        %2140 = vmatpush1.msra.mxu0 %v1942
        %2141 = vmatprep.subr.mxu0 %v1951
        %2142 = vmatpush1.msra.mxu0 %v1950
        %2143 = vmatprep.subr.mxu0 %v1959
        %2144 = vmatpush1.msra.mxu0 %v1958
        %2145 = vmatprep.subr.mxu0 %v1967
        %2146 = vmatpush1.msra.mxu0 %v1966
        %2147 = vmatprep.subr.mxu0 %v1975
        %2148 = vmatpush1.msra.mxu0 %v1974
        %2149 = vmatprep.subr.mxu0 %v1983
        %2150 = vmatpush1.msra.mxu0 %v1982
        %2151 = vmatprep.subr.mxu0 %v1991
        %2152 = vmatpush1.msra.mxu0 %v1990
        %2153 = vmatprep.subr.mxu0 %v1999
        %2154 = vmatpush1.msra.mxu0 %v1998
        %2155 = vmatprep.subr.mxu0 %v2007
        %2156 = vmatpush1.msra.mxu0 %v2006
        %2157 = vmatprep.subr.mxu0 %v2015
        %2158 = vmatpush1.msra.mxu0 %v2014
        %2159 = vmatprep.subr.mxu0 %v2023
        %2160 = vmatpush1.msra.mxu0 %v2022
        %2161 = vmatprep.subr.mxu0 %v2031
        %2162 = vmatpush1.msra.mxu0 %v2030
        %2163 = vmatprep.subr.mxu0 %v2039
        %2164 = vmatpush1.msra.mxu0 %v2038
        %2165 = vmatprep.subr.mxu0 %v2047
        %2166 = vmatpush1.msra.mxu0 %v2046
        %2167 = vmatprep.subr.mxu0 %v2055
        %2168 = vmatpush1.msra.mxu0 %v2054
        %2169 = vmatprep.subr.mxu0 %v2063
        %2170 = vmatpush1.msra.mxu0 %v2062
        %2171 = vmatprep.subr.mxu0 0.0
        %2172 = vmatpush1.msra.mxu0 0.0
        %2173 = vmatprep.subr.mxu0 0.0
        %2174 = vmatpush1.msra.mxu0 0.0
        %2175 = vmatprep.subr.mxu0 0.0
        %2176 = vmatpush1.msra.mxu0 0.0
        %2177 = vmatprep.subr.mxu0 0.0
        %2178 = vmatpush1.msra.mxu0 0.0
        %2179 = vmatprep.subr.mxu0 0.0
        %2180 = vmatpush1.msra.mxu0 0.0
        %2181 = vmatprep.subr.mxu0 0.0
        %2182 = vmatpush1.msra.mxu0 0.0
        %2183 = vmatprep.subr.mxu0 0.0
        %2184 = vmatpush1.msra.mxu0 0.0
        %2185 = vmatprep.subr.mxu0 0.0
        %2186 = vmatpush1.msra.mxu0 0.0
        %2187 = vmatprep.subr.mxu0 0.0
        %2188 = vmatpush1.msra.mxu0 0.0
        %2189 = vmatprep.subr.mxu0 0.0
        %2190 = vmatpush1.msra.mxu0 0.0
        %2191 = vmatprep.subr.mxu0 0.0
        %2192 = vmatpush1.msra.mxu0 0.0
        %2193 = vmatprep.subr.mxu0 0.0
        %2194 = vmatpush1.msra.mxu0 0.0
        %2195 = vmatprep.subr.mxu0 0.0
        %2196 = vmatpush1.msra.mxu0 0.0
        %2197 = vmatprep.subr.mxu0 0.0
        %2198 = vmatpush1.msra.mxu0 0.0
        %2199 = vmatprep.subr.mxu0 0.0
        %2200 = vmatpush1.msra.mxu0 0.0
        %2201 = vmatprep.subr.mxu0 0.0
        %2202 = vmatpush1.msra.mxu0 0.0
        %2203 = vmatprep.mubr.f32.mxu0 0.0
        %2204 = vmatmul.mubr.f32.gmra.mrb[0].mxu0 %v1939
        %v2205 = vpop.f32.mrb[0].mxu0
        %v2206 = vadd.f32 0.0, %v2205
        %v2207 = vpop.f32.mrb[0].mxu0
        %v2208 = vadd.f32 0.0, %v2207
        %2209 = vdwg.mxu0
        %2210 = vmatprep.subr.mxu0 %v1945
        %2211 = vmatpush1.msra.mxu0 %v1944
        %2212 = vmatprep.subr.mxu0 %v1953
        %2213 = vmatpush1.msra.mxu0 %v1952
        %2214 = vmatprep.subr.mxu0 %v1961
        %2215 = vmatpush1.msra.mxu0 %v1960
        %2216 = vmatprep.subr.mxu0 %v1969
        %2217 = vmatpush1.msra.mxu0 %v1968
        %2218 = vmatprep.subr.mxu0 %v1977
        %2219 = vmatpush1.msra.mxu0 %v1976
        %2220 = vmatprep.subr.mxu0 %v1985
        %2221 = vmatpush1.msra.mxu0 %v1984
        %2222 = vmatprep.subr.mxu0 %v1993
        %2223 = vmatpush1.msra.mxu0 %v1992
        %2224 = vmatprep.subr.mxu0 %v2001
        %2225 = vmatpush1.msra.mxu0 %v2000
        %2226 = vmatprep.subr.mxu0 %v2009
        %2227 = vmatpush1.msra.mxu0 %v2008
        %2228 = vmatprep.subr.mxu0 %v2017
        %2229 = vmatpush1.msra.mxu0 %v2016
        %2230 = vmatprep.subr.mxu0 %v2025
        %2231 = vmatpush1.msra.mxu0 %v2024
        %2232 = vmatprep.subr.mxu0 %v2033
        %2233 = vmatpush1.msra.mxu0 %v2032
        %2234 = vmatprep.subr.mxu0 %v2041
        %2235 = vmatpush1.msra.mxu0 %v2040
        %2236 = vmatprep.subr.mxu0 %v2049
        %2237 = vmatpush1.msra.mxu0 %v2048
        %2238 = vmatprep.subr.mxu0 %v2057
        %2239 = vmatpush1.msra.mxu0 %v2056
        %2240 = vmatprep.subr.mxu0 %v2065
        %2241 = vmatpush1.msra.mxu0 %v2064
        %2242 = vmatprep.subr.mxu0 0.0
        %2243 = vmatpush1.msra.mxu0 0.0
        %2244 = vmatprep.subr.mxu0 0.0
        %2245 = vmatpush1.msra.mxu0 0.0
        %2246 = vmatprep.subr.mxu0 0.0
        %2247 = vmatpush1.msra.mxu0 0.0
        %2248 = vmatprep.subr.mxu0 0.0
        %2249 = vmatpush1.msra.mxu0 0.0
        %2250 = vmatprep.subr.mxu0 0.0
        %2251 = vmatpush1.msra.mxu0 0.0
        %2252 = vmatprep.subr.mxu0 0.0
        %2253 = vmatpush1.msra.mxu0 0.0
        %2254 = vmatprep.subr.mxu0 0.0
        %2255 = vmatpush1.msra.mxu0 0.0
        %2256 = vmatprep.subr.mxu0 0.0
        %2257 = vmatpush1.msra.mxu0 0.0
        %2258 = vmatprep.subr.mxu0 0.0
        %2259 = vmatpush1.msra.mxu0 0.0
        %2260 = vmatprep.subr.mxu0 0.0
        %2261 = vmatpush1.msra.mxu0 0.0
        %2262 = vmatprep.subr.mxu0 0.0
        %2263 = vmatpush1.msra.mxu0 0.0
        %2264 = vmatprep.subr.mxu0 0.0
        %2265 = vmatpush1.msra.mxu0 0.0
        %2266 = vmatprep.subr.mxu0 0.0
        %2267 = vmatpush1.msra.mxu0 0.0
        %2268 = vmatprep.subr.mxu0 0.0
        %2269 = vmatpush1.msra.mxu0 0.0
        %2270 = vmatprep.subr.mxu0 0.0
        %2271 = vmatpush1.msra.mxu0 0.0
        %2272 = vmatprep.subr.mxu0 0.0
        %2273 = vmatpush1.msra.mxu0 0.0
        %2274 = vmatprep.mubr.f32.mxu0 0.0
        %2275 = vmatmul.mubr.f32.gmra.mrb[0].mxu0 %v1939
        %v2276 = vpop.f32.mrb[0].mxu0
        %v2277 = vadd.f32 0.0, %v2276
        %v2278 = vpop.f32.mrb[0].mxu0
        %v2279 = vadd.f32 0.0, %v2278
        %2280 = vdwg.mxu0
        %2281 = vmatprep.subr.mxu0 %v1947
        %2282 = vmatpush1.msra.mxu0 %v1946
        %2283 = vmatprep.subr.mxu0 %v1955
        %2284 = vmatpush1.msra.mxu0 %v1954
        %2285 = vmatprep.subr.mxu0 %v1963
        %2286 = vmatpush1.msra.mxu0 %v1962
        %2287 = vmatprep.subr.mxu0 %v1971
        %2288 = vmatpush1.msra.mxu0 %v1970
        %2289 = vmatprep.subr.mxu0 %v1979
        %2290 = vmatpush1.msra.mxu0 %v1978
        %2291 = vmatprep.subr.mxu0 %v1987
        %2292 = vmatpush1.msra.mxu0 %v1986
        %2293 = vmatprep.subr.mxu0 %v1995
        %2294 = vmatpush1.msra.mxu0 %v1994
        %2295 = vmatprep.subr.mxu0 %v2003
        %2296 = vmatpush1.msra.mxu0 %v2002
        %2297 = vmatprep.subr.mxu0 %v2011
        %2298 = vmatpush1.msra.mxu0 %v2010
        %2299 = vmatprep.subr.mxu0 %v2019
        %2300 = vmatpush1.msra.mxu0 %v2018
        %2301 = vmatprep.subr.mxu0 %v2027
        %2302 = vmatpush1.msra.mxu0 %v2026
        %2303 = vmatprep.subr.mxu0 %v2035
        %2304 = vmatpush1.msra.mxu0 %v2034
        %2305 = vmatprep.subr.mxu0 %v2043
        %2306 = vmatpush1.msra.mxu0 %v2042
        %2307 = vmatprep.subr.mxu0 %v2051
        %2308 = vmatpush1.msra.mxu0 %v2050
        %2309 = vmatprep.subr.mxu0 %v2059
        %2310 = vmatpush1.msra.mxu0 %v2058
        %2311 = vmatprep.subr.mxu0 %v2067
        %2312 = vmatpush1.msra.mxu0 %v2066
        %2313 = vmatprep.subr.mxu0 0.0
        %2314 = vmatpush1.msra.mxu0 0.0
        %2315 = vmatprep.subr.mxu0 0.0
        %2316 = vmatpush1.msra.mxu0 0.0
        %2317 = vmatprep.subr.mxu0 0.0
        %2318 = vmatpush1.msra.mxu0 0.0
        %2319 = vmatprep.subr.mxu0 0.0
        %2320 = vmatpush1.msra.mxu0 0.0
        %2321 = vmatprep.subr.mxu0 0.0
        %2322 = vmatpush1.msra.mxu0 0.0
        %2323 = vmatprep.subr.mxu0 0.0
        %2324 = vmatpush1.msra.mxu0 0.0
        %2325 = vmatprep.subr.mxu0 0.0
        %2326 = vmatpush1.msra.mxu0 0.0
        %2327 = vmatprep.subr.mxu0 0.0
        %2328 = vmatpush1.msra.mxu0 0.0
        %2329 = vmatprep.subr.mxu0 0.0
        %2330 = vmatpush1.msra.mxu0 0.0
        %2331 = vmatprep.subr.mxu0 0.0
        %2332 = vmatpush1.msra.mxu0 0.0
        %2333 = vmatprep.subr.mxu0 0.0
        %2334 = vmatpush1.msra.mxu0 0.0
        %2335 = vmatprep.subr.mxu0 0.0
        %2336 = vmatpush1.msra.mxu0 0.0
        %2337 = vmatprep.subr.mxu0 0.0
        %2338 = vmatpush1.msra.mxu0 0.0
        %2339 = vmatprep.subr.mxu0 0.0
        %2340 = vmatpush1.msra.mxu0 0.0
        %2341 = vmatprep.subr.mxu0 0.0
        %2342 = vmatpush1.msra.mxu0 0.0
        %2343 = vmatprep.subr.mxu0 0.0
        %2344 = vmatpush1.msra.mxu0 0.0
        %2345 = vmatprep.mubr.f32.mxu0 0.0
        %2346 = vmatmul.mubr.f32.gmra.mrb[0].mxu0 %v1939
        %v2347 = vpop.f32.mrb[0].mxu0
        %v2348 = vadd.f32 0.0, %v2347
        %v2349 = vpop.f32.mrb[0].mxu0
        %v2350 = vadd.f32 0.0, %v2349
        %2351 = vdwg.mxu0
        %v2360 = vcombine.low %v2135, %v2137
        %v2361 = vcombine.low %v2206, %v2208
        %v2362 = vcombine.low %v2277, %v2279
        %v2363 = vcombine.low %v2348, %v2350
        %2368 = vst [vmem:[%s352] sm:$0xff] %v2360
        %2369 = vst [vmem:[%s352 + $0x8] sm:$0xff] %v2361
        %2370 = vst [vmem:[%s352 + $0x10] sm:$0xff] %v2362
        %2371 = vst [vmem:[%s352 + $0x18] sm:$0xff] %v2363
        %s2372 = smul.u32 8, %s24
        %p2373 = scmp.lt.s32.totalorder %s23, 1
        %s2374 = scalar_select %p2373, %s23, 1
        %p2375 = scmp.lt.s32.totalorder %s2372, 7
        %s2376 = scalar_select %p2375, %s2372, 7
        %s2377 = smul.addr %s2374, 8
        %s2378 = sadd.s32 %s2376, %s2377
        %s2379 = smul.addr %s2378, 4
        %s2380 = scalar_lea.vmem %s7, %s2379
        // Predicated region
        $region53: #{stn_forward.3} parent=47 // pred_check
          %p2381 = pneg %p213
        $region54: #{stn_forward.3} parent=47 // pred_check_branch
          %2383 = sbr.rel (%p2381) target = $region56
        $region55: #{stn_forward.3} parent=47 // pred_region
          %s2384 = smul.u32 8, %s24
        $region56: #{stn_forward.3} parent=47 // pred_fallthru
          _
      $region48: #{stn_forward.3} parent=5 // pred_fallthru
        _
      %p2385 = scmp.le.s32.totalorder 2, %s14
      // Predicated region
      $region57: #{stn_forward.3} parent=5 // pred_check
        %p2386 = pneg %p2385
      $region58: #{stn_forward.3} parent=5 // pred_check_branch
        %2388 = sbr.rel (%p2386) target = $region60
      $region59: #{stn_forward.3} parent=5 // pred_region
        %s2389 = ssub.s32 %s14, 2
        // Predicated region
        $region61: #{stn_forward.3} parent=59 // pred_check
          %p2390 = pneg %p219
        $region62: #{stn_forward.3} parent=59 // pred_check_branch
          %2392 = sbr.rel (%p2390) target = $region64
        $region63: #{stn_forward.3} parent=59 // pred_region
          %s2393 = smul.u32 8, %s26
          %p2394 = scmp.lt.s32.totalorder %s25, 1
          %s2395 = scalar_select %p2394, %s25, 1
          %p2396 = scmp.lt.s32.totalorder %s2393, 7
          %s2397 = scalar_select %p2396, %s2393, 7
          %s2398 = smul.addr %s2395, 8
          %s2399 = sadd.s32 %s2397, %s2398
          %s2400 = smul.addr %s2399, 4
          %s2401 = scalar_lea.vmem %s7, %s2400
        $region64: #{stn_forward.3} parent=59 // pred_fallthru
          _
      $region60: #{stn_forward.3} parent=5 // pred_fallthru
        _
    $region6: #{stn_forward.3} parent=1 // loop_footer
      %s18 = sadd.s32 1, %s14
    $region7: #{stn_forward.3} parent=1 // loop_footer_branch
      %13 = sbr.rel target = $region3
    $region8: #{stn_forward.3} parent=1 // loop_exit
      _
    %2402 = vsyncpa [#allocation3], 1
    %s2403 = scalar_lea.sflag [#allocation3], 1
    %2404 = vsyncpa %s2403, 1

// kernel: stn_forward.2
$region0: #{stn_forward.2}
  #allocation0 [shape = 'u32[]', space=smem, size = 0x4, offset = 0x4, fixed_abs, tag = 'smem constant byte address 0x4 - core index']
  #allocation1 [shape = 'u32[144,128]{1,0:T(1,128)}', space=vmem, size = 0x12000, scoped, tag = 'internal scratch']
  #allocation2 [shape = 'f32[200,117]{1,0:T(8,128)}', space=vmem, size = 0x19000, scoped, tag = 'scratch operand']
  %s0 = inlined_call_operand.vmem [shape: f32[2,196,676], index: 0, kind: input, shape index: {}]
  %s1 = inlined_call_operand.vmem [shape: f32[8,196], index: 1, kind: input, shape index: {}]
  %s2 = inlined_call_operand.vmem [shape: f32[8,1], index: 2, kind: input, shape index: {}]
  %s3 = inlined_call_operand.vmem [shape: f32[649,173], index: 3, kind: input, shape index: {}]
  %s4 = inlined_call_operand.vmem [shape: f32[10,200], index: 4, kind: input, shape index: {}]
  %s5 = inlined_call_operand.vmem [shape: f32[10,1], index: 5, kind: input, shape index: {}]
  %s6 = inlined_call_operand.vmem [shape: f32[103,16], index: 6, kind: input, shape index: {}]
  %s7 = inlined_call_operand.vmem [shape: f32[16,320], index: 7, kind: input, shape index: {}]
  %s8 = inlined_call_operand.vmem [shape: f32[10,320], index: 8, kind: input, shape index: {}]
  %s9 = inlined_call_operand.vmem [shape: f32[320,32], index: 9, kind: input, shape index: {}]
  %s10 = inlined_call_operand.vmem [shape: f32[1,32], index: 10, kind: input, shape index: {}]
  %s11 = inlined_call_operand.vmem [shape: f32[32,6], index: 11, kind: input, shape index: {}]
  %s12 = inlined_call_operand.vmem [shape: f32[1,6], index: 12, kind: input, shape index: {}]
  %s13 = inlined_call_operand.vmem [shape: f32[2,1,6], index: 13, kind: output, shape index: {}]
  %s14 = sld [smem:[#allocation0]]
  $region85: #{stn_forward.2} parent=0
    _
  %s16 = ssub.s32 1, %s14
  %s17 = scalar_select 0, %s16, %s14
  loop: start=0, step=1, limit=4
  $region2: #{stn_forward.2} parent=0 // loop_pre_header
    _
  $region3: #{stn_forward.2} parent=0 // loop_header
    %s19 = sphi 0, %s23
    %p20 = scmp.ge.s32.totalorder %s19, 4
    %s29 = sphi 0, %s31
    %s32 = sphi 0, %s29
    %s33 = sphi 0, %s32
    %s49 = sphi 0, %s33
    %s53 = sphi 0, %s53
    %s55 = sphi 0, %s53
    %s56 = sphi 0, %s55
    %s70 = sphi 0, %s56
    %s74 = sphi 0, %s74
    %s76 = sphi 0, %s74
    %s77 = sphi 0, %s76
    %s91 = sphi 0, %s77
    %s95 = sphi 0, %s95
    %s97 = sphi 0, %s95
    %s98 = sphi 0, %s97
    %s112 = sphi 0, %s98
    %s116 = sphi 0, %s116
    %s118 = sphi 0, %s116
    %s119 = sphi 0, %s118
    %s133 = sphi 0, %s119
    %s137 = sphi 0, %s137
    %s139 = sphi 0, %s137
    %s140 = sphi 0, %s139
    %s154 = sphi 0, %s140
    %s158 = sphi 0, %s158
    %s160 = sphi 0, %s158
    %s161 = sphi 0, %s160
    %s175 = sphi 0, %s161
    %s179 = sphi 0, %s179
    %s181 = sphi 0, %s179
    %s182 = sphi 0, %s181
    %s196 = sphi 0, %s182
    %s200 = sphi 0, %s200
    %s202 = sphi 0, %s200
    %s203 = sphi 0, %s202
    %s217 = sphi 0, %s203
    %s221 = sphi 0, %s221
    %s223 = sphi 0, %s221
    %s224 = sphi 0, %s223
    %s238 = sphi 0, %s224
    %s242 = sphi 0, %s242
    %s244 = sphi 0, %s242
    %s245 = sphi 0, %s244
    %s259 = sphi 0, %s245
    %s263 = sphi 0, %s263
    %s265 = sphi 0, %s263
    %s266 = sphi 0, %s265
    %s280 = sphi 0, %s266
    %s284 = sphi 0, %s284
    %s286 = sphi 0, %s284
    %s287 = sphi 0, %s286
    %s301 = sphi 0, %s287
    %s307 = sphi 0, %s309
    %s310 = sphi 0, %s307
    %s311 = sphi 0, %s310
    %s327 = sphi 0, %s311
  $region4: #{stn_forward.2} parent=0 // loop_header_branch
    %22 = sbr.rel (%p20) target = $region8
  $region5: #{stn_forward.2} parent=0 // loop_body
    %s24 = ssub.s32 %s19, 1
    %s25 = ssub.s32 %s19, 2
    %s26 = sadd.s32 %s19, 1
    %s27 = ssub.s32 %s19, %s26
    %p28 = scmp.eq.s32.totalorder %s27, 0
    %s30 = sadd.s32 %s29, 1
    %s31 = scalar_select %p28, %s29, %s30
    %p34 = pneg %p28
    %p35 = scmp.eq.s32.totalorder %s19, 1
    %p36 = por %p34, %p35
    %p37 = scmp.ne.s32.totalorder %s29, %s32
    %p38 = scmp.eq.s32.totalorder %s19, 0
    %p39 = por %p37, %p38
    %p40 = scmp.ne.s32.totalorder %s29, %s32
    %p41 = scmp.eq.s32.totalorder %s24, 1
    %p42 = por %p40, %p41
    %p43 = scmp.ne.s32.totalorder %s32, %s33
    %p44 = scmp.eq.s32.totalorder %s24, 0
    %p45 = por %p43, %p44
    %p46 = scmp.ne.s32.totalorder %s32, %s33
    %p47 = scmp.eq.s32.totalorder %s25, 1
    %p48 = por %p46, %p47
    %p50 = scmp.ne.s32.totalorder %s33, %s49
    %p51 = scmp.eq.s32.totalorder %s25, 0
    %p52 = por %p50, %p51
    %s54 = sadd.s32 %s53, 1
    %p57 = scmp.eq.s32.totalorder %s19, 1
    %p58 = scmp.ne.s32.totalorder %s53, %s55
    %p59 = scmp.eq.s32.totalorder %s19, 0
    %p60 = por %p58, %p59
    %p61 = scmp.ne.s32.totalorder %s53, %s55
    %p62 = scmp.eq.s32.totalorder %s24, 1
    %p63 = por %p61, %p62
    %p64 = scmp.ne.s32.totalorder %s55, %s56
    %p65 = scmp.eq.s32.totalorder %s24, 0
    %p66 = por %p64, %p65
    %p67 = scmp.ne.s32.totalorder %s55, %s56
    %p68 = scmp.eq.s32.totalorder %s25, 1
    %p69 = por %p67, %p68
    %p71 = scmp.ne.s32.totalorder %s56, %s70
    %p72 = scmp.eq.s32.totalorder %s25, 0
    %p73 = por %p71, %p72
    %s75 = sadd.s32 %s74, 1
    %p78 = scmp.eq.s32.totalorder %s19, 1
    %p79 = scmp.ne.s32.totalorder %s74, %s76
    %p80 = scmp.eq.s32.totalorder %s19, 0
    %p81 = por %p79, %p80
    %p82 = scmp.ne.s32.totalorder %s74, %s76
    %p83 = scmp.eq.s32.totalorder %s24, 1
    %p84 = por %p82, %p83
    %p85 = scmp.ne.s32.totalorder %s76, %s77
    %p86 = scmp.eq.s32.totalorder %s24, 0
    %p87 = por %p85, %p86
    %p88 = scmp.ne.s32.totalorder %s76, %s77
    %p89 = scmp.eq.s32.totalorder %s25, 1
    %p90 = por %p88, %p89
    %p92 = scmp.ne.s32.totalorder %s77, %s91
    %p93 = scmp.eq.s32.totalorder %s25, 0
    %p94 = por %p92, %p93
    %s96 = sadd.s32 %s95, 1
    %p99 = scmp.eq.s32.totalorder %s19, 1
    %p100 = scmp.ne.s32.totalorder %s95, %s97
    %p101 = scmp.eq.s32.totalorder %s19, 0
    %p102 = por %p100, %p101
    %p103 = scmp.ne.s32.totalorder %s95, %s97
    %p104 = scmp.eq.s32.totalorder %s24, 1
    %p105 = por %p103, %p104
    %p106 = scmp.ne.s32.totalorder %s97, %s98
    %p107 = scmp.eq.s32.totalorder %s24, 0
    %p108 = por %p106, %p107
    %p109 = scmp.ne.s32.totalorder %s97, %s98
    %p110 = scmp.eq.s32.totalorder %s25, 1
    %p111 = por %p109, %p110
    %p113 = scmp.ne.s32.totalorder %s98, %s112
    %p114 = scmp.eq.s32.totalorder %s25, 0
    %p115 = por %p113, %p114
    %s117 = sadd.s32 %s116, 1
    %p120 = scmp.eq.s32.totalorder %s19, 1
    %p121 = scmp.ne.s32.totalorder %s116, %s118
    %p122 = scmp.eq.s32.totalorder %s19, 0
    %p123 = por %p121, %p122
    %p124 = scmp.ne.s32.totalorder %s116, %s118
    %p125 = scmp.eq.s32.totalorder %s24, 1
    %p126 = por %p124, %p125
    %p127 = scmp.ne.s32.totalorder %s118, %s119
    %p128 = scmp.eq.s32.totalorder %s24, 0
    %p129 = por %p127, %p128
    %p130 = scmp.ne.s32.totalorder %s118, %s119
    %p131 = scmp.eq.s32.totalorder %s25, 1
    %p132 = por %p130, %p131
    %p134 = scmp.ne.s32.totalorder %s119, %s133
    %p135 = scmp.eq.s32.totalorder %s25, 0
    %p136 = por %p134, %p135
    %s138 = sadd.s32 %s137, 1
    %p141 = scmp.eq.s32.totalorder %s19, 1
    %p142 = scmp.ne.s32.totalorder %s137, %s139
    %p143 = scmp.eq.s32.totalorder %s19, 0
    %p144 = por %p142, %p143
    %p145 = scmp.ne.s32.totalorder %s137, %s139
    %p146 = scmp.eq.s32.totalorder %s24, 1
    %p147 = por %p145, %p146
    %p148 = scmp.ne.s32.totalorder %s139, %s140
    %p149 = scmp.eq.s32.totalorder %s24, 0
    %p150 = por %p148, %p149
    %p151 = scmp.ne.s32.totalorder %s139, %s140
    %p152 = scmp.eq.s32.totalorder %s25, 1
    %p153 = por %p151, %p152
    %p155 = scmp.ne.s32.totalorder %s140, %s154
    %p156 = scmp.eq.s32.totalorder %s25, 0
    %p157 = por %p155, %p156
    %s159 = sadd.s32 %s158, 1
    %p162 = scmp.eq.s32.totalorder %s19, 1
    %p163 = scmp.ne.s32.totalorder %s158, %s160
    %p164 = scmp.eq.s32.totalorder %s19, 0
    %p165 = por %p163, %p164
    %p166 = scmp.ne.s32.totalorder %s158, %s160
    %p167 = scmp.eq.s32.totalorder %s24, 1
    %p168 = por %p166, %p167
    %p169 = scmp.ne.s32.totalorder %s160, %s161
    %p170 = scmp.eq.s32.totalorder %s24, 0
    %p171 = por %p169, %p170
    %p172 = scmp.ne.s32.totalorder %s160, %s161
    %p173 = scmp.eq.s32.totalorder %s25, 1
    %p174 = por %p172, %p173
    %p176 = scmp.ne.s32.totalorder %s161, %s175
    %p177 = scmp.eq.s32.totalorder %s25, 0
    %p178 = por %p176, %p177
    %s180 = sadd.s32 %s179, 1
    %p183 = scmp.eq.s32.totalorder %s19, 1
    %p184 = scmp.ne.s32.totalorder %s179, %s181
    %p185 = scmp.eq.s32.totalorder %s19, 0
    %p186 = por %p184, %p185
    %p187 = scmp.ne.s32.totalorder %s179, %s181
    %p188 = scmp.eq.s32.totalorder %s24, 1
    %p189 = por %p187, %p188
    %p190 = scmp.ne.s32.totalorder %s181, %s182
    %p191 = scmp.eq.s32.totalorder %s24, 0
    %p192 = por %p190, %p191
    %p193 = scmp.ne.s32.totalorder %s181, %s182
    %p194 = scmp.eq.s32.totalorder %s25, 1
    %p195 = por %p193, %p194
    %p197 = scmp.ne.s32.totalorder %s182, %s196
    %p198 = scmp.eq.s32.totalorder %s25, 0
    %p199 = por %p197, %p198
    %s201 = sadd.s32 %s200, 1
    %p204 = scmp.eq.s32.totalorder %s19, 1
    %p205 = scmp.ne.s32.totalorder %s200, %s202
    %p206 = scmp.eq.s32.totalorder %s19, 0
    %p207 = por %p205, %p206
    %p208 = scmp.ne.s32.totalorder %s200, %s202
    %p209 = scmp.eq.s32.totalorder %s24, 1
    %p210 = por %p208, %p209
    %p211 = scmp.ne.s32.totalorder %s202, %s203
    %p212 = scmp.eq.s32.totalorder %s24, 0
    %p213 = por %p211, %p212
    %p214 = scmp.ne.s32.totalorder %s202, %s203
    %p215 = scmp.eq.s32.totalorder %s25, 1
    %p216 = por %p214, %p215
    %p218 = scmp.ne.s32.totalorder %s203, %s217
    %p219 = scmp.eq.s32.totalorder %s25, 0
    %p220 = por %p218, %p219
    %s222 = sadd.s32 %s221, 1
    %p225 = scmp.eq.s32.totalorder %s19, 1
    %p226 = scmp.ne.s32.totalorder %s221, %s223
    %p227 = scmp.eq.s32.totalorder %s19, 0
    %p228 = por %p226, %p227
    %p229 = scmp.ne.s32.totalorder %s221, %s223
    %p230 = scmp.eq.s32.totalorder %s24, 1
    %p231 = por %p229, %p230
    %p232 = scmp.ne.s32.totalorder %s223, %s224
    %p233 = scmp.eq.s32.totalorder %s24, 0
    %p234 = por %p232, %p233
    %p235 = scmp.ne.s32.totalorder %s223, %s224
    %p236 = scmp.eq.s32.totalorder %s25, 1
    %p237 = por %p235, %p236
    %p239 = scmp.ne.s32.totalorder %s224, %s238
    %p240 = scmp.eq.s32.totalorder %s25, 0
    %p241 = por %p239, %p240
    %s243 = sadd.s32 %s242, 1
    %p246 = scmp.eq.s32.totalorder %s19, 1
    %p247 = scmp.ne.s32.totalorder %s242, %s244
    %p248 = scmp.eq.s32.totalorder %s19, 0
    %p249 = por %p247, %p248
    %p250 = scmp.ne.s32.totalorder %s242, %s244
    %p251 = scmp.eq.s32.totalorder %s24, 1
    %p252 = por %p250, %p251
    %p253 = scmp.ne.s32.totalorder %s244, %s245
    %p254 = scmp.eq.s32.totalorder %s24, 0
    %p255 = por %p253, %p254
    %p256 = scmp.ne.s32.totalorder %s244, %s245
    %p257 = scmp.eq.s32.totalorder %s25, 1
    %p258 = por %p256, %p257
    %p260 = scmp.ne.s32.totalorder %s245, %s259
    %p261 = scmp.eq.s32.totalorder %s25, 0
    %p262 = por %p260, %p261
    %s264 = sadd.s32 %s263, 1
    %p267 = scmp.eq.s32.totalorder %s19, 1
    %p268 = scmp.ne.s32.totalorder %s263, %s265
    %p269 = scmp.eq.s32.totalorder %s19, 0
    %p270 = por %p268, %p269
    %p271 = scmp.ne.s32.totalorder %s263, %s265
    %p272 = scmp.eq.s32.totalorder %s24, 1
    %p273 = por %p271, %p272
    %p274 = scmp.ne.s32.totalorder %s265, %s266
    %p275 = scmp.eq.s32.totalorder %s24, 0
    %p276 = por %p274, %p275
    %p277 = scmp.ne.s32.totalorder %s265, %s266
    %p278 = scmp.eq.s32.totalorder %s25, 1
    %p279 = por %p277, %p278
    %p281 = scmp.ne.s32.totalorder %s266, %s280
    %p282 = scmp.eq.s32.totalorder %s25, 0
    %p283 = por %p281, %p282
    %s285 = sadd.s32 %s284, 1
    %p288 = scmp.eq.s32.totalorder %s19, 1
    %p289 = scmp.ne.s32.totalorder %s284, %s286
    %p290 = scmp.eq.s32.totalorder %s19, 0
    %p291 = por %p289, %p290
    %p292 = scmp.ne.s32.totalorder %s284, %s286
    %p293 = scmp.eq.s32.totalorder %s24, 1
    %p294 = por %p292, %p293
    %p295 = scmp.ne.s32.totalorder %s286, %s287
    %p296 = scmp.eq.s32.totalorder %s24, 0
    %p297 = por %p295, %p296
    %p298 = scmp.ne.s32.totalorder %s286, %s287
    %p299 = scmp.eq.s32.totalorder %s25, 1
    %p300 = por %p298, %p299
    %p302 = scmp.ne.s32.totalorder %s287, %s301
    %p303 = scmp.eq.s32.totalorder %s25, 0
    %p304 = por %p302, %p303
    %s305 = ssub.s32 %s19, %s26
    %p306 = scmp.eq.s32.totalorder %s305, 0
    %s308 = sadd.s32 %s307, 1
    %s309 = scalar_select %p306, %s307, %s308
    %p312 = pneg %p306
    %p313 = scmp.eq.s32.totalorder %s19, 1
    %p314 = por %p312, %p313
    %p315 = scmp.ne.s32.totalorder %s307, %s310
    %p316 = scmp.eq.s32.totalorder %s19, 0
    %p317 = por %p315, %p316
    %p318 = scmp.ne.s32.totalorder %s307, %s310
    %p319 = scmp.eq.s32.totalorder %s24, 1
    %p320 = por %p318, %p319
    %p321 = scmp.ne.s32.totalorder %s310, %s311
    %p322 = scmp.eq.s32.totalorder %s24, 0
    %p323 = por %p321, %p322
    %p324 = scmp.ne.s32.totalorder %s310, %s311
    %p325 = scmp.eq.s32.totalorder %s25, 1
    %p326 = por %p324, %p325
    %p328 = scmp.ne.s32.totalorder %s311, %s327
    %p329 = scmp.eq.s32.totalorder %s25, 0
    %p330 = por %p328, %p329
    %p331 = scmp.le.s32.totalorder 1, %s19
    %p332 = scmp.lt.s32.totalorder %s19, 3
    %p333 = pnand %p331, %p332
    %p334 = pneg %p333
    // Predicated region
    $region9: #{stn_forward.2} parent=5 // pred_check
      _
    $region10: #{stn_forward.2} parent=5 // pred_check_branch
      %336 = sbr.rel (%p333) target = $region12
    $region11: #{stn_forward.2} parent=5 // pred_region
      %s337 = ssub.s32 %s19, 1
      // Predicated region
      $region13: #{stn_forward.2} parent=11 // pred_check
        %p338 = pneg %p66
      $region14: #{stn_forward.2} parent=11 // pred_check_branch
        %340 = sbr.rel (%p338) target = $region16
      $region15: #{stn_forward.2} parent=11 // pred_region
        _
      $region16: #{stn_forward.2} parent=11 // pred_fallthru
        _
      // Predicated region
      $region17: #{stn_forward.2} parent=11 // pred_check
        %p341 = pneg %p87
      $region18: #{stn_forward.2} parent=11 // pred_check_branch
        %343 = sbr.rel (%p341) target = $region20
      $region19: #{stn_forward.2} parent=11 // pred_region
        _
      $region20: #{stn_forward.2} parent=11 // pred_fallthru
        _
      // Predicated region
      $region21: #{stn_forward.2} parent=11 // pred_check
        %p344 = pneg %p108
      $region22: #{stn_forward.2} parent=11 // pred_check_branch
        %346 = sbr.rel (%p344) target = $region24
      $region23: #{stn_forward.2} parent=11 // pred_region
        _
      $region24: #{stn_forward.2} parent=11 // pred_fallthru
        _
      // Predicated region
      $region25: #{stn_forward.2} parent=11 // pred_check
        %p347 = pneg %p129
      $region26: #{stn_forward.2} parent=11 // pred_check_branch
        %349 = sbr.rel (%p347) target = $region28
      $region27: #{stn_forward.2} parent=11 // pred_region
        _
      $region28: #{stn_forward.2} parent=11 // pred_fallthru
        _
      // Predicated region
      $region29: #{stn_forward.2} parent=11 // pred_check
        %p350 = pneg %p150
      $region30: #{stn_forward.2} parent=11 // pred_check_branch
        %352 = sbr.rel (%p350) target = $region32
      $region31: #{stn_forward.2} parent=11 // pred_region
        _
      $region32: #{stn_forward.2} parent=11 // pred_fallthru
        _
      // Predicated region
      $region33: #{stn_forward.2} parent=11 // pred_check
        %p353 = pneg %p171
      $region34: #{stn_forward.2} parent=11 // pred_check_branch
        %355 = sbr.rel (%p353) target = $region36
      $region35: #{stn_forward.2} parent=11 // pred_region
        _
      $region36: #{stn_forward.2} parent=11 // pred_fallthru
        _
      // Predicated region
      $region37: #{stn_forward.2} parent=11 // pred_check
        %p356 = pneg %p192
      $region38: #{stn_forward.2} parent=11 // pred_check_branch
        %358 = sbr.rel (%p356) target = $region40
      $region39: #{stn_forward.2} parent=11 // pred_region
        _
      $region40: #{stn_forward.2} parent=11 // pred_fallthru
        _
      // Predicated region
      $region41: #{stn_forward.2} parent=11 // pred_check
        %p359 = pneg %p213
      $region42: #{stn_forward.2} parent=11 // pred_check_branch
        %361 = sbr.rel (%p359) target = $region44
      $region43: #{stn_forward.2} parent=11 // pred_region
        _
      $region44: #{stn_forward.2} parent=11 // pred_fallthru
        _
      // Predicated region
      $region45: #{stn_forward.2} parent=11 // pred_check
        %p362 = pneg %p234
      $region46: #{stn_forward.2} parent=11 // pred_check_branch
        %364 = sbr.rel (%p362) target = $region48
      $region47: #{stn_forward.2} parent=11 // pred_region
        _
      $region48: #{stn_forward.2} parent=11 // pred_fallthru
        _
      // Predicated region
      $region49: #{stn_forward.2} parent=11 // pred_check
        %p365 = pneg %p255
      $region50: #{stn_forward.2} parent=11 // pred_check_branch
        %367 = sbr.rel (%p365) target = $region52
      $region51: #{stn_forward.2} parent=11 // pred_region
        _
      $region52: #{stn_forward.2} parent=11 // pred_fallthru
        _
      // Predicated region
      $region53: #{stn_forward.2} parent=11 // pred_check
        %p368 = pneg %p276
      $region54: #{stn_forward.2} parent=11 // pred_check_branch
        %370 = sbr.rel (%p368) target = $region56
      $region55: #{stn_forward.2} parent=11 // pred_region
        _
      $region56: #{stn_forward.2} parent=11 // pred_fallthru
        _
      // Predicated region
      $region57: #{stn_forward.2} parent=11 // pred_check
        %p371 = pneg %p297
      $region58: #{stn_forward.2} parent=11 // pred_check_branch
        %373 = sbr.rel (%p371) target = $region60
      $region59: #{stn_forward.2} parent=11 // pred_region
        _
      $region60: #{stn_forward.2} parent=11 // pred_fallthru
        _
    $region12: #{stn_forward.2} parent=5 // pred_fallthru
      _
    %p374 = scmp.lt.s32.totalorder %s19, 2
    // Predicated region
    $region61: #{stn_forward.2} parent=5 // pred_check
      %p375 = pneg %p374
    $region62: #{stn_forward.2} parent=5 // pred_check_branch
      %377 = sbr.rel (%p375) target = $region64
    $region63: #{stn_forward.2} parent=5 // pred_region
      // Predicated region
      $region65: #{stn_forward.2} parent=63 // pred_check
        %p378 = pneg %p39
      $region66: #{stn_forward.2} parent=63 // pred_check_branch
        %380 = sbr.rel (%p378) target = $region68
      $region67: #{stn_forward.2} parent=63 // pred_region
        %p381 = scmp.lt.s32.totalorder %s19, 1
        %s382 = scalar_select %p381, %s19, 1
        %s383 = smul.addr %s382, 150
        %s384 = smul.addr %s383, 8
        %s385 = scalar_lea.vmem %s0, %s384
      $region68: #{stn_forward.2} parent=63 // pred_fallthru
        _
    $region64: #{stn_forward.2} parent=5 // pred_fallthru
      _
    %p386 = scmp.le.s32.totalorder 1, %s19
    %p387 = scmp.lt.s32.totalorder %s19, 3
    %p388 = pnand %p386, %p387
    %p389 = pneg %p388
    // Predicated region
    $region69: #{stn_forward.2} parent=5 // pred_check
      _
    $region70: #{stn_forward.2} parent=5 // pred_check_branch
      %391 = sbr.rel (%p388) target = $region72
    $region71: #{stn_forward.2} parent=5 // pred_region
      %s392 = ssub.s32 %s19, 1
      %p393 = scmp.lt.s32.totalorder %s24, 1
      %s394 = scalar_select %p393, %s24, 1
      %s395 = smul.addr %s394, 150
      %s396 = smul.addr %s395, 8
      %s397 = scalar_lea.vmem %s0, %s396
      %p398 = pneg %p45
      %p399 = pneg %p42
      %p400 = pneg %p66
      %p401 = pneg %p63
      %p402 = pneg %p87
      %p403 = pneg %p84
      %p404 = pneg %p108
      %p405 = pneg %p105
      %p406 = pneg %p129
      %p407 = pneg %p126
      %p408 = pneg %p150
      %p409 = pneg %p147
      %p410 = pneg %p171
      %p411 = pneg %p168
      %p412 = pneg %p192
      %p413 = pneg %p189
      %p414 = pneg %p213
      %p415 = pneg %p210
      %p416 = pneg %p234
      %p417 = pneg %p231
      %p418 = pneg %p255
      %p419 = pneg %p252
      %p420 = pneg %p276
      %p421 = pneg %p273
      %p422 = pneg %p297
      %p423 = pneg %p294
      %p424 = pneg %p323
      %p425 = pneg %p320
      %p426 = scmp.lt.s32.totalorder %s24, 1
      %s427 = scalar_select %p426, %s24, 1
      %s428 = scalar_lea.vmem %s13, %s427
      %p429 = scmp.lt.s32.totalorder %s24, 1
      %s430 = scalar_select %p429, %s24, 1
      %s431 = smul.addr %s430, 150
      %s432 = smul.addr %s431, 8
      %s433 = scalar_lea.vmem %s0, %s432
      %p434 = scmp.lt.s32.totalorder %s24, 1
      %s435 = scalar_select %p434, %s24, 1
      %s436 = scalar_lea.vmem %s13, %s435
      %v437 = vld [vmem:[%s1] sm:$0xff]
      %v438 = vld [vmem:[%s1 + $0x8] sm:$0xff]
      %v439 = vld [vmem:[%s433] sm:$0xff]
      %v440 = vld [vmem:[%s433 + $0x8] sm:$0xff]
      %v441 = vld [vmem:[%s433 + $0x10] sm:$0xff]
      %v442 = vld [vmem:[%s433 + $0x18] sm:$0xff]
      %v443 = vld [vmem:[%s433 + $0x20] sm:$0xff]
      %v444 = vld [vmem:[%s433 + $0x28] sm:$0xff]
      %v445 = vld [vmem:[%s433 + $0x30] sm:$0xff]
      %v446 = vld [vmem:[%s433 + $0x38] sm:$0xff]
      %v447 = vld [vmem:[%s433 + $0x40] sm:$0xff]
      %v448 = vld [vmem:[%s433 + $0x48] sm:$0xff]
      %v449 = vld [vmem:[%s433 + $0x50] sm:$0xff]
      %v450 = vld [vmem:[%s433 + $0x58] sm:$0xff]
      %v451 = vld [vmem:[%s433 + $0x60] sm:$0xff]
      %v452 = vld [vmem:[%s433 + $0x68] sm:$0xff]
      %v453 = vld [vmem:[%s433 + $0x70] sm:$0xff]
      %v454 = vld [vmem:[%s433 + $0x78] sm:$0xff]
      %v455 = vld [vmem:[%s433 + $0x80] sm:$0xff]
      %v456 = vld [vmem:[%s433 + $0x88] sm:$0xff]
      %v457 = vld [vmem:[%s433 + $0x90] sm:$0xff]
      %v458 = vld [vmem:[%s433 + $0x98] sm:$0xff]
      %v459 = vld [vmem:[%s433 + $0xa0] sm:$0xff]
      %v460 = vld [vmem:[%s433 + $0xa8] sm:$0xff]
      %v461 = vld [vmem:[%s433 + $0xb0] sm:$0xff]
      %v462 = vld [vmem:[%s433 + $0xb8] sm:$0xff]
      %v463 = vld [vmem:[%s433 + $0xc0] sm:$0xff]
      %v464 = vld [vmem:[%s433 + $0xc8] sm:$0xff]
      %v465 = vld [vmem:[%s433 + $0xd0] sm:$0xff]
      %v466 = vld [vmem:[%s433 + $0xd8] sm:$0xff]
      %v467 = vld [vmem:[%s433 + $0xe0] sm:$0xff]
      %v468 = vld [vmem:[%s433 + $0xe8] sm:$0xff]
      %v469 = vld [vmem:[%s433 + $0xf0] sm:$0xff]
      %v470 = vld [vmem:[%s433 + $0xf8] sm:$0xff]
      %v471 = vld [vmem:[%s433 + $0x100] sm:$0xff]
      %v472 = vld [vmem:[%s433 + $0x108] sm:$0xff]
      %v473 = vld [vmem:[%s433 + $0x110] sm:$0xff]
      %v474 = vld [vmem:[%s433 + $0x118] sm:$0xff]
      %v475 = vld [vmem:[%s433 + $0x120] sm:$0xff]
      %v476 = vld [vmem:[%s433 + $0x128] sm:$0xff]
      %v477 = vld [vmem:[%s433 + $0x130] sm:$0xff]
      %v478 = vld [vmem:[%s433 + $0x138] sm:$0xff]
      %v479 = vld [vmem:[%s433 + $0x140] sm:$0xff]
      %v480 = vld [vmem:[%s433 + $0x148] sm:$0xff]
      %v481 = vld [vmem:[%s433 + $0x150] sm:$0xff]
      %v482 = vld [vmem:[%s433 + $0x158] sm:$0xff]
      %v483 = vld [vmem:[%s433 + $0x160] sm:$0xff]
      %v484 = vld [vmem:[%s433 + $0x168] sm:$0xff]
      %v485 = vld [vmem:[%s433 + $0x170] sm:$0xff]
      %v486 = vld [vmem:[%s433 + $0x178] sm:$0xff]
      %v487 = vld [vmem:[%s433 + $0x180] sm:$0xff]
      %v488 = vld [vmem:[%s433 + $0x188] sm:$0xff]
      %v489 = vld [vmem:[%s433 + $0x190] sm:$0xff]
      %v490 = vld [vmem:[%s433 + $0x198] sm:$0xff]
      %v491 = vld [vmem:[%s433 + $0x1a0] sm:$0xff]
      %v492 = vld [vmem:[%s433 + $0x1a8] sm:$0xff]
      %v493 = vld [vmem:[%s433 + $0x1b0] sm:$0xff]
      %v494 = vld [vmem:[%s433 + $0x1b8] sm:$0xff]
      %v495 = vld [vmem:[%s433 + $0x1c0] sm:$0xff]
      %v496 = vld [vmem:[%s433 + $0x1c8] sm:$0xff]
      %v497 = vld [vmem:[%s433 + $0x1d0] sm:$0xff]
      %v498 = vld [vmem:[%s433 + $0x1d8] sm:$0xff]
      %v499 = vld [vmem:[%s433 + $0x1e0] sm:$0xff]
      %v500 = vld [vmem:[%s433 + $0x1e8] sm:$0xff]
      %v501 = vld [vmem:[%s433 + $0x1f0] sm:$0xff]
      %v502 = vld [vmem:[%s433 + $0x1f8] sm:$0xff]
      %v503 = vld [vmem:[%s433 + $0x200] sm:$0xff]
      %v504 = vld [vmem:[%s433 + $0x208] sm:$0xff]
      %v505 = vld [vmem:[%s433 + $0x210] sm:$0xff]
      %v506 = vld [vmem:[%s433 + $0x218] sm:$0xff]
      %v507 = vld [vmem:[%s433 + $0x220] sm:$0xff]
      %v508 = vld [vmem:[%s433 + $0x228] sm:$0xff]
      %v509 = vld [vmem:[%s433 + $0x230] sm:$0xff]
      %v510 = vld [vmem:[%s433 + $0x238] sm:$0xff]
      %v511 = vld [vmem:[%s433 + $0x240] sm:$0xff]
      %v512 = vld [vmem:[%s433 + $0x248] sm:$0xff]
      %v513 = vld [vmem:[%s433 + $0x250] sm:$0xff]
      %v514 = vld [vmem:[%s433 + $0x258] sm:$0xff]
      %v515 = vld [vmem:[%s433 + $0x260] sm:$0xff]
      %v516 = vld [vmem:[%s433 + $0x268] sm:$0xff]
      %v517 = vld [vmem:[%s433 + $0x270] sm:$0xff]
      %v518 = vld [vmem:[%s433 + $0x278] sm:$0xff]
      %v519 = vld [vmem:[%s433 + $0x280] sm:$0xff]
      %v520 = vld [vmem:[%s433 + $0x288] sm:$0xff]
      %v521 = vld [vmem:[%s433 + $0x290] sm:$0xff]
      %v522 = vld [vmem:[%s433 + $0x298] sm:$0xff]
      %v523 = vld [vmem:[%s433 + $0x2a0] sm:$0xff]
      %v524 = vld [vmem:[%s433 + $0x2a8] sm:$0xff]
      %v525 = vld [vmem:[%s433 + $0x2b0] sm:$0xff]
      %v526 = vld [vmem:[%s433 + $0x2b8] sm:$0xff]
      %v527 = vld [vmem:[%s433 + $0x2c0] sm:$0xff]
      %v528 = vld [vmem:[%s433 + $0x2c8] sm:$0xff]
      %v529 = vld [vmem:[%s433 + $0x2d0] sm:$0xff]
      %v530 = vld [vmem:[%s433 + $0x2d8] sm:$0xff]
      %v531 = vld [vmem:[%s433 + $0x2e0] sm:$0xff]
      %v532 = vld [vmem:[%s433 + $0x2e8] sm:$0xff]
      %v533 = vld [vmem:[%s433 + $0x2f0] sm:$0xff]
      %v534 = vld [vmem:[%s433 + $0x2f8] sm:$0xff]
      %v535 = vld [vmem:[%s433 + $0x300] sm:$0xff]
      %v536 = vld [vmem:[%s433 + $0x308] sm:$0xff]
      %v537 = vld [vmem:[%s433 + $0x310] sm:$0xff]
      %v538 = vld [vmem:[%s433 + $0x318] sm:$0xff]
      %v539 = vld [vmem:[%s433 + $0x320] sm:$0xff]
      %v540 = vld [vmem:[%s433 + $0x328] sm:$0xff]
      %v541 = vld [vmem:[%s433 + $0x330] sm:$0xff]
      %v542 = vld [vmem:[%s433 + $0x338] sm:$0xff]
      %v543 = vld [vmem:[%s433 + $0x340] sm:$0xff]
      %v544 = vld [vmem:[%s433 + $0x348] sm:$0xff]
      %v545 = vld [vmem:[%s433 + $0x350] sm:$0xff]
      %v546 = vld [vmem:[%s433 + $0x358] sm:$0xff]
      %v547 = vld [vmem:[%s433 + $0x360] sm:$0xff]
      %v548 = vld [vmem:[%s433 + $0x368] sm:$0xff]
      %v549 = vld [vmem:[%s433 + $0x370] sm:$0xff]
      %v550 = vld [vmem:[%s433 + $0x378] sm:$0xff]
      %v551 = vld [vmem:[%s433 + $0x380] sm:$0xff]
      %v552 = vld [vmem:[%s433 + $0x388] sm:$0xff]
      %v553 = vld [vmem:[%s433 + $0x390] sm:$0xff]
      %v554 = vld [vmem:[%s433 + $0x398] sm:$0xff]
      %v555 = vld [vmem:[%s433 + $0x3a0] sm:$0xff]
      %v556 = vld [vmem:[%s433 + $0x3a8] sm:$0xff]
      %v557 = vld [vmem:[%s433 + $0x3b0] sm:$0xff]
      %v558 = vld [vmem:[%s433 + $0x3b8] sm:$0xff]
      %v559 = vld [vmem:[%s433 + $0x3c0] sm:$0xff]
      %v560 = vld [vmem:[%s433 + $0x3c8] sm:$0xff]
      %v561 = vld [vmem:[%s433 + $0x3d0] sm:$0xff]
      %v562 = vld [vmem:[%s433 + $0x3d8] sm:$0xff]
      %v563 = vld [vmem:[%s433 + $0x3e0] sm:$0xff]
      %v564 = vld [vmem:[%s433 + $0x3e8] sm:$0xff]
      %v565 = vld [vmem:[%s433 + $0x3f0] sm:$0xff]
      %v566 = vld [vmem:[%s433 + $0x3f8] sm:$0xff]
      %v567 = vld [vmem:[%s433 + $0x400] sm:$0xff]
      %v568 = vld [vmem:[%s433 + $0x408] sm:$0xff]
      %v569 = vld [vmem:[%s433 + $0x410] sm:$0xff]
      %v570 = vld [vmem:[%s433 + $0x418] sm:$0xff]
      %v571 = vld [vmem:[%s433 + $0x420] sm:$0xff]
      %v572 = vld [vmem:[%s433 + $0x428] sm:$0xff]
      %v573 = vld [vmem:[%s433 + $0x430] sm:$0xff]
      %v574 = vld [vmem:[%s433 + $0x438] sm:$0xff]
      %v575 = vld [vmem:[%s433 + $0x440] sm:$0xff]
      %v576 = vld [vmem:[%s433 + $0x448] sm:$0xff]
      %v577 = vld [vmem:[%s433 + $0x450] sm:$0xff]
      %v578 = vld [vmem:[%s433 + $0x458] sm:$0xff]
      %v579 = vld [vmem:[%s433 + $0x460] sm:$0xff]
      %v580 = vld [vmem:[%s433 + $0x468] sm:$0xff]
      %v581 = vld [vmem:[%s433 + $0x470] sm:$0xff]
      %v582 = vld [vmem:[%s433 + $0x478] sm:$0xff]
      %v583 = vld [vmem:[%s433 + $0x480] sm:$0xf]
      %v584 = vld [vmem:[%s433 + $0x488] sm:$0xf]
      %v585 = vld [vmem:[%s433 + $0x490] sm:$0xf]
      %v586 = vld [vmem:[%s433 + $0x498] sm:$0xf]
      %v587 = vld [vmem:[%s433 + $0x4a0] sm:$0xf]
      %v588 = vld [vmem:[%s433 + $0x4a8] sm:$0xf]
      %v589 = vld [vmem:[%s2] sm:$0xff]
      %591 = vset.pattern.permute.xlu0 0
      %592 = vperm.xlu0 %591, %v589
      %v593 = vpop.permute.xlu0 %592
      %vm595 = vcmask 556032
      %v597 = vsel %vm595, %v438, 0
      %vm599 = vcmask 1043456
      %v601 = vsel %vm599, %v583, 0
      %v604 = vsel %vm599, %v584, 0
      %v607 = vsel %vm599, %v585, 0
      %v610 = vsel %vm599, %v586, 0
      %v613 = vsel %vm599, %v587, 0
      %v616 = vsel %vm599, %v588, 0
      %618 = vmatprep.subr.mxu0 %v440
      %619 = vmatpush1.msra.mxu0 %v439
      %620 = vmatprep.subr.mxu0 %v446
      %621 = vmatpush1.msra.mxu0 %v445
      %622 = vmatprep.subr.mxu0 %v452
      %623 = vmatpush1.msra.mxu0 %v451
      %624 = vmatprep.subr.mxu0 %v458
      %625 = vmatpush1.msra.mxu0 %v457
      %626 = vmatprep.subr.mxu0 %v464
      %627 = vmatpush1.msra.mxu0 %v463
      %628 = vmatprep.subr.mxu0 %v470
      %629 = vmatpush1.msra.mxu0 %v469
      %630 = vmatprep.subr.mxu0 %v476
      %631 = vmatpush1.msra.mxu0 %v475
      %632 = vmatprep.subr.mxu0 %v482
      %633 = vmatpush1.msra.mxu0 %v481
      %634 = vmatprep.subr.mxu0 %v488
      %635 = vmatpush1.msra.mxu0 %v487
      %636 = vmatprep.subr.mxu0 %v494
      %637 = vmatpush1.msra.mxu0 %v493
      %638 = vmatprep.subr.mxu0 %v500
      %639 = vmatpush1.msra.mxu0 %v499
      %640 = vmatprep.subr.mxu0 %v506
      %641 = vmatpush1.msra.mxu0 %v505
      %642 = vmatprep.subr.mxu0 %v512
      %643 = vmatpush1.msra.mxu0 %v511
      %644 = vmatprep.subr.mxu0 %v518
      %645 = vmatpush1.msra.mxu0 %v517
      %646 = vmatprep.subr.mxu0 %v524
      %647 = vmatpush1.msra.mxu0 %v523
      %648 = vmatprep.subr.mxu0 %v530
      %649 = vmatpush1.msra.mxu0 %v529
      %650 = vmatprep.subr.mxu0 %v536
      %651 = vmatpush1.msra.mxu0 %v535
      %652 = vmatprep.subr.mxu0 %v542
      %653 = vmatpush1.msra.mxu0 %v541
      %654 = vmatprep.subr.mxu0 %v548
      %655 = vmatpush1.msra.mxu0 %v547
      %656 = vmatprep.subr.mxu0 %v554
      %657 = vmatpush1.msra.mxu0 %v553
      %658 = vmatprep.subr.mxu0 %v560
      %659 = vmatpush1.msra.mxu0 %v559
      %660 = vmatprep.subr.mxu0 %v566
      %661 = vmatpush1.msra.mxu0 %v565
      %662 = vmatprep.subr.mxu0 %v572
      %663 = vmatpush1.msra.mxu0 %v571
      %664 = vmatprep.subr.mxu0 %v578
      %665 = vmatpush1.msra.mxu0 %v577
      %666 = vmatprep.subr.mxu0 %v604
      %667 = vmatpush1.msra.mxu0 %v601
      %668 = vmatprep.subr.mxu0 0.0
      %669 = vmatpush1.msra.mxu0 0.0
      %670 = vmatprep.subr.mxu0 0.0
      %671 = vmatpush1.msra.mxu0 0.0
      %672 = vmatprep.subr.mxu0 0.0
      %673 = vmatpush1.msra.mxu0 0.0
      %674 = vmatprep.subr.mxu0 0.0
      %675 = vmatpush1.msra.mxu0 0.0
      %676 = vmatprep.subr.mxu0 0.0
      %677 = vmatpush1.msra.mxu0 0.0
      %678 = vmatprep.subr.mxu0 0.0
      %679 = vmatpush1.msra.mxu0 0.0
      %680 = vmatprep.subr.mxu0 0.0
      %681 = vmatpush1.msra.mxu0 0.0
      %682 = vmatprep.mubr.f32.mxu0 %v597
      %683 = vmatmul.mubr.f32.gmra.mrb[0].mxu0 %v437
      %v684 = vpop.f32.mrb[0].mxu0
      %v685 = vadd.f32 %v593, %v684
      %v686 = vpop.f32.mrb[0].mxu0
      %v687 = vadd.f32 %v593, %v686
      %688 = vdwg.mxu0
      %689 = vmatprep.subr.mxu0 %v442
      %690 = vmatpush1.msra.mxu0 %v441
      %691 = vmatprep.subr.mxu0 %v448
      %692 = vmatpush1.msra.mxu0 %v447
      %693 = vmatprep.subr.mxu0 %v454
      %694 = vmatpush1.msra.mxu0 %v453
      %695 = vmatprep.subr.mxu0 %v460
      %696 = vmatpush1.msra.mxu0 %v459
      %697 = vmatprep.subr.mxu0 %v466
      %698 = vmatpush1.msra.mxu0 %v465
      %699 = vmatprep.subr.mxu0 %v472
      %700 = vmatpush1.msra.mxu0 %v471
      %701 = vmatprep.subr.mxu0 %v478
      %702 = vmatpush1.msra.mxu0 %v477
      %703 = vmatprep.subr.mxu0 %v484
      %704 = vmatpush1.msra.mxu0 %v483
      %705 = vmatprep.subr.mxu0 %v490
      %706 = vmatpush1.msra.mxu0 %v489
      %707 = vmatprep.subr.mxu0 %v496
      %708 = vmatpush1.msra.mxu0 %v495
      %709 = vmatprep.subr.mxu0 %v502
      %710 = vmatpush1.msra.mxu0 %v501
      %711 = vmatprep.subr.mxu0 %v508
      %712 = vmatpush1.msra.mxu0 %v507
      %713 = vmatprep.subr.mxu0 %v514
      %714 = vmatpush1.msra.mxu0 %v513
      %715 = vmatprep.subr.mxu0 %v520
      %716 = vmatpush1.msra.mxu0 %v519
      %717 = vmatprep.subr.mxu0 %v526
      %718 = vmatpush1.msra.mxu0 %v525
      %719 = vmatprep.subr.mxu0 %v532
      %720 = vmatpush1.msra.mxu0 %v531
      %721 = vmatprep.subr.mxu0 %v538
      %722 = vmatpush1.msra.mxu0 %v537
      %723 = vmatprep.subr.mxu0 %v544
      %724 = vmatpush1.msra.mxu0 %v543
      %725 = vmatprep.subr.mxu0 %v550
      %726 = vmatpush1.msra.mxu0 %v549
      %727 = vmatprep.subr.mxu0 %v556
      %728 = vmatpush1.msra.mxu0 %v555
      %729 = vmatprep.subr.mxu0 %v562
      %730 = vmatpush1.msra.mxu0 %v561
      %731 = vmatprep.subr.mxu0 %v568
      %732 = vmatpush1.msra.mxu0 %v567
      %733 = vmatprep.subr.mxu0 %v574
      %734 = vmatpush1.msra.mxu0 %v573
      %735 = vmatprep.subr.mxu0 %v580
      %736 = vmatpush1.msra.mxu0 %v579
      %737 = vmatprep.subr.mxu0 %v610
      %738 = vmatpush1.msra.mxu0 %v607
      %739 = vmatprep.subr.mxu0 0.0
      %740 = vmatpush1.msra.mxu0 0.0
      %741 = vmatprep.subr.mxu0 0.0
      %742 = vmatpush1.msra.mxu0 0.0
      %743 = vmatprep.subr.mxu0 0.0
      %744 = vmatpush1.msra.mxu0 0.0
      %745 = vmatprep.subr.mxu0 0.0
      %746 = vmatpush1.msra.mxu0 0.0
      %747 = vmatprep.subr.mxu0 0.0
      %748 = vmatpush1.msra.mxu0 0.0
      %749 = vmatprep.subr.mxu0 0.0
      %750 = vmatpush1.msra.mxu0 0.0
      %751 = vmatprep.subr.mxu0 0.0
      %752 = vmatpush1.msra.mxu0 0.0
      %753 = vmatprep.mubr.f32.mxu0 %v597
      %754 = vmatmul.mubr.f32.gmra.mrb[0].mxu0 %v437
      %v755 = vpop.f32.mrb[0].mxu0
      %v756 = vadd.f32 %v593, %v755
      %v757 = vpop.f32.mrb[0].mxu0
      %v758 = vadd.f32 %v593, %v757
      %759 = vdwg.mxu0
      %760 = vmatprep.subr.mxu0 %v444
      %761 = vmatpush1.msra.mxu0 %v443
      %762 = vmatprep.subr.mxu0 %v450
      %763 = vmatpush1.msra.mxu0 %v449
      %764 = vmatprep.subr.mxu0 %v456
      %765 = vmatpush1.msra.mxu0 %v455
      %766 = vmatprep.subr.mxu0 %v462
      %767 = vmatpush1.msra.mxu0 %v461
      %768 = vmatprep.subr.mxu0 %v468
      %769 = vmatpush1.msra.mxu0 %v467
      %770 = vmatprep.subr.mxu0 %v474
      %771 = vmatpush1.msra.mxu0 %v473
      %772 = vmatprep.subr.mxu0 %v480
      %773 = vmatpush1.msra.mxu0 %v479
      %774 = vmatprep.subr.mxu0 %v486
      %775 = vmatpush1.msra.mxu0 %v485
      %776 = vmatprep.subr.mxu0 %v492
      %777 = vmatpush1.msra.mxu0 %v491
      %778 = vmatprep.subr.mxu0 %v498
      %779 = vmatpush1.msra.mxu0 %v497
      %780 = vmatprep.subr.mxu0 %v504
      %781 = vmatpush1.msra.mxu0 %v503
      %782 = vmatprep.subr.mxu0 %v510
      %783 = vmatpush1.msra.mxu0 %v509
      %784 = vmatprep.subr.mxu0 %v516
      %785 = vmatpush1.msra.mxu0 %v515
      %786 = vmatprep.subr.mxu0 %v522
      %787 = vmatpush1.msra.mxu0 %v521
      %788 = vmatprep.subr.mxu0 %v528
      %789 = vmatpush1.msra.mxu0 %v527
      %790 = vmatprep.subr.mxu0 %v534
      %791 = vmatpush1.msra.mxu0 %v533
      %792 = vmatprep.subr.mxu0 %v540
      %793 = vmatpush1.msra.mxu0 %v539
      %794 = vmatprep.subr.mxu0 %v546
      %795 = vmatpush1.msra.mxu0 %v545
      %796 = vmatprep.subr.mxu0 %v552
      %797 = vmatpush1.msra.mxu0 %v551
      %798 = vmatprep.subr.mxu0 %v558
      %799 = vmatpush1.msra.mxu0 %v557
      %800 = vmatprep.subr.mxu0 %v564
      %801 = vmatpush1.msra.mxu0 %v563
      %802 = vmatprep.subr.mxu0 %v570
      %803 = vmatpush1.msra.mxu0 %v569
      %804 = vmatprep.subr.mxu0 %v576
      %805 = vmatpush1.msra.mxu0 %v575
      %806 = vmatprep.subr.mxu0 %v582
      %807 = vmatpush1.msra.mxu0 %v581
      %808 = vmatprep.subr.mxu0 %v616
      %809 = vmatpush1.msra.mxu0 %v613
      %810 = vmatprep.subr.mxu0 0.0
      %811 = vmatpush1.msra.mxu0 0.0
      %812 = vmatprep.subr.mxu0 0.0
      %813 = vmatpush1.msra.mxu0 0.0
      %814 = vmatprep.subr.mxu0 0.0
      %815 = vmatpush1.msra.mxu0 0.0
      %816 = vmatprep.subr.mxu0 0.0
      %817 = vmatpush1.msra.mxu0 0.0
      %818 = vmatprep.subr.mxu0 0.0
      %819 = vmatpush1.msra.mxu0 0.0
      %820 = vmatprep.subr.mxu0 0.0
      %821 = vmatpush1.msra.mxu0 0.0
      %822 = vmatprep.subr.mxu0 0.0
      %823 = vmatpush1.msra.mxu0 0.0
      %824 = vmatprep.mubr.f32.mxu0 %v597
      %825 = vmatmul.mubr.f32.gmra.mrb[0].mxu0 %v437
      %v826 = vpop.f32.mrb[0].mxu0
      %v827 = vadd.f32 %v593, %v826
      %v828 = vpop.f32.mrb[0].mxu0
      %v829 = vadd.f32 %v593, %v828
      %830 = vdwg.mxu0
      %837 = vrot.lane.b32.xlu0 %v685, 127
      %v838 = vpop.permute.xlu0 %837
      %839 = vrot.lane.b32.xlu0 %v687, 127
      %v840 = vpop.permute.xlu0 %839
      %841 = vrot.lane.b32.xlu0 %v756, 127
      %v842 = vpop.permute.xlu0 %841
      %843 = vrot.lane.b32.xlu0 %v758, 127
      %v844 = vpop.permute.xlu0 %843
      %845 = vrot.lane.b32.xlu0 %v827, 127
      %v846 = vpop.permute.xlu0 %845
      %847 = vrot.lane.b32.xlu0 %v829, 127
      %v848 = vpop.permute.xlu0 %847
      %vm849 = vcmask 1039360
      %v850 = vsel %vm849, %v838, %v840
      %v851 = vsel %vm849, %v840, %v842
      %v852 = vsel %vm849, %v842, %v844
      %v853 = vsel %vm849, %v844, %v846
      %v854 = vsel %vm849, %v846, %v848
      %v861 = vmax.f32 %v685, %v850
      %v862 = vmax.f32 %v687, %v851
      %v863 = vmax.f32 %v756, %v852
      %v864 = vmax.f32 %v758, %v853
      %v865 = vmax.f32 %v827, %v854
      %v866 = vmax.f32 %v829, %v848
      %873 = vrot.lane.b32.xlu0 %v861, 102
      %v874 = vpop.permute.xlu0 %873
      %875 = vrot.lane.b32.xlu0 %v862, 102
      %v876 = vpop.permute.xlu0 %875
      %877 = vrot.lane.b32.xlu0 %v863, 102
      %v878 = vpop.permute.xlu0 %877
      %879 = vrot.lane.b32.xlu0 %v864, 102
      %v880 = vpop.permute.xlu0 %879
      %881 = vrot.lane.b32.xlu0 %v865, 102
      %v882 = vpop.permute.xlu0 %881
      %883 = vrot.lane.b32.xlu0 %v866, 102
      %v884 = vpop.permute.xlu0 %883
      %vm885 = vcmask 834560
      %v886 = vsel %vm885, %v874, %v876
      %v887 = vsel %vm885, %v876, %v878
      %v888 = vsel %vm885, %v878, %v880
      %v889 = vsel %vm885, %v880, %v882
      %v890 = vsel %vm885, %v882, %v884
      %v897 = vmax.f32 %v861, %v886
      %v898 = vmax.f32 %v862, %v887
      %v899 = vmax.f32 %v863, %v888
      %v900 = vmax.f32 %v864, %v889
      %v901 = vmax.f32 %v865, %v890
      %v902 = vmax.f32 %v866, %v884
      %v903 = vld [vmem:[%s3] sm:$0xff]
      %v904 = vld [vmem:[%s3 + $0x8] sm:$0xff]
      %v905 = vld [vmem:[%s3 + $0x10] sm:$0xff]
      %v906 = vld [vmem:[%s3 + $0x18] sm:$0xff]
      %v907 = vld [vmem:[%s3 + $0x20] sm:$0xff]
      %v908 = vld [vmem:[%s3 + $0x28] sm:$0xff]
      %v909 = vld [vmem:[%s3 + $0x30] sm:$0xff]
      %v910 = vld [vmem:[%s3 + $0x38] sm:$0xff]
      %v911 = vld [vmem:[%s3 + $0x40] sm:$0xff]
      %v912 = vld [vmem:[%s3 + $0x48] sm:$0xff]
      %v913 = vld [vmem:[%s3 + $0x50] sm:$0xff]
      %v914 = vld [vmem:[%s3 + $0x58] sm:$0xff]
      %v915 = vld [vmem:[%s3 + $0x60] sm:$0xff]
      %v916 = vld [vmem:[%s3 + $0x68] sm:$0xff]
      %v917 = vld [vmem:[%s3 + $0x70] sm:$0xff]
      %v918 = vld [vmem:[%s3 + $0x78] sm:$0xff]
      %v919 = vld [vmem:[%s3 + $0x80] sm:$0xff]
      %v920 = vld [vmem:[%s3 + $0x88] sm:$0xff]
      %v921 = vld [vmem:[%s3 + $0x90] sm:$0xff]
      %v922 = vld [vmem:[%s3 + $0x98] sm:$0xff]
      %v923 = vld [vmem:[%s3 + $0xa0] sm:$0xff]
      %v924 = vld [vmem:[%s3 + $0xa8] sm:$0xff]
      %v925 = vld [vmem:[%s3 + $0xb0] sm:$0xff]
      %v926 = vld [vmem:[%s3 + $0xb8] sm:$0xff]
      %v927 = vld [vmem:[%s3 + $0xc0] sm:$0xff]
      %v928 = vld [vmem:[%s3 + $0xc8] sm:$0xff]
      %v929 = vld [vmem:[%s3 + $0xd0] sm:$0xff]
      %v930 = vld [vmem:[%s3 + $0xd8] sm:$0xff]
      %v931 = vld [vmem:[%s3 + $0xe0] sm:$0xff]
      %v932 = vld [vmem:[%s3 + $0xe8] sm:$0xff]
      %v933 = vld [vmem:[%s3 + $0xf0] sm:$0xff]
      %v934 = vld [vmem:[%s3 + $0xf8] sm:$0xff]
      %v935 = vld [vmem:[%s3 + $0x100] sm:$0xff]
      %v936 = vld [vmem:[%s3 + $0x108] sm:$0xff]
      %v937 = vld [vmem:[%s3 + $0x110] sm:$0xff]
      %v938 = vld [vmem:[%s3 + $0x118] sm:$0xff]
      %v939 = vld [vmem:[%s3 + $0x120] sm:$0xff]
      %v940 = vld [vmem:[%s3 + $0x128] sm:$0xff]
      %v941 = vld [vmem:[%s3 + $0x130] sm:$0xff]
      %v942 = vld [vmem:[%s3 + $0x138] sm:$0xff]
      %v943 = vld [vmem:[%s3 + $0x140] sm:$0xff]
      %v944 = vld [vmem:[%s3 + $0x148] sm:$0xff]
      %v945 = vld [vmem:[%s3 + $0x150] sm:$0xff]
      %v946 = vld [vmem:[%s3 + $0x158] sm:$0xff]
      %v947 = vld [vmem:[%s3 + $0x160] sm:$0xff]
      %v948 = vld [vmem:[%s3 + $0x168] sm:$0xff]
      %v949 = vld [vmem:[%s3 + $0x170] sm:$0xff]
      %v950 = vld [vmem:[%s3 + $0x178] sm:$0xff]
      %v951 = vld [vmem:[%s3 + $0x180] sm:$0xff]
      %v952 = vld [vmem:[%s3 + $0x188] sm:$0xff]
      %v953 = vld [vmem:[%s3 + $0x190] sm:$0xff]
      %v954 = vld [vmem:[%s3 + $0x198] sm:$0xff]
      %v955 = vld [vmem:[%s3 + $0x1a0] sm:$0xff]
      %v956 = vld [vmem:[%s3 + $0x1a8] sm:$0xff]
      %v957 = vld [vmem:[%s3 + $0x1b0] sm:$0xff]
      %v958 = vld [vmem:[%s3 + $0x1b8] sm:$0xff]
      %v959 = vld [vmem:[%s3 + $0x1c0] sm:$0xff]
      %v960 = vld [vmem:[%s3 + $0x1c8] sm:$0xff]
      %v961 = vld [vmem:[%s3 + $0x1d0] sm:$0xff]
      %v962 = vld [vmem:[%s3 + $0x1d8] sm:$0xff]
      %v963 = vld [vmem:[%s3 + $0x1e0] sm:$0xff]
      %v964 = vld [vmem:[%s3 + $0x1e8] sm:$0xff]
      %v965 = vld [vmem:[%s3 + $0x1f0] sm:$0xff]
      %v966 = vld [vmem:[%s3 + $0x1f8] sm:$0xff]
      %v967 = vld [vmem:[%s3 + $0x200] sm:$0xff]
      %v968 = vld [vmem:[%s3 + $0x208] sm:$0xff]
      %v969 = vld [vmem:[%s3 + $0x210] sm:$0xff]
      %v970 = vld [vmem:[%s3 + $0x218] sm:$0xff]
      %v971 = vld [vmem:[%s3 + $0x220] sm:$0xff]
      %v972 = vld [vmem:[%s3 + $0x228] sm:$0xff]
      %v973 = vld [vmem:[%s3 + $0x230] sm:$0xff]
      %v974 = vld [vmem:[%s3 + $0x238] sm:$0xff]
      %v975 = vld [vmem:[%s3 + $0x240] sm:$0xff]
      %v976 = vld [vmem:[%s3 + $0x248] sm:$0xff]
      %v977 = vld [vmem:[%s3 + $0x250] sm:$0xff]
      %v978 = vld [vmem:[%s3 + $0x258] sm:$0xff]
      %v979 = vld [vmem:[%s3 + $0x260] sm:$0xff]
      %v980 = vld [vmem:[%s3 + $0x268] sm:$0xff]
      %v981 = vld [vmem:[%s3 + $0x270] sm:$0xff]
      %v982 = vld [vmem:[%s3 + $0x278] sm:$0xff]
      %v983 = vld [vmem:[%s3 + $0x280] sm:$0xff]
      %v984 = vld [vmem:[%s3 + $0x288] sm:$0xff]
      %v985 = vld [vmem:[%s3 + $0x290] sm:$0xff]
      %v986 = vld [vmem:[%s3 + $0x298] sm:$0xff]
      %v987 = vld [vmem:[%s3 + $0x2a0] sm:$0xff]
      %v988 = vld [vmem:[%s3 + $0x2a8] sm:$0xff]
      %v989 = vld [vmem:[%s3 + $0x2b0] sm:$0xff]
      %v990 = vld [vmem:[%s3 + $0x2b8] sm:$0xff]
      %v991 = vld [vmem:[%s3 + $0x2c0] sm:$0xff]
      %v992 = vld [vmem:[%s3 + $0x2c8] sm:$0xff]
      %v993 = vld [vmem:[%s3 + $0x2d0] sm:$0xff]
      %v994 = vld [vmem:[%s3 + $0x2d8] sm:$0xff]
      %v995 = vld [vmem:[%s3 + $0x2e0] sm:$0xff]
      %v996 = vld [vmem:[%s3 + $0x2e8] sm:$0xff]
      %v997 = vld [vmem:[%s3 + $0x2f0] sm:$0xff]
      %v998 = vld [vmem:[%s3 + $0x2f8] sm:$0xff]
      %v999 = vld [vmem:[%s3 + $0x300] sm:$0xff]
      %v1000 = vld [vmem:[%s3 + $0x308] sm:$0xff]
      %v1001 = vld [vmem:[%s3 + $0x310] sm:$0xff]
      %v1002 = vld [vmem:[%s3 + $0x318] sm:$0xff]
      %v1003 = vld [vmem:[%s3 + $0x320] sm:$0xff]
      %v1004 = vld [vmem:[%s3 + $0x328] sm:$0xff]
      %v1005 = vld [vmem:[%s3 + $0x330] sm:$0xff]
      %v1006 = vld [vmem:[%s3 + $0x338] sm:$0xff]
      %v1007 = vld [vmem:[%s3 + $0x340] sm:$0xff]
      %v1008 = vld [vmem:[%s3 + $0x348] sm:$0xff]
      %v1009 = vld [vmem:[%s3 + $0x350] sm:$0xff]
      %v1010 = vld [vmem:[%s3 + $0x358] sm:$0xff]
      %v1011 = vld [vmem:[%s3 + $0x360] sm:$0xff]
      %v1012 = vld [vmem:[%s3 + $0x368] sm:$0xff]
      %v1013 = vld [vmem:[%s3 + $0x370] sm:$0xff]
      %v1014 = vld [vmem:[%s3 + $0x378] sm:$0xff]
      %v1015 = vld [vmem:[%s3 + $0x380] sm:$0xff]
      %v1016 = vld [vmem:[%s3 + $0x388] sm:$0xff]
      %v1017 = vld [vmem:[%s3 + $0x390] sm:$0xff]
      %v1018 = vld [vmem:[%s3 + $0x398] sm:$0xff]
      %v1019 = vld [vmem:[%s3 + $0x3a0] sm:$0xff]
      %v1020 = vld [vmem:[%s3 + $0x3a8] sm:$0xff]
      %v1021 = vld [vmem:[%s3 + $0x3b0] sm:$0xff]
      %v1022 = vld [vmem:[%s3 + $0x3b8] sm:$0xff]
      %v1023 = vld [vmem:[%s3 + $0x3c0] sm:$0xff]
      %v1024 = vld [vmem:[%s3 + $0x3c8] sm:$0xff]
      %v1025 = vld [vmem:[%s3 + $0x3d0] sm:$0xff]
      %v1026 = vld [vmem:[%s3 + $0x3d8] sm:$0xff]
      %v1027 = vld [vmem:[%s3 + $0x3e0] sm:$0xff]
      %v1028 = vld [vmem:[%s3 + $0x3e8] sm:$0xff]
      %v1029 = vld [vmem:[%s3 + $0x3f0] sm:$0xff]
      %v1030 = vld [vmem:[%s3 + $0x3f8] sm:$0xff]
      %v1031 = vld [vmem:[%s3 + $0x400] sm:$0xff]
      %v1032 = vld [vmem:[%s3 + $0x408] sm:$0xff]
      %v1033 = vld [vmem:[%s3 + $0x410] sm:$0xff]
      %v1034 = vld [vmem:[%s3 + $0x418] sm:$0xff]
      %v1035 = vld [vmem:[%s3 + $0x420] sm:$0xff]
      %v1036 = vld [vmem:[%s3 + $0x428] sm:$0xff]
      %v1037 = vld [vmem:[%s3 + $0x430] sm:$0xff]
      %v1038 = vld [vmem:[%s3 + $0x438] sm:$0xff]
      %v1039 = vld [vmem:[%s3 + $0x440] sm:$0xff]
      %v1040 = vld [vmem:[%s3 + $0x448] sm:$0xff]
      %v1041 = vld [vmem:[%s3 + $0x450] sm:$0xff]
      %v1042 = vld [vmem:[%s3 + $0x458] sm:$0xff]
      %v1043 = vld [vmem:[%s3 + $0x460] sm:$0xff]
      %v1044 = vld [vmem:[%s3 + $0x468] sm:$0xff]
      %v1045 = vld [vmem:[%s3 + $0x470] sm:$0xff]
      %v1046 = vld [vmem:[%s3 + $0x478] sm:$0xff]
      %v1047 = vld [vmem:[%s3 + $0x480] sm:$0xff]
      %v1048 = vld [vmem:[%s3 + $0x488] sm:$0xff]
      %v1049 = vld [vmem:[%s3 + $0x490] sm:$0xff]
      %v1050 = vld [vmem:[%s3 + $0x498] sm:$0xff]
      %v1051 = vld [vmem:[%s3 + $0x4a0] sm:$0xff]
      %v1052 = vld [vmem:[%s3 + $0x4a8] sm:$0xff]
      %v1053 = vld [vmem:[%s3 + $0x4b0] sm:$0xff]
      %v1054 = vld [vmem:[%s3 + $0x4b8] sm:$0xff]
      %v1055 = vld [vmem:[%s3 + $0x4c0] sm:$0xff]
      %v1056 = vld [vmem:[%s3 + $0x4c8] sm:$0xff]
      %v1057 = vld [vmem:[%s3 + $0x4d0] sm:$0xff]
      %v1058 = vld [vmem:[%s3 + $0x4d8] sm:$0xff]
      %v1059 = vld [vmem:[%s3 + $0x4e0] sm:$0xff]
      %v1060 = vld [vmem:[%s3 + $0x4e8] sm:$0xff]
      %v1061 = vld [vmem:[%s3 + $0x4f0] sm:$0xff]
      %v1062 = vld [vmem:[%s3 + $0x4f8] sm:$0xff]
      %v1063 = vld [vmem:[%s3 + $0x500] sm:$0xff]
      %v1064 = vld [vmem:[%s3 + $0x508] sm:$0xff]
      %v1065 = vld [vmem:[%s3 + $0x510] sm:$0x1]
      %v1066 = vld [vmem:[%s3 + $0x518] sm:$0x1]
      %vm1067 = vcmask 72704
      %v1069 = vsel %vm1067, %v902, 0
      %vm1071 = vcmask 1040384
      %v1073 = vsel %vm1071, %v1065, 0
      %v1076 = vsel %vm1071, %v1066, 0
      %1078 = vmatprep.subr.mxu0 %v904
      %1079 = vmatpush1.msra.mxu0 %v903
      %1080 = vmatprep.subr.mxu0 %v906
      %1081 = vmatpush1.msra.mxu0 %v905
      %1082 = vmatprep.subr.mxu0 %v908
      %1083 = vmatpush1.msra.mxu0 %v907
      %1084 = vmatprep.subr.mxu0 %v910
      %1085 = vmatpush1.msra.mxu0 %v909
      %1086 = vmatprep.subr.mxu0 %v912
      %1087 = vmatpush1.msra.mxu0 %v911
      %1088 = vmatprep.subr.mxu0 %v914
      %1089 = vmatpush1.msra.mxu0 %v913
      %1090 = vmatprep.subr.mxu0 %v916
      %1091 = vmatpush1.msra.mxu0 %v915
      %1092 = vmatprep.subr.mxu0 %v918
      %1093 = vmatpush1.msra.mxu0 %v917
      %1094 = vmatprep.subr.mxu0 %v920
      %1095 = vmatpush1.msra.mxu0 %v919
      %1096 = vmatprep.subr.mxu0 %v922
      %1097 = vmatpush1.msra.mxu0 %v921
      %1098 = vmatprep.subr.mxu0 %v924
      %1099 = vmatpush1.msra.mxu0 %v923
      %1100 = vmatprep.subr.mxu0 %v926
      %1101 = vmatpush1.msra.mxu0 %v925
      %1102 = vmatprep.subr.mxu0 %v928
      %1103 = vmatpush1.msra.mxu0 %v927
      %1104 = vmatprep.subr.mxu0 %v930
      %1105 = vmatpush1.msra.mxu0 %v929
      %1106 = vmatprep.subr.mxu0 %v932
      %1107 = vmatpush1.msra.mxu0 %v931
      %1108 = vmatprep.subr.mxu0 %v934
      %1109 = vmatpush1.msra.mxu0 %v933
      %1110 = vmatprep.subr.mxu0 %v936
      %1111 = vmatpush1.msra.mxu0 %v935
      %1112 = vmatprep.subr.mxu0 %v938
      %1113 = vmatpush1.msra.mxu0 %v937
      %1114 = vmatprep.subr.mxu0 %v940
      %1115 = vmatpush1.msra.mxu0 %v939
      %1116 = vmatprep.subr.mxu0 %v942
      %1117 = vmatpush1.msra.mxu0 %v941
      %1118 = vmatprep.subr.mxu0 %v944
      %1119 = vmatpush1.msra.mxu0 %v943
      %1120 = vmatprep.subr.mxu0 %v946
      %1121 = vmatpush1.msra.mxu0 %v945
      %1122 = vmatprep.subr.mxu0 %v948
      %1123 = vmatpush1.msra.mxu0 %v947
      %1124 = vmatprep.subr.mxu0 %v950
      %1125 = vmatpush1.msra.mxu0 %v949
      %1126 = vmatprep.subr.mxu0 %v952
      %1127 = vmatpush1.msra.mxu0 %v951
      %1128 = vmatprep.subr.mxu0 %v954
      %1129 = vmatpush1.msra.mxu0 %v953
      %1130 = vmatprep.subr.mxu0 %v956
      %1131 = vmatpush1.msra.mxu0 %v955
      %1132 = vmatprep.subr.mxu0 %v958
      %1133 = vmatpush1.msra.mxu0 %v957
      %1134 = vmatprep.subr.mxu0 %v960
      %1135 = vmatpush1.msra.mxu0 %v959
      %1136 = vmatprep.subr.mxu0 %v962
      %1137 = vmatpush1.msra.mxu0 %v961
      %1138 = vmatprep.subr.mxu0 %v964
      %1139 = vmatpush1.msra.mxu0 %v963
      %1140 = vmatprep.subr.mxu0 %v966
      %1141 = vmatpush1.msra.mxu0 %v965
      %1142 = vmatprep.mubr.f32.mxu0 %v898
      %1143 = vmatmul.mubr.f32.gmra.mrb[0].mxu0 %v897
      %v1144 = vpop.f32.mrb[0].mxu0
      %v1145 = vadd.f32 0.0, %v1144
      %v1146 = vpop.f32.mrb[0].mxu0
      %v1147 = vadd.f32 0.0, %v1146
      %1148 = vdwg.mxu0
      %1149 = vmatprep.subr.mxu0 %v968
      %1150 = vmatpush1.msra.mxu0 %v967
      %1151 = vmatprep.subr.mxu0 %v970
      %1152 = vmatpush1.msra.mxu0 %v969
      %1153 = vmatprep.subr.mxu0 %v972
      %1154 = vmatpush1.msra.mxu0 %v971
      %1155 = vmatprep.subr.mxu0 %v974
      %1156 = vmatpush1.msra.mxu0 %v973
      %1157 = vmatprep.subr.mxu0 %v976
      %1158 = vmatpush1.msra.mxu0 %v975
      %1159 = vmatprep.subr.mxu0 %v978
      %1160 = vmatpush1.msra.mxu0 %v977
      %1161 = vmatprep.subr.mxu0 %v980
      %1162 = vmatpush1.msra.mxu0 %v979
      %1163 = vmatprep.subr.mxu0 %v982
      %1164 = vmatpush1.msra.mxu0 %v981
      %1165 = vmatprep.subr.mxu0 %v984
      %1166 = vmatpush1.msra.mxu0 %v983
      %1167 = vmatprep.subr.mxu0 %v986
      %1168 = vmatpush1.msra.mxu0 %v985
      %1169 = vmatprep.subr.mxu0 %v988
      %1170 = vmatpush1.msra.mxu0 %v987
      %1171 = vmatprep.subr.mxu0 %v990
      %1172 = vmatpush1.msra.mxu0 %v989
      %1173 = vmatprep.subr.mxu0 %v992
      %1174 = vmatpush1.msra.mxu0 %v991
      %1175 = vmatprep.subr.mxu0 %v994
      %1176 = vmatpush1.msra.mxu0 %v993
      %1177 = vmatprep.subr.mxu0 %v996
      %1178 = vmatpush1.msra.mxu0 %v995
      %1179 = vmatprep.subr.mxu0 %v998
      %1180 = vmatpush1.msra.mxu0 %v997
      %1181 = vmatprep.subr.mxu0 %v1000
      %1182 = vmatpush1.msra.mxu0 %v999
      %1183 = vmatprep.subr.mxu0 %v1002
      %1184 = vmatpush1.msra.mxu0 %v1001
      %1185 = vmatprep.subr.mxu0 %v1004
      %1186 = vmatpush1.msra.mxu0 %v1003
      %1187 = vmatprep.subr.mxu0 %v1006
      %1188 = vmatpush1.msra.mxu0 %v1005
      %1189 = vmatprep.subr.mxu0 %v1008
      %1190 = vmatpush1.msra.mxu0 %v1007
      %1191 = vmatprep.subr.mxu0 %v1010
      %1192 = vmatpush1.msra.mxu0 %v1009
      %1193 = vmatprep.subr.mxu0 %v1012
      %1194 = vmatpush1.msra.mxu0 %v1011
      %1195 = vmatprep.subr.mxu0 %v1014
      %1196 = vmatpush1.msra.mxu0 %v1013
      %1197 = vmatprep.subr.mxu0 %v1016
      %1198 = vmatpush1.msra.mxu0 %v1015
      %1199 = vmatprep.subr.mxu0 %v1018
      %1200 = vmatpush1.msra.mxu0 %v1017
      %1201 = vmatprep.subr.mxu0 %v1020
      %1202 = vmatpush1.msra.mxu0 %v1019
      %1203 = vmatprep.subr.mxu0 %v1022
      %1204 = vmatpush1.msra.mxu0 %v1021
      %1205 = vmatprep.subr.mxu0 %v1024
      %1206 = vmatpush1.msra.mxu0 %v1023
      %1207 = vmatprep.subr.mxu0 %v1026
      %1208 = vmatpush1.msra.mxu0 %v1025
      %1209 = vmatprep.subr.mxu0 %v1028
      %1210 = vmatpush1.msra.mxu0 %v1027
      %1211 = vmatprep.subr.mxu0 %v1030
      %1212 = vmatpush1.msra.mxu0 %v1029
      %1213 = vmatprep.mubr.f32.mxu0 %v900
      %1214 = vmatmul.mubr.f32.gmra.mrb[0].mxu0 %v899
      %v1215 = vpop.f32.mrb[0].mxu0
      %v1216 = vadd.f32 %v1145, %v1215
      %v1217 = vpop.f32.mrb[0].mxu0
      %v1218 = vadd.f32 %v1147, %v1217
      %1219 = vdwg.mxu0
      %1220 = vmatprep.subr.mxu0 %v1032
      %1221 = vmatpush1.msra.mxu0 %v1031
      %1222 = vmatprep.subr.mxu0 %v1034
      %1223 = vmatpush1.msra.mxu0 %v1033
      %1224 = vmatprep.subr.mxu0 %v1036
      %1225 = vmatpush1.msra.mxu0 %v1035
      %1226 = vmatprep.subr.mxu0 %v1038
      %1227 = vmatpush1.msra.mxu0 %v1037
      %1228 = vmatprep.subr.mxu0 %v1040
      %1229 = vmatpush1.msra.mxu0 %v1039
      %1230 = vmatprep.subr.mxu0 %v1042
      %1231 = vmatpush1.msra.mxu0 %v1041
      %1232 = vmatprep.subr.mxu0 %v1044
      %1233 = vmatpush1.msra.mxu0 %v1043
      %1234 = vmatprep.subr.mxu0 %v1046
      %1235 = vmatpush1.msra.mxu0 %v1045
      %1236 = vmatprep.subr.mxu0 %v1048
      %1237 = vmatpush1.msra.mxu0 %v1047
      %1238 = vmatprep.subr.mxu0 %v1050
      %1239 = vmatpush1.msra.mxu0 %v1049
      %1240 = vmatprep.subr.mxu0 %v1052
      %1241 = vmatpush1.msra.mxu0 %v1051
      %1242 = vmatprep.subr.mxu0 %v1054
      %1243 = vmatpush1.msra.mxu0 %v1053
      %1244 = vmatprep.subr.mxu0 %v1056
      %1245 = vmatpush1.msra.mxu0 %v1055
      %1246 = vmatprep.subr.mxu0 %v1058
      %1247 = vmatpush1.msra.mxu0 %v1057
      %1248 = vmatprep.subr.mxu0 %v1060
      %1249 = vmatpush1.msra.mxu0 %v1059
      %1250 = vmatprep.subr.mxu0 %v1062
      %1251 = vmatpush1.msra.mxu0 %v1061
      %1252 = vmatprep.subr.mxu0 %v1064
      %1253 = vmatpush1.msra.mxu0 %v1063
      %1254 = vmatprep.subr.mxu0 %v1076
      %1255 = vmatpush1.msra.mxu0 %v1073
      %1256 = vmatprep.subr.mxu0 0.0
      %1257 = vmatpush1.msra.mxu0 0.0
      %1258 = vmatprep.subr.mxu0 0.0
      %1259 = vmatpush1.msra.mxu0 0.0
      %1260 = vmatprep.subr.mxu0 0.0
      %1261 = vmatpush1.msra.mxu0 0.0
      %1262 = vmatprep.subr.mxu0 0.0
      %1263 = vmatpush1.msra.mxu0 0.0
      %1264 = vmatprep.subr.mxu0 0.0
      %1265 = vmatpush1.msra.mxu0 0.0
      %1266 = vmatprep.subr.mxu0 0.0
      %1267 = vmatpush1.msra.mxu0 0.0
      %1268 = vmatprep.subr.mxu0 0.0
      %1269 = vmatpush1.msra.mxu0 0.0
      %1270 = vmatprep.subr.mxu0 0.0
      %1271 = vmatpush1.msra.mxu0 0.0
      %1272 = vmatprep.subr.mxu0 0.0
      %1273 = vmatpush1.msra.mxu0 0.0
      %1274 = vmatprep.subr.mxu0 0.0
      %1275 = vmatpush1.msra.mxu0 0.0
      %1276 = vmatprep.subr.mxu0 0.0
      %1277 = vmatpush1.msra.mxu0 0.0
      %1278 = vmatprep.subr.mxu0 0.0
      %1279 = vmatpush1.msra.mxu0 0.0
      %1280 = vmatprep.subr.mxu0 0.0
      %1281 = vmatpush1.msra.mxu0 0.0
      %1282 = vmatprep.subr.mxu0 0.0
      %1283 = vmatpush1.msra.mxu0 0.0
      %1284 = vmatprep.mubr.f32.mxu0 %v1069
      %1285 = vmatmul.mubr.f32.gmra.mrb[0].mxu0 %v901
      %v1286 = vpop.f32.mrb[0].mxu0
      %v1287 = vadd.f32 %v1216, %v1286
      %v1288 = vpop.f32.mrb[0].mxu0
      %v1289 = vadd.f32 %v1218, %v1288
      %1290 = vdwg.mxu0
      %v1291 = vmax.f32 %v1287, 0.0
      %v1292 = vmax.f32 %v1289, 0.0
      %vm1293 = vcmask 957440
      %1294 = vst.msk [vmem:[#allocation2] sm:$0xff] %vm1293, %v1291
      %1296 = vrot.lane.b32.xlu0 %v1291, 127
      %v1297 = vpop.permute.xlu0 %1296
      %1299 = vst.msk [vmem:[#allocation2 + $0x8] sm:$0xff] %vm1293, %v1297
      %1300 = vrot.lane.b32.xlu0 %v1291, 126
      %v1301 = vpop.permute.xlu0 %1300
      %1303 = vst.msk [vmem:[#allocation2 + $0x10] sm:$0xff] %vm1293, %v1301
      %1304 = vrot.lane.b32.xlu0 %v1291, 125
      %v1305 = vpop.permute.xlu0 %1304
      %1307 = vst.msk [vmem:[#allocation2 + $0x18] sm:$0xff] %vm1293, %v1305
      %1308 = vrot.lane.b32.xlu0 %v1291, 124
      %v1309 = vpop.permute.xlu0 %1308
      %1311 = vst.msk [vmem:[#allocation2 + $0x20] sm:$0xff] %vm1293, %v1309
      %1313 = vrot.lane.b32.xlu0 %v1291, 115
      %v1314 = vpop.permute.xlu0 %1313
      %1315 = vrot.lane.b32.xlu0 %v1292, 115
      %v1316 = vpop.permute.xlu0 %1315
      %vm1317 = vcmask 941056
      %v1318 = vsel %vm1317, %v1314, %v1316
      %1320 = vst.msk [vmem:[#allocation2 + $0x28] sm:$0xff] %vm1293, %v1318
      %1321 = vrot.lane.b32.xlu0 %v1291, 114
      %v1322 = vpop.permute.xlu0 %1321
      %1323 = vrot.lane.b32.xlu0 %v1292, 114
      %v1324 = vpop.permute.xlu0 %1323
      %vm1325 = vcmask 932864
      %v1326 = vsel %vm1325, %v1322, %v1324
      %1328 = vst.msk [vmem:[#allocation2 + $0x30] sm:$0xff] %vm1293, %v1326
      %1329 = vrot.lane.b32.xlu0 %v1291, 113
      %v1330 = vpop.permute.xlu0 %1329
      %1331 = vrot.lane.b32.xlu0 %v1292, 113
      %v1332 = vpop.permute.xlu0 %1331
      %vm1333 = vcmask 924672
      %v1334 = vsel %vm1333, %v1330, %v1332
      %1336 = vst.msk [vmem:[#allocation2 + $0x38] sm:$0xff] %vm1293, %v1334
      %1337 = vrot.lane.b32.xlu0 %v1291, 112
      %v1338 = vpop.permute.xlu0 %1337
      %1339 = vrot.lane.b32.xlu0 %v1292, 112
      %v1340 = vpop.permute.xlu0 %1339
      %vm1341 = vcmask 916480
      %v1342 = vsel %vm1341, %v1338, %v1340
      %1344 = vst.msk [vmem:[#allocation2 + $0x40] sm:$0xff] %vm1293, %v1342
      %1345 = vrot.lane.b32.xlu0 %v1291, 111
      %v1346 = vpop.permute.xlu0 %1345
      %1347 = vrot.lane.b32.xlu0 %v1292, 111
      %v1348 = vpop.permute.xlu0 %1347
      %vm1349 = vcmask 908288
      %v1350 = vsel %vm1349, %v1346, %v1348
      %1352 = vst.msk [vmem:[#allocation2 + $0x48] sm:$0xff] %vm1293, %v1350
      %1353 = vrot.lane.b32.xlu0 %v1291, 102
      %v1354 = vpop.permute.xlu0 %1353
      %1355 = vrot.lane.b32.xlu0 %v1292, 102
      %v1356 = vpop.permute.xlu0 %1355
      %v1357 = vsel %vm885, %v1354, %v1356
      %1359 = vst.msk [vmem:[#allocation2 + $0x50] sm:$0xff] %vm1293, %v1357
      %1360 = vrot.lane.b32.xlu0 %v1291, 101
      %v1361 = vpop.permute.xlu0 %1360
      %1362 = vrot.lane.b32.xlu0 %v1292, 101
      %v1363 = vpop.permute.xlu0 %1362
      %vm1364 = vcmask 826368
      %v1365 = vsel %vm1364, %v1361, %v1363
      %1367 = vst.msk [vmem:[#allocation2 + $0x58] sm:$0xff] %vm1293, %v1365
      %1368 = vrot.lane.b32.xlu0 %v1291, 100
      %v1369 = vpop.permute.xlu0 %1368
      %1370 = vrot.lane.b32.xlu0 %v1292, 100
      %v1371 = vpop.permute.xlu0 %1370
      %vm1372 = vcmask 818176
      %v1373 = vsel %vm1372, %v1369, %v1371
      %1375 = vst.msk [vmem:[#allocation2 + $0x60] sm:$0xff] %vm1293, %v1373
      %1376 = vrot.lane.b32.xlu0 %v1291, 99
      %v1377 = vpop.permute.xlu0 %1376
      %1378 = vrot.lane.b32.xlu0 %v1292, 99
      %v1379 = vpop.permute.xlu0 %1378
      %vm1380 = vcmask 809984
      %v1381 = vsel %vm1380, %v1377, %v1379
      %1383 = vst.msk [vmem:[#allocation2 + $0x68] sm:$0xff] %vm1293, %v1381
      %1384 = vrot.lane.b32.xlu0 %v1291, 98
      %v1385 = vpop.permute.xlu0 %1384
      %1386 = vrot.lane.b32.xlu0 %v1292, 98
      %v1387 = vpop.permute.xlu0 %1386
      %vm1388 = vcmask 801792
      %v1389 = vsel %vm1388, %v1385, %v1387
      %1391 = vst.msk [vmem:[#allocation2 + $0x70] sm:$0xff] %vm1293, %v1389
      %1392 = vrot.lane.b32.xlu0 %v1291, 89
      %v1393 = vpop.permute.xlu0 %1392
      %1394 = vrot.lane.b32.xlu0 %v1292, 89
      %v1395 = vpop.permute.xlu0 %1394
      %vm1396 = vcmask 728064
      %v1397 = vsel %vm1396, %v1393, %v1395
      %1399 = vst.msk [vmem:[#allocation2 + $0x78] sm:$0xff] %vm1293, %v1397
      %1400 = vrot.lane.b32.xlu0 %v1291, 88
      %v1401 = vpop.permute.xlu0 %1400
      %1402 = vrot.lane.b32.xlu0 %v1292, 88
      %v1403 = vpop.permute.xlu0 %1402
      %vm1404 = vcmask 719872
      %v1405 = vsel %vm1404, %v1401, %v1403
      %1407 = vst.msk [vmem:[#allocation2 + $0x80] sm:$0xff] %vm1293, %v1405
      %1408 = vrot.lane.b32.xlu0 %v1291, 87
      %v1409 = vpop.permute.xlu0 %1408
      %1410 = vrot.lane.b32.xlu0 %v1292, 87
      %v1411 = vpop.permute.xlu0 %1410
      %vm1412 = vcmask 711680
      %v1413 = vsel %vm1412, %v1409, %v1411
      %1415 = vst.msk [vmem:[#allocation2 + $0x88] sm:$0xff] %vm1293, %v1413
      %1416 = vrot.lane.b32.xlu0 %v1291, 86
      %v1417 = vpop.permute.xlu0 %1416
      %1418 = vrot.lane.b32.xlu0 %v1292, 86
      %v1419 = vpop.permute.xlu0 %1418
      %vm1420 = vcmask 703488
      %v1421 = vsel %vm1420, %v1417, %v1419
      %1423 = vst.msk [vmem:[#allocation2 + $0x90] sm:$0xff] %vm1293, %v1421
      %1424 = vrot.lane.b32.xlu0 %v1291, 85
      %v1425 = vpop.permute.xlu0 %1424
      %1426 = vrot.lane.b32.xlu0 %v1292, 85
      %v1427 = vpop.permute.xlu0 %1426
      %vm1428 = vcmask 695296
      %v1429 = vsel %vm1428, %v1425, %v1427
      %1431 = vst.msk [vmem:[#allocation2 + $0x98] sm:$0xff] %vm1293, %v1429
      %1432 = vrot.lane.b32.xlu0 %v1291, 76
      %v1433 = vpop.permute.xlu0 %1432
      %1434 = vrot.lane.b32.xlu0 %v1292, 76
      %v1435 = vpop.permute.xlu0 %1434
      %vm1436 = vcmask 621568
      %v1437 = vsel %vm1436, %v1433, %v1435
      %1439 = vst.msk [vmem:[#allocation2 + $0xa0] sm:$0xff] %vm1293, %v1437
      %1440 = vrot.lane.b32.xlu0 %v1291, 75
      %v1441 = vpop.permute.xlu0 %1440
      %1442 = vrot.lane.b32.xlu0 %v1292, 75
      %v1443 = vpop.permute.xlu0 %1442
      %vm1444 = vcmask 613376
      %v1445 = vsel %vm1444, %v1441, %v1443
      %1447 = vst.msk [vmem:[#allocation2 + $0xa8] sm:$0xff] %vm1293, %v1445
      %1448 = vrot.lane.b32.xlu0 %v1291, 74
      %v1449 = vpop.permute.xlu0 %1448
      %1450 = vrot.lane.b32.xlu0 %v1292, 74
      %v1451 = vpop.permute.xlu0 %1450
      %vm1452 = vcmask 605184
      %v1453 = vsel %vm1452, %v1449, %v1451
      %1455 = vst.msk [vmem:[#allocation2 + $0xb0] sm:$0xff] %vm1293, %v1453
      %1456 = vrot.lane.b32.xlu0 %v1291, 73
      %v1457 = vpop.permute.xlu0 %1456
      %1458 = vrot.lane.b32.xlu0 %v1292, 73
      %v1459 = vpop.permute.xlu0 %1458
      %vm1460 = vcmask 596992
      %v1461 = vsel %vm1460, %v1457, %v1459
      %1463 = vst.msk [vmem:[#allocation2 + $0xb8] sm:$0xff] %vm1293, %v1461
      %1464 = vrot.lane.b32.xlu0 %v1291, 72
      %v1465 = vpop.permute.xlu0 %1464
      %1466 = vrot.lane.b32.xlu0 %v1292, 72
      %v1467 = vpop.permute.xlu0 %1466
      %vm1468 = vcmask 588800
      %v1469 = vsel %vm1468, %v1465, %v1467
      %1471 = vst.msk [vmem:[#allocation2 + $0xc0] sm:$0xff] %vm1293, %v1469
      %v1472 = vld [vmem:[%s4] sm:$0xff]
      %v1473 = vld [vmem:[%s4 + $0x8] sm:$0xff]
      %v1474 = vld [vmem:[%s4 + $0x10] sm:$0x3]
      %v1475 = vld [vmem:[%s4 + $0x18] sm:$0x3]
      %v1476 = vld [vmem:[#allocation2] sm:$0xff]
      %v1477 = vld [vmem:[#allocation2 + $0x8] sm:$0xff]
      %v1478 = vld [vmem:[#allocation2 + $0x10] sm:$0xff]
      %v1479 = vld [vmem:[#allocation2 + $0x18] sm:$0xff]
      %v1480 = vld [vmem:[#allocation2 + $0x20] sm:$0xff]
      %v1481 = vld [vmem:[#allocation2 + $0x28] sm:$0xff]
      %v1482 = vld [vmem:[#allocation2 + $0x30] sm:$0xff]
      %v1483 = vld [vmem:[#allocation2 + $0x38] sm:$0xff]
      %v1484 = vld [vmem:[#allocation2 + $0x40] sm:$0xff]
      %v1485 = vld [vmem:[#allocation2 + $0x48] sm:$0xff]
      %v1486 = vld [vmem:[#allocation2 + $0x50] sm:$0xff]
      %v1487 = vld [vmem:[#allocation2 + $0x58] sm:$0xff]
      %v1488 = vld [vmem:[#allocation2 + $0x60] sm:$0xff]
      %v1489 = vld [vmem:[#allocation2 + $0x68] sm:$0xff]
      %v1490 = vld [vmem:[#allocation2 + $0x70] sm:$0xff]
      %v1491 = vld [vmem:[#allocation2 + $0x78] sm:$0xff]
      %v1492 = vld [vmem:[#allocation2 + $0x80] sm:$0xff]
      %v1493 = vld [vmem:[#allocation2 + $0x88] sm:$0xff]
      %v1494 = vld [vmem:[#allocation2 + $0x90] sm:$0xff]
      %v1495 = vld [vmem:[#allocation2 + $0x98] sm:$0xff]
      %v1496 = vld [vmem:[#allocation2 + $0xa0] sm:$0xff]
      %v1497 = vld [vmem:[#allocation2 + $0xa8] sm:$0xff]
      %v1498 = vld [vmem:[#allocation2 + $0xb0] sm:$0xff]
      %v1499 = vld [vmem:[#allocation2 + $0xb8] sm:$0xff]
      %v1500 = vld [vmem:[#allocation2 + $0xc0] sm:$0xff]
      %v1501 = vld [vmem:[%s5] sm:$0xff]
      %v1502 = vld [vmem:[%s5 + $0x8] sm:$0x3]
      %1504 = vset.pattern.permute.xlu0 0
      %1505 = vperm.xlu0 %1504, %v1501
      %v1506 = vpop.permute.xlu0 %1505
      %1509 = vset.pattern.permute.xlu0 0
      %1510 = vperm.xlu0 %1509, %v1502
      %v1511 = vpop.permute.xlu0 %1510
      %v1514 = vsel %vm1468, %v1473, 0
      %v1517 = vsel %vm1468, %v1475, 0
      %1519 = vmatprep.subr.mxu0 0.0
      %1520 = vmatpush1.msra.mxu0 %v1476
      %1521 = vmatprep.subr.mxu0 0.0
      %1522 = vmatpush1.msra.mxu0 %v1477
      %1523 = vmatprep.subr.mxu0 0.0
      %1524 = vmatpush1.msra.mxu0 %v1478
      %1525 = vmatprep.subr.mxu0 0.0
      %1526 = vmatpush1.msra.mxu0 %v1479
      %1527 = vmatprep.subr.mxu0 0.0
      %1528 = vmatpush1.msra.mxu0 %v1480
      %1529 = vmatprep.subr.mxu0 0.0
      %1530 = vmatpush1.msra.mxu0 %v1481
      %1531 = vmatprep.subr.mxu0 0.0
      %1532 = vmatpush1.msra.mxu0 %v1482
      %1533 = vmatprep.subr.mxu0 0.0
      %1534 = vmatpush1.msra.mxu0 %v1483
      %1535 = vmatprep.subr.mxu0 0.0
      %1536 = vmatpush1.msra.mxu0 %v1484
      %1537 = vmatprep.subr.mxu0 0.0
      %1538 = vmatpush1.msra.mxu0 %v1485
      %1539 = vmatprep.subr.mxu0 0.0
      %1540 = vmatpush1.msra.mxu0 %v1486
      %1541 = vmatprep.subr.mxu0 0.0
      %1542 = vmatpush1.msra.mxu0 %v1487
      %1543 = vmatprep.subr.mxu0 0.0
      %1544 = vmatpush1.msra.mxu0 %v1488
      %1545 = vmatprep.subr.mxu0 0.0
      %1546 = vmatpush1.msra.mxu0 %v1489
      %1547 = vmatprep.subr.mxu0 0.0
      %1548 = vmatpush1.msra.mxu0 %v1490
      %1549 = vmatprep.subr.mxu0 0.0
      %1550 = vmatpush1.msra.mxu0 %v1491
      %1551 = vmatprep.subr.mxu0 0.0
      %1552 = vmatpush1.msra.mxu0 %v1492
      %1553 = vmatprep.subr.mxu0 0.0
      %1554 = vmatpush1.msra.mxu0 %v1493
      %1555 = vmatprep.subr.mxu0 0.0
      %1556 = vmatpush1.msra.mxu0 %v1494
      %1557 = vmatprep.subr.mxu0 0.0
      %1558 = vmatpush1.msra.mxu0 %v1495
      %1559 = vmatprep.subr.mxu0 0.0
      %1560 = vmatpush1.msra.mxu0 %v1496
      %1561 = vmatprep.subr.mxu0 0.0
      %1562 = vmatpush1.msra.mxu0 %v1497
      %1563 = vmatprep.subr.mxu0 0.0
      %1564 = vmatpush1.msra.mxu0 %v1498
      %1565 = vmatprep.subr.mxu0 0.0
      %1566 = vmatpush1.msra.mxu0 %v1499
      %1567 = vmatprep.subr.mxu0 0.0
      %1568 = vmatpush1.msra.mxu0 %v1500
      %1569 = vmatprep.subr.mxu0 0.0
      %1570 = vmatpush1.msra.mxu0 0.0
      %1571 = vmatprep.subr.mxu0 0.0
      %1572 = vmatpush1.msra.mxu0 0.0
      %1573 = vmatprep.subr.mxu0 0.0
      %1574 = vmatpush1.msra.mxu0 0.0
      %1575 = vmatprep.subr.mxu0 0.0
      %1576 = vmatpush1.msra.mxu0 0.0
      %1577 = vmatprep.subr.mxu0 0.0
      %1578 = vmatpush1.msra.mxu0 0.0
      %1579 = vmatprep.subr.mxu0 0.0
      %1580 = vmatpush1.msra.mxu0 0.0
      %1581 = vmatprep.subr.mxu0 0.0
      %1582 = vmatpush1.msra.mxu0 0.0
      %1583 = vmatprep.mubr.f32.mxu0 %v1514
      %1584 = vmatmul.mubr.f32.gmra.mrb[0].mxu0 %v1472
      %v1585 = vpop.f32.mrb[0].mxu0
      %v1586 = vadd.f32 %v1506, %v1585
      %v1587 = vpop.f32.mrb[0].mxu0
      %1588 = vmatprep.mubr.f32.mxu0 %v1517
      %1589 = vmatmul.mubr.f32.gmra.mrb[0].mxu0 %v1474
      %v1590 = vpop.f32.mrb[0].mxu0
      %v1591 = vadd.f32 %v1511, %v1590
      %v1592 = vpop.f32.mrb[0].mxu0
      %1593 = vdwg.mxu0
      %1596 = vrot.lane.b32.xlu0 %v1586, 127
      %v1597 = vpop.permute.xlu0 %1596
      %1598 = vrot.lane.b32.xlu0 %v1591, 127
      %v1599 = vpop.permute.xlu0 %1598
      %v1602 = vmax.f32 %v1586, %v1597
      %v1603 = vmax.f32 %v1591, %v1599
      %1606 = vrot.lane.b32.xlu0 %v1602, 115
      %v1607 = vpop.permute.xlu0 %1606
      %1608 = vrot.lane.b32.xlu0 %v1603, 115
      %v1609 = vpop.permute.xlu0 %1608
      %v1612 = vmax.f32 %v1602, %v1607
      %v1613 = vmax.f32 %v1603, %v1609
      %v1614 = vld [vmem:[%s6] sm:$0xff]
      %v1615 = vld [vmem:[%s6 + $0x8] sm:$0xff]
      %v1616 = vld [vmem:[%s6 + $0x10] sm:$0xff]
      %v1617 = vld [vmem:[%s6 + $0x18] sm:$0xff]
      %v1618 = vld [vmem:[%s6 + $0x20] sm:$0xff]
      %v1619 = vld [vmem:[%s6 + $0x28] sm:$0xff]
      %v1620 = vld [vmem:[%s6 + $0x30] sm:$0xff]
      %v1621 = vld [vmem:[%s6 + $0x38] sm:$0xff]
      %v1622 = vld [vmem:[%s6 + $0x40] sm:$0xff]
      %v1623 = vld [vmem:[%s6 + $0x48] sm:$0xff]
      %v1624 = vld [vmem:[%s6 + $0x50] sm:$0xff]
      %v1625 = vld [vmem:[%s6 + $0x58] sm:$0xff]
      %v1626 = vld [vmem:[%s6 + $0x60] sm:$0x7f]
      %vm1627 = vcmask 842752
      %v1629 = vsel %vm1627, %v1612, 0
      %v1632 = vsel %vm1627, %v1613, 0
      %vm1634 = vcmask 1046528
      %v1636 = vsel %vm1634, %v1626, 0
      %1638 = vmatprep.subr.mxu0 0.0
      %1639 = vmatpush1.msra.mxu0 %v1614
      %1640 = vmatprep.subr.mxu0 0.0
      %1641 = vmatpush1.msra.mxu0 %v1615
      %1642 = vmatprep.subr.mxu0 0.0
      %1643 = vmatpush1.msra.mxu0 %v1616
      %1644 = vmatprep.subr.mxu0 0.0
      %1645 = vmatpush1.msra.mxu0 %v1617
      %1646 = vmatprep.subr.mxu0 0.0
      %1647 = vmatpush1.msra.mxu0 %v1618
      %1648 = vmatprep.subr.mxu0 0.0
      %1649 = vmatpush1.msra.mxu0 %v1619
      %1650 = vmatprep.subr.mxu0 0.0
      %1651 = vmatpush1.msra.mxu0 %v1620
      %1652 = vmatprep.subr.mxu0 0.0
      %1653 = vmatpush1.msra.mxu0 %v1621
      %1654 = vmatprep.subr.mxu0 0.0
      %1655 = vmatpush1.msra.mxu0 %v1622
      %1656 = vmatprep.subr.mxu0 0.0
      %1657 = vmatpush1.msra.mxu0 %v1623
      %1658 = vmatprep.subr.mxu0 0.0
      %1659 = vmatpush1.msra.mxu0 %v1624
      %1660 = vmatprep.subr.mxu0 0.0
      %1661 = vmatpush1.msra.mxu0 %v1625
      %1662 = vmatprep.subr.mxu0 0.0
      %1663 = vmatpush1.msra.mxu0 %v1636
      %1664 = vmatprep.subr.mxu0 0.0
      %1665 = vmatpush1.msra.mxu0 0.0
      %1666 = vmatprep.subr.mxu0 0.0
      %1667 = vmatpush1.msra.mxu0 0.0
      %1668 = vmatprep.subr.mxu0 0.0
      %1669 = vmatpush1.msra.mxu0 0.0
      %1670 = vmatprep.subr.mxu0 0.0
      %1671 = vmatpush1.msra.mxu0 0.0
      %1672 = vmatprep.subr.mxu0 0.0
      %1673 = vmatpush1.msra.mxu0 0.0
      %1674 = vmatprep.subr.mxu0 0.0
      %1675 = vmatpush1.msra.mxu0 0.0
      %1676 = vmatprep.subr.mxu0 0.0
      %1677 = vmatpush1.msra.mxu0 0.0
      %1678 = vmatprep.subr.mxu0 0.0
      %1679 = vmatpush1.msra.mxu0 0.0
      %1680 = vmatprep.subr.mxu0 0.0
      %1681 = vmatpush1.msra.mxu0 0.0
      %1682 = vmatprep.subr.mxu0 0.0
      %1683 = vmatpush1.msra.mxu0 0.0
      %1684 = vmatprep.subr.mxu0 0.0
      %1685 = vmatpush1.msra.mxu0 0.0
      %1686 = vmatprep.subr.mxu0 0.0
      %1687 = vmatpush1.msra.mxu0 0.0
      %1688 = vmatprep.subr.mxu0 0.0
      %1689 = vmatpush1.msra.mxu0 0.0
      %1690 = vmatprep.subr.mxu0 0.0
      %1691 = vmatpush1.msra.mxu0 0.0
      %1692 = vmatprep.subr.mxu0 0.0
      %1693 = vmatpush1.msra.mxu0 0.0
      %1694 = vmatprep.subr.mxu0 0.0
      %1695 = vmatpush1.msra.mxu0 0.0
      %1696 = vmatprep.subr.mxu0 0.0
      %1697 = vmatpush1.msra.mxu0 0.0
      %1698 = vmatprep.subr.mxu0 0.0
      %1699 = vmatpush1.msra.mxu0 0.0
      %1700 = vmatprep.subr.mxu0 0.0
      %1701 = vmatpush1.msra.mxu0 0.0
      %1702 = vmatprep.mubr.f32.mxu0 0.0
      %1703 = vmatmul.mubr.f32.gmra.mrb[0].mxu0 %v1629
      %v1704 = vpop.f32.mrb[0].mxu0
      %v1705 = vadd.f32 0.0, %v1704
      %v1706 = vpop.f32.mrb[0].mxu0
      %1707 = vmatprep.mubr.f32.mxu0 0.0
      %1708 = vmatmul.mubr.f32.gmra.mrb[0].mxu0 %v1632
      %v1709 = vpop.f32.mrb[0].mxu0
      %v1710 = vadd.f32 0.0, %v1709
      %v1711 = vpop.f32.mrb[0].mxu0
      %1712 = vdwg.mxu0
      %v1713 = vmax.f32 %v1705, 0.0
      %v1714 = vmax.f32 %v1710, 0.0
      %v1715 = vld [vmem:[%s7] sm:$0xff]
      %v1716 = vld [vmem:[%s7 + $0x8] sm:$0xff]
      %v1717 = vld [vmem:[%s7 + $0x10] sm:$0xff]
      %v1718 = vld [vmem:[%s7 + $0x18] sm:$0xff]
      %v1719 = vld [vmem:[%s7 + $0x20] sm:$0xff]
      %v1720 = vld [vmem:[%s7 + $0x28] sm:$0xff]
      %vm1721 = vcmask 130048
      %v1723 = vsel %vm1721, %v1713, 0
      %v1726 = vsel %vm1721, %v1714, 0
      %1728 = vmatprep.subr.mxu0 %v1716
      %1729 = vmatpush1.msra.mxu0 %v1715
      %1730 = vmatprep.subr.mxu0 %v1719
      %1731 = vmatpush1.msra.mxu0 %v1718
      %1732 = vmatprep.subr.mxu0 0.0
      %1733 = vmatpush1.msra.mxu0 0.0
      %1734 = vmatprep.subr.mxu0 0.0
      %1735 = vmatpush1.msra.mxu0 0.0
      %1736 = vmatprep.subr.mxu0 0.0
      %1737 = vmatpush1.msra.mxu0 0.0
      %1738 = vmatprep.subr.mxu0 0.0
      %1739 = vmatpush1.msra.mxu0 0.0
      %1740 = vmatprep.subr.mxu0 0.0
      %1741 = vmatpush1.msra.mxu0 0.0
      %1742 = vmatprep.subr.mxu0 0.0
      %1743 = vmatpush1.msra.mxu0 0.0
      %1744 = vmatprep.subr.mxu0 0.0
      %1745 = vmatpush1.msra.mxu0 0.0
      %1746 = vmatprep.subr.mxu0 0.0
      %1747 = vmatpush1.msra.mxu0 0.0
      %1748 = vmatprep.subr.mxu0 0.0
      %1749 = vmatpush1.msra.mxu0 0.0
      %1750 = vmatprep.subr.mxu0 0.0
      %1751 = vmatpush1.msra.mxu0 0.0
      %1752 = vmatprep.subr.mxu0 0.0
      %1753 = vmatpush1.msra.mxu0 0.0
      %1754 = vmatprep.subr.mxu0 0.0
      %1755 = vmatpush1.msra.mxu0 0.0
      %1756 = vmatprep.subr.mxu0 0.0
      %1757 = vmatpush1.msra.mxu0 0.0
      %1758 = vmatprep.subr.mxu0 0.0
      %1759 = vmatpush1.msra.mxu0 0.0
      %1760 = vmatprep.subr.mxu0 0.0
      %1761 = vmatpush1.msra.mxu0 0.0
      %1762 = vmatprep.subr.mxu0 0.0
      %1763 = vmatpush1.msra.mxu0 0.0
      %1764 = vmatprep.subr.mxu0 0.0
      %1765 = vmatpush1.msra.mxu0 0.0
      %1766 = vmatprep.subr.mxu0 0.0
      %1767 = vmatpush1.msra.mxu0 0.0
      %1768 = vmatprep.subr.mxu0 0.0
      %1769 = vmatpush1.msra.mxu0 0.0
      %1770 = vmatprep.subr.mxu0 0.0
      %1771 = vmatpush1.msra.mxu0 0.0
      %1772 = vmatprep.subr.mxu0 0.0
      %1773 = vmatpush1.msra.mxu0 0.0
      %1774 = vmatprep.subr.mxu0 0.0
      %1775 = vmatpush1.msra.mxu0 0.0
      %1776 = vmatprep.subr.mxu0 0.0
      %1777 = vmatpush1.msra.mxu0 0.0
      %1778 = vmatprep.subr.mxu0 0.0
      %1779 = vmatpush1.msra.mxu0 0.0
      %1780 = vmatprep.subr.mxu0 0.0
      %1781 = vmatpush1.msra.mxu0 0.0
      %1782 = vmatprep.subr.mxu0 0.0
      %1783 = vmatpush1.msra.mxu0 0.0
      %1784 = vmatprep.subr.mxu0 0.0
      %1785 = vmatpush1.msra.mxu0 0.0
      %1786 = vmatprep.subr.mxu0 0.0
      %1787 = vmatpush1.msra.mxu0 0.0
      %1788 = vmatprep.subr.mxu0 0.0
      %1789 = vmatpush1.msra.mxu0 0.0
      %1790 = vmatprep.subr.mxu0 0.0
      %1791 = vmatpush1.msra.mxu0 0.0
      %1792 = vmatprep.mubr.f32.mxu0 0.0
      %1793 = vmatmul.mubr.f32.gmra.mrb[0].mxu0 %v1723
      %v1794 = vpop.f32.mrb[0].mxu0
      %v1795 = vadd.f32 0.0, %v1794
      %v1796 = vpop.f32.mrb[0].mxu0
      %v1797 = vadd.f32 0.0, %v1796
      %1798 = vmatprep.mubr.f32.mxu0 0.0
      %1799 = vmatmul.mubr.f32.gmra.mrb[0].mxu0 %v1726
      %v1800 = vpop.f32.mrb[0].mxu0
      %v1801 = vadd.f32 0.0, %v1800
      %v1802 = vpop.f32.mrb[0].mxu0
      %v1803 = vadd.f32 0.0, %v1802
      %1804 = vdwg.mxu0
      %1805 = vmatprep.subr.mxu0 0.0
      %1806 = vmatpush1.msra.mxu0 %v1717
      %1807 = vmatprep.subr.mxu0 0.0
      %1808 = vmatpush1.msra.mxu0 %v1720
      %1809 = vmatprep.subr.mxu0 0.0
      %1810 = vmatpush1.msra.mxu0 0.0
      %1811 = vmatprep.subr.mxu0 0.0
      %1812 = vmatpush1.msra.mxu0 0.0
      %1813 = vmatprep.subr.mxu0 0.0
      %1814 = vmatpush1.msra.mxu0 0.0
      %1815 = vmatprep.subr.mxu0 0.0
      %1816 = vmatpush1.msra.mxu0 0.0
      %1817 = vmatprep.subr.mxu0 0.0
      %1818 = vmatpush1.msra.mxu0 0.0
      %1819 = vmatprep.subr.mxu0 0.0
      %1820 = vmatpush1.msra.mxu0 0.0
      %1821 = vmatprep.subr.mxu0 0.0
      %1822 = vmatpush1.msra.mxu0 0.0
      %1823 = vmatprep.subr.mxu0 0.0
      %1824 = vmatpush1.msra.mxu0 0.0
      %1825 = vmatprep.subr.mxu0 0.0
      %1826 = vmatpush1.msra.mxu0 0.0
      %1827 = vmatprep.subr.mxu0 0.0
      %1828 = vmatpush1.msra.mxu0 0.0
      %1829 = vmatprep.subr.mxu0 0.0
      %1830 = vmatpush1.msra.mxu0 0.0
      %1831 = vmatprep.subr.mxu0 0.0
      %1832 = vmatpush1.msra.mxu0 0.0
      %1833 = vmatprep.subr.mxu0 0.0
      %1834 = vmatpush1.msra.mxu0 0.0
      %1835 = vmatprep.subr.mxu0 0.0
      %1836 = vmatpush1.msra.mxu0 0.0
      %1837 = vmatprep.subr.mxu0 0.0
      %1838 = vmatpush1.msra.mxu0 0.0
      %1839 = vmatprep.subr.mxu0 0.0
      %1840 = vmatpush1.msra.mxu0 0.0
      %1841 = vmatprep.subr.mxu0 0.0
      %1842 = vmatpush1.msra.mxu0 0.0
      %1843 = vmatprep.subr.mxu0 0.0
      %1844 = vmatpush1.msra.mxu0 0.0
      %1845 = vmatprep.subr.mxu0 0.0
      %1846 = vmatpush1.msra.mxu0 0.0
      %1847 = vmatprep.subr.mxu0 0.0
      %1848 = vmatpush1.msra.mxu0 0.0
      %1849 = vmatprep.subr.mxu0 0.0
      %1850 = vmatpush1.msra.mxu0 0.0
      %1851 = vmatprep.subr.mxu0 0.0
      %1852 = vmatpush1.msra.mxu0 0.0
      %1853 = vmatprep.subr.mxu0 0.0
      %1854 = vmatpush1.msra.mxu0 0.0
      %1855 = vmatprep.subr.mxu0 0.0
      %1856 = vmatpush1.msra.mxu0 0.0
      %1857 = vmatprep.subr.mxu0 0.0
      %1858 = vmatpush1.msra.mxu0 0.0
      %1859 = vmatprep.subr.mxu0 0.0
      %1860 = vmatpush1.msra.mxu0 0.0
      %1861 = vmatprep.subr.mxu0 0.0
      %1862 = vmatpush1.msra.mxu0 0.0
      %1863 = vmatprep.subr.mxu0 0.0
      %1864 = vmatpush1.msra.mxu0 0.0
      %1865 = vmatprep.subr.mxu0 0.0
      %1866 = vmatpush1.msra.mxu0 0.0
      %1867 = vmatprep.subr.mxu0 0.0
      %1868 = vmatpush1.msra.mxu0 0.0
      %1869 = vmatprep.mubr.f32.mxu0 0.0
      %1870 = vmatmul.mubr.f32.gmra.mrb[0].mxu0 %v1723
      %v1871 = vpop.f32.mrb[0].mxu0
      %v1872 = vadd.f32 0.0, %v1871
      %v1873 = vpop.f32.mrb[0].mxu0
      %1874 = vmatprep.mubr.f32.mxu0 0.0
      %1875 = vmatmul.mubr.f32.gmra.mrb[0].mxu0 %v1726
      %v1876 = vpop.f32.mrb[0].mxu0
      %v1877 = vadd.f32 0.0, %v1876
      %v1878 = vpop.f32.mrb[0].mxu0
      %1879 = vdwg.mxu0
      %v1880 = vld [vmem:[%s8] sm:$0xff]
      %v1881 = vld [vmem:[%s8 + $0x8] sm:$0xff]
      %v1882 = vld [vmem:[%s8 + $0x10] sm:$0xff]
      %v1883 = vld [vmem:[%s8 + $0x18] sm:$0x3]
      %v1884 = vld [vmem:[%s8 + $0x20] sm:$0x3]
      %v1885 = vld [vmem:[%s8 + $0x28] sm:$0x3]
      %v1886 = vmul.f32 %v1795, %v1880
      %v1887 = vmul.f32 %v1797, %v1881
      %v1888 = vmul.f32 %v1872, %v1882
      %v1889 = vmul.f32 %v1801, %v1883
      %v1890 = vmul.f32 %v1803, %v1884
      %v1891 = vmul.f32 %v1877, %v1885
      %vm1892 = vcmask 1041408
      %v1893 = vsel %vm1892, %v1889, 0.0
      %v1894 = vadd.f32 %v1886, %v1893
      %v1895 = vrot.slane %v1894, 4
      %v1896 = vadd.f32 %v1894, %v1895
      %v1897 = vrot.slane %v1896, 2
      %v1898 = vadd.f32 %v1896, %v1897
      %v1899 = vrot.slane %v1898, 1
      %v1900 = vadd.f32 %v1898, %v1899
      %v1901 = vsel %vm1892, %v1890, 0.0
      %v1902 = vadd.f32 %v1887, %v1901
      %v1903 = vrot.slane %v1902, 4
      %v1904 = vadd.f32 %v1902, %v1903
      %v1905 = vrot.slane %v1904, 2
      %v1906 = vadd.f32 %v1904, %v1905
      %v1907 = vrot.slane %v1906, 1
      %v1908 = vadd.f32 %v1906, %v1907
      %vm1909 = vcmask 523264
      %v1910 = vsel %vm1909, %v1888, 0.0
      %vm1911 = vcmask 517120
      %v1912 = vsel %vm1911, %v1891, 0.0
      %v1913 = vadd.f32 %v1910, %v1912
      %v1914 = vrot.slane %v1913, 4
      %v1915 = vadd.f32 %v1913, %v1914
      %v1916 = vrot.slane %v1915, 2
      %v1917 = vadd.f32 %v1915, %v1916
      %v1918 = vrot.slane %v1917, 1
      %v1919 = vadd.f32 %v1917, %v1918
      %v1920 = vld [vmem:[%s9] sm:$0xff]
      %v1921 = vld [vmem:[%s9 + $0x8] sm:$0xff]
      %v1922 = vld [vmem:[%s9 + $0x10] sm:$0xff]
      %v1923 = vld [vmem:[%s9 + $0x18] sm:$0xff]
      %v1924 = vld [vmem:[%s9 + $0x20] sm:$0xff]
      %v1925 = vld [vmem:[%s9 + $0x28] sm:$0xff]
      %v1926 = vld [vmem:[%s9 + $0x30] sm:$0xff]
      %v1927 = vld [vmem:[%s9 + $0x38] sm:$0xff]
      %v1928 = vld [vmem:[%s9 + $0x40] sm:$0xff]
      %v1929 = vld [vmem:[%s9 + $0x48] sm:$0xff]
      %v1930 = vld [vmem:[%s9 + $0x50] sm:$0xff]
      %v1931 = vld [vmem:[%s9 + $0x58] sm:$0xff]
      %v1932 = vld [vmem:[%s9 + $0x60] sm:$0xff]
      %v1933 = vld [vmem:[%s9 + $0x68] sm:$0xff]
      %v1934 = vld [vmem:[%s9 + $0x70] sm:$0xff]
      %v1935 = vld [vmem:[%s9 + $0x78] sm:$0xff]
      %v1936 = vld [vmem:[%s9 + $0x80] sm:$0xff]
      %v1937 = vld [vmem:[%s9 + $0x88] sm:$0xff]
      %v1938 = vld [vmem:[%s9 + $0x90] sm:$0xff]
      %v1939 = vld [vmem:[%s9 + $0x98] sm:$0xff]
      %v1940 = vld [vmem:[%s9 + $0xa0] sm:$0xff]
      %v1941 = vld [vmem:[%s9 + $0xa8] sm:$0xff]
      %v1942 = vld [vmem:[%s9 + $0xb0] sm:$0xff]
      %v1943 = vld [vmem:[%s9 + $0xb8] sm:$0xff]
      %v1944 = vld [vmem:[%s9 + $0xc0] sm:$0xff]
      %v1945 = vld [vmem:[%s9 + $0xc8] sm:$0xff]
      %v1946 = vld [vmem:[%s9 + $0xd0] sm:$0xff]
      %v1947 = vld [vmem:[%s9 + $0xd8] sm:$0xff]
      %v1948 = vld [vmem:[%s9 + $0xe0] sm:$0xff]
      %v1949 = vld [vmem:[%s9 + $0xe8] sm:$0xff]
      %v1950 = vld [vmem:[%s9 + $0xf0] sm:$0xff]
      %v1951 = vld [vmem:[%s9 + $0xf8] sm:$0xff]
      %v1952 = vld [vmem:[%s9 + $0x100] sm:$0xff]
      %v1953 = vld [vmem:[%s9 + $0x108] sm:$0xff]
      %v1954 = vld [vmem:[%s9 + $0x110] sm:$0xff]
      %v1955 = vld [vmem:[%s9 + $0x118] sm:$0xff]
      %v1956 = vld [vmem:[%s9 + $0x120] sm:$0xff]
      %v1957 = vld [vmem:[%s9 + $0x128] sm:$0xff]
      %v1958 = vld [vmem:[%s9 + $0x130] sm:$0xff]
      %v1959 = vld [vmem:[%s9 + $0x138] sm:$0xff]
      %v1960 = vld [vmem:[%s10] sm:$0x1]
      %v1962 = vsel %vm1909, %v1919, 0
      %1964 = vmatprep.subr.mxu0 0.0
      %1965 = vmatpush1.msra.mxu0 %v1920
      %1966 = vmatprep.subr.mxu0 0.0
      %1967 = vmatpush1.msra.mxu0 %v1921
      %1968 = vmatprep.subr.mxu0 0.0
      %1969 = vmatpush1.msra.mxu0 %v1922
      %1970 = vmatprep.subr.mxu0 0.0
      %1971 = vmatpush1.msra.mxu0 %v1923
      %1972 = vmatprep.subr.mxu0 0.0
      %1973 = vmatpush1.msra.mxu0 %v1924
      %1974 = vmatprep.subr.mxu0 0.0
      %1975 = vmatpush1.msra.mxu0 %v1925
      %1976 = vmatprep.subr.mxu0 0.0
      %1977 = vmatpush1.msra.mxu0 %v1926
      %1978 = vmatprep.subr.mxu0 0.0
      %1979 = vmatpush1.msra.mxu0 %v1927
      %1980 = vmatprep.subr.mxu0 0.0
      %1981 = vmatpush1.msra.mxu0 %v1928
      %1982 = vmatprep.subr.mxu0 0.0
      %1983 = vmatpush1.msra.mxu0 %v1929
      %1984 = vmatprep.subr.mxu0 0.0
      %1985 = vmatpush1.msra.mxu0 %v1930
      %1986 = vmatprep.subr.mxu0 0.0
      %1987 = vmatpush1.msra.mxu0 %v1931
      %1988 = vmatprep.subr.mxu0 0.0
      %1989 = vmatpush1.msra.mxu0 %v1932
      %1990 = vmatprep.subr.mxu0 0.0
      %1991 = vmatpush1.msra.mxu0 %v1933
      %1992 = vmatprep.subr.mxu0 0.0
      %1993 = vmatpush1.msra.mxu0 %v1934
      %1994 = vmatprep.subr.mxu0 0.0
      %1995 = vmatpush1.msra.mxu0 %v1935
      %1996 = vmatprep.subr.mxu0 0.0
      %1997 = vmatpush1.msra.mxu0 %v1936
      %1998 = vmatprep.subr.mxu0 0.0
      %1999 = vmatpush1.msra.mxu0 %v1937
      %2000 = vmatprep.subr.mxu0 0.0
      %2001 = vmatpush1.msra.mxu0 %v1938
      %2002 = vmatprep.subr.mxu0 0.0
      %2003 = vmatpush1.msra.mxu0 %v1939
      %2004 = vmatprep.subr.mxu0 0.0
      %2005 = vmatpush1.msra.mxu0 %v1940
      %2006 = vmatprep.subr.mxu0 0.0
      %2007 = vmatpush1.msra.mxu0 %v1941
      %2008 = vmatprep.subr.mxu0 0.0
      %2009 = vmatpush1.msra.mxu0 %v1942
      %2010 = vmatprep.subr.mxu0 0.0
      %2011 = vmatpush1.msra.mxu0 %v1943
      %2012 = vmatprep.subr.mxu0 0.0
      %2013 = vmatpush1.msra.mxu0 %v1944
      %2014 = vmatprep.subr.mxu0 0.0
      %2015 = vmatpush1.msra.mxu0 %v1945
      %2016 = vmatprep.subr.mxu0 0.0
      %2017 = vmatpush1.msra.mxu0 %v1946
      %2018 = vmatprep.subr.mxu0 0.0
      %2019 = vmatpush1.msra.mxu0 %v1947
      %2020 = vmatprep.subr.mxu0 0.0
      %2021 = vmatpush1.msra.mxu0 %v1948
      %2022 = vmatprep.subr.mxu0 0.0
      %2023 = vmatpush1.msra.mxu0 %v1949
      %2024 = vmatprep.subr.mxu0 0.0
      %2025 = vmatpush1.msra.mxu0 %v1950
      %2026 = vmatprep.subr.mxu0 0.0
      %2027 = vmatpush1.msra.mxu0 %v1951
      %2028 = vmatprep.mubr.f32.mxu0 %v1908
      %2029 = vmatmul.mubr.f32.gmra.mrb[0].mxu0 %v1900
      %v2030 = vpop.f32.mrb[0].mxu0
      %v2031 = vadd.f32 %v1960, %v2030
      %v2032 = vpop.f32.mrb[0].mxu0
      %2033 = vdwg.mxu0
      %2034 = vmatprep.subr.mxu0 0.0
      %2035 = vmatpush1.msra.mxu0 %v1952
      %2036 = vmatprep.subr.mxu0 0.0
      %2037 = vmatpush1.msra.mxu0 %v1953
      %2038 = vmatprep.subr.mxu0 0.0
      %2039 = vmatpush1.msra.mxu0 %v1954
      %2040 = vmatprep.subr.mxu0 0.0
      %2041 = vmatpush1.msra.mxu0 %v1955
      %2042 = vmatprep.subr.mxu0 0.0
      %2043 = vmatpush1.msra.mxu0 %v1956
      %2044 = vmatprep.subr.mxu0 0.0
      %2045 = vmatpush1.msra.mxu0 %v1957
      %2046 = vmatprep.subr.mxu0 0.0
      %2047 = vmatpush1.msra.mxu0 %v1958
      %2048 = vmatprep.subr.mxu0 0.0
      %2049 = vmatpush1.msra.mxu0 %v1959
      %2050 = vmatprep.subr.mxu0 0.0
      %2051 = vmatpush1.msra.mxu0 0.0
      %2052 = vmatprep.subr.mxu0 0.0
      %2053 = vmatpush1.msra.mxu0 0.0
      %2054 = vmatprep.subr.mxu0 0.0
      %2055 = vmatpush1.msra.mxu0 0.0
      %2056 = vmatprep.subr.mxu0 0.0
      %2057 = vmatpush1.msra.mxu0 0.0
      %2058 = vmatprep.subr.mxu0 0.0
      %2059 = vmatpush1.msra.mxu0 0.0
      %2060 = vmatprep.subr.mxu0 0.0
      %2061 = vmatpush1.msra.mxu0 0.0
      %2062 = vmatprep.subr.mxu0 0.0
      %2063 = vmatpush1.msra.mxu0 0.0
      %2064 = vmatprep.subr.mxu0 0.0
      %2065 = vmatpush1.msra.mxu0 0.0
      %2066 = vmatprep.subr.mxu0 0.0
      %2067 = vmatpush1.msra.mxu0 0.0
      %2068 = vmatprep.subr.mxu0 0.0
      %2069 = vmatpush1.msra.mxu0 0.0
      %2070 = vmatprep.subr.mxu0 0.0
      %2071 = vmatpush1.msra.mxu0 0.0
      %2072 = vmatprep.subr.mxu0 0.0
      %2073 = vmatpush1.msra.mxu0 0.0
      %2074 = vmatprep.subr.mxu0 0.0
      %2075 = vmatpush1.msra.mxu0 0.0
      %2076 = vmatprep.subr.mxu0 0.0
      %2077 = vmatpush1.msra.mxu0 0.0
      %2078 = vmatprep.subr.mxu0 0.0
      %2079 = vmatpush1.msra.mxu0 0.0
      %2080 = vmatprep.subr.mxu0 0.0
      %2081 = vmatpush1.msra.mxu0 0.0
      %2082 = vmatprep.subr.mxu0 0.0
      %2083 = vmatpush1.msra.mxu0 0.0
      %2084 = vmatprep.subr.mxu0 0.0
      %2085 = vmatpush1.msra.mxu0 0.0
      %2086 = vmatprep.subr.mxu0 0.0
      %2087 = vmatpush1.msra.mxu0 0.0
      %2088 = vmatprep.subr.mxu0 0.0
      %2089 = vmatpush1.msra.mxu0 0.0
      %2090 = vmatprep.subr.mxu0 0.0
      %2091 = vmatpush1.msra.mxu0 0.0
      %2092 = vmatprep.subr.mxu0 0.0
      %2093 = vmatpush1.msra.mxu0 0.0
      %2094 = vmatprep.subr.mxu0 0.0
      %2095 = vmatpush1.msra.mxu0 0.0
      %2096 = vmatprep.subr.mxu0 0.0
      %2097 = vmatpush1.msra.mxu0 0.0
      %2098 = vmatprep.mubr.f32.mxu0 0.0
      %2099 = vmatmul.mubr.f32.gmra.mrb[0].mxu0 %v1962
      %v2100 = vpop.f32.mrb[0].mxu0
      %v2101 = vadd.f32 %v2031, %v2100
      %v2102 = vpop.f32.mrb[0].mxu0
      %2103 = vdwg.mxu0
      %v2104 = vmax.f32 %v2101, 0.0
      %v2105 = vld [vmem:[%s11] sm:$0xff]
      %v2106 = vld [vmem:[%s11 + $0x8] sm:$0xff]
      %v2107 = vld [vmem:[%s11 + $0x10] sm:$0xff]
      %v2108 = vld [vmem:[%s11 + $0x18] sm:$0xff]
      %v2109 = vld [vmem:[%s12] sm:$0x1]
      %vm2110 = vcmask 261120
      %v2112 = vsel %vm2110, %v2104, 0
      %2114 = vmatprep.subr.mxu0 0.0
      %2115 = vmatpush1.msra.mxu0 %v2105
      %2116 = vmatprep.subr.mxu0 0.0
      %2117 = vmatpush1.msra.mxu0 %v2106
      %2118 = vmatprep.subr.mxu0 0.0
      %2119 = vmatpush1.msra.mxu0 %v2107
      %2120 = vmatprep.subr.mxu0 0.0
      %2121 = vmatpush1.msra.mxu0 %v2108
      %2122 = vmatprep.subr.mxu0 0.0
      %2123 = vmatpush1.msra.mxu0 0.0
      %2124 = vmatprep.subr.mxu0 0.0
      %2125 = vmatpush1.msra.mxu0 0.0
      %2126 = vmatprep.subr.mxu0 0.0
      %2127 = vmatpush1.msra.mxu0 0.0
      %2128 = vmatprep.subr.mxu0 0.0
      %2129 = vmatpush1.msra.mxu0 0.0
      %2130 = vmatprep.subr.mxu0 0.0
      %2131 = vmatpush1.msra.mxu0 0.0
      %2132 = vmatprep.subr.mxu0 0.0
      %2133 = vmatpush1.msra.mxu0 0.0
      %2134 = vmatprep.subr.mxu0 0.0
      %2135 = vmatpush1.msra.mxu0 0.0
      %2136 = vmatprep.subr.mxu0 0.0
      %2137 = vmatpush1.msra.mxu0 0.0
      %2138 = vmatprep.subr.mxu0 0.0
      %2139 = vmatpush1.msra.mxu0 0.0
      %2140 = vmatprep.subr.mxu0 0.0
      %2141 = vmatpush1.msra.mxu0 0.0
      %2142 = vmatprep.subr.mxu0 0.0
      %2143 = vmatpush1.msra.mxu0 0.0
      %2144 = vmatprep.subr.mxu0 0.0
      %2145 = vmatpush1.msra.mxu0 0.0
      %2146 = vmatprep.subr.mxu0 0.0
      %2147 = vmatpush1.msra.mxu0 0.0
      %2148 = vmatprep.subr.mxu0 0.0
      %2149 = vmatpush1.msra.mxu0 0.0
      %2150 = vmatprep.subr.mxu0 0.0
      %2151 = vmatpush1.msra.mxu0 0.0
      %2152 = vmatprep.subr.mxu0 0.0
      %2153 = vmatpush1.msra.mxu0 0.0
      %2154 = vmatprep.subr.mxu0 0.0
      %2155 = vmatpush1.msra.mxu0 0.0
      %2156 = vmatprep.subr.mxu0 0.0
      %2157 = vmatpush1.msra.mxu0 0.0
      %2158 = vmatprep.subr.mxu0 0.0
      %2159 = vmatpush1.msra.mxu0 0.0
      %2160 = vmatprep.subr.mxu0 0.0
      %2161 = vmatpush1.msra.mxu0 0.0
      %2162 = vmatprep.subr.mxu0 0.0
      %2163 = vmatpush1.msra.mxu0 0.0
      %2164 = vmatprep.subr.mxu0 0.0
      %2165 = vmatpush1.msra.mxu0 0.0
      %2166 = vmatprep.subr.mxu0 0.0
      %2167 = vmatpush1.msra.mxu0 0.0
      %2168 = vmatprep.subr.mxu0 0.0
      %2169 = vmatpush1.msra.mxu0 0.0
      %2170 = vmatprep.subr.mxu0 0.0
      %2171 = vmatpush1.msra.mxu0 0.0
      %2172 = vmatprep.subr.mxu0 0.0
      %2173 = vmatpush1.msra.mxu0 0.0
      %2174 = vmatprep.subr.mxu0 0.0
      %2175 = vmatpush1.msra.mxu0 0.0
      %2176 = vmatprep.subr.mxu0 0.0
      %2177 = vmatpush1.msra.mxu0 0.0
      %2178 = vmatprep.mubr.f32.mxu0 0.0
      %2179 = vmatmul.mubr.f32.gmra.mrb[0].mxu0 %v2112
      %v2180 = vpop.f32.mrb[0].mxu0
      %v2181 = vadd.f32 %v2109, %v2180
      %v2182 = vpop.f32.mrb[0].mxu0
      %2183 = vdwg.mxu0
      %vm2184 = vcmask 40960
      %2185 = vst.msk [vmem:[%s436] sm:$0x1] %vm2184, %v2181
      %p2186 = scmp.lt.s32.totalorder %s24, 1
      %s2187 = scalar_select %p2186, %s24, 1
      %s2188 = scalar_lea.vmem %s13, %s2187
      // Predicated region
      $region73: #{stn_forward.2} parent=71 // pred_check
        %p2189 = pneg %p320
      $region74: #{stn_forward.2} parent=71 // pred_check_branch
        %2191 = sbr.rel (%p2189) target = $region76
      $region75: #{stn_forward.2} parent=71 // pred_region
        _
      $region76: #{stn_forward.2} parent=71 // pred_fallthru
        _
    $region72: #{stn_forward.2} parent=5 // pred_fallthru
      _
    %p2192 = scmp.le.s32.totalorder 2, %s19
    // Predicated region
    $region77: #{stn_forward.2} parent=5 // pred_check
      %p2193 = pneg %p2192
    $region78: #{stn_forward.2} parent=5 // pred_check_branch
      %2195 = sbr.rel (%p2193) target = $region80
    $region79: #{stn_forward.2} parent=5 // pred_region
      %s2196 = ssub.s32 %s19, 2
      // Predicated region
      $region81: #{stn_forward.2} parent=79 // pred_check
        %p2197 = pneg %p326
      $region82: #{stn_forward.2} parent=79 // pred_check_branch
        %2199 = sbr.rel (%p2197) target = $region84
      $region83: #{stn_forward.2} parent=79 // pred_region
        %p2200 = scmp.lt.s32.totalorder %s25, 1
        %s2201 = scalar_select %p2200, %s25, 1
        %s2202 = scalar_lea.vmem %s13, %s2201
      $region84: #{stn_forward.2} parent=79 // pred_fallthru
        _
    $region80: #{stn_forward.2} parent=5 // pred_fallthru
      _
  $region6: #{stn_forward.2} parent=0 // loop_footer
    %s23 = sadd.s32 1, %s19
  $region7: #{stn_forward.2} parent=0 // loop_footer_branch
    %18 = sbr.rel target = $region3
  $region8: #{stn_forward.2} parent=0 // loop_exit
    _

</llo_original>
